<compile_context>
chip_gen: v7x
topology: tpu7x:2x2x1
jax: 0.10.0
libtpu: 0.0.40
codegen_flags: <defaults>
</compile_context>

<pallas_src>
import functools

import numpy as np
import jax
import jax.numpy as jnp
from jax import lax
from jax.experimental import pallas as pl
from jax.experimental.pallas import tpu as pltpu

EPS = 1e-5  # BatchNorm1d default eps

_VMEM = functools.partial(pl.BlockSpec, memory_space=pltpu.MemorySpace.VMEM)


# ---------------------------------------------------------------------------
# in-kernel math helpers (match torch semantics, f32 element-wise)
# ---------------------------------------------------------------------------
def _softplus(x):
    # torch.nn.Softplus(beta=1, threshold=20)
    return jnp.where(x > 20.0, x, jnp.log1p(jnp.exp(jnp.minimum(x, 20.0))))


def _sigmoid(x):
    # 1/(1+exp(-x)); divide moved to the EUP via approx reciprocal.
    return pl.reciprocal(1.0 + jnp.exp(-x), approx=True)


# ---------------------------------------------------------------------------
# fused CGCNN forward kernel
# ---------------------------------------------------------------------------
def _cgcnn_kernel(atom0_ref,    # (N, orig)   bf16  input atom features
                  nbr_ref,      # (M*N, B)    bf16  bond features, m-major rows
                  idx_ref,      # (M*N, 1)    int32 neighbor indices, m-major
                  cid_ref,      # (1, N)      int32 per-atom crystal id
                  icnt_ref,     # (N0, 1)     f32   per-crystal 1/len
                  emb_w_ref, emb_b_ref,       # (orig, A) bf16 / (1, A) f32
                  wsn_ref,      # (L, A, 4A)  bf16  [self | gathered] blocks
                  wb_ref,       # (L, B, 2A)  bf16  bond block
                  b_ref,        # (L, 1, 2A)  f32   bias (bn1 folded)
                  bn2_s_ref, bn2_b_ref,       # (L, 1, A) f32 folded bn2
                  fc1_w_ref, fc1_b_ref,       # (A, H) bf16 / (1, H) f32
                  out_w_ref, out_b_ref,       # (H, 1) bf16 / (1, 1) f32
                  out_ref):                   # (N0, 1) f32
    f32, bf16 = jnp.float32, jnp.bfloat16
    N = atom0_ref.shape[0]
    A = emb_w_ref.shape[1]
    A2 = b_ref.shape[2]                     # 2A (128): lane-dense gate width
    MN = nbr_ref.shape[0]
    M = MN // N
    L = wsn_ref.shape[0]
    N0 = out_ref.shape[0]

    # --- embedding ----------------------------------------------------------
    atom = jnp.dot(atom0_ref[...], emb_w_ref[...],
                   preferred_element_type=f32) + emb_b_ref[...]          # (N, A) f32

    # --- stacked 0/1 gather matrix, built once and reused by every layer ----
    # TODO(synk): O(M*N^2) one-hot gather; swap for a DMA/scalar-prefetch row
    #             gather before scaling N (it is the top scalability lever).
    col = lax.broadcasted_iota(jnp.int32, (MN, N), 1)
    onehot = jnp.where(idx_ref[...] == col, 1.0, 0.0).astype(bf16)       # (M*N, N)

    nbr_bf = nbr_ref[...]                                                # (M*N, B) bf16

    # --- conv layers (static unroll: weights are tiny and stay in VMEM) -----
    for l in range(L):
        atom_bf = atom.astype(bf16)
        # one 256-wide projection: [self block | gathered block]
        psn = jnp.dot(atom_bf, wsn_ref[l], preferred_element_type=f32)   # (N, 4A)
        ps = psn[:, :A2] + b_ref[l]                                      # (N, 2A) self
        pn = psn[:, A2:]                                                 # (N, 2A) nbr
        # bond projection for all M slots at once (m-major rows)
        pb = jnp.dot(nbr_bf, wb_ref[l], preferred_element_type=f32)      # (M*N, 2A)
        # ONE stacked gather matmul for the whole layer
        g = jnp.dot(onehot, pn.astype(bf16), preferred_element_type=f32)  # (M*N, 2A)

        # gate on dense (M, N, 2A), reduce over m with one sum
        t = (g + pb).reshape(M, N, A2) + ps[None, :, :]                  # (M, N, 2A)
        gated = _sigmoid(t[..., :A]) * _softplus(t[..., A:])             # (M, N, A)
        nbr_sumed = jnp.sum(gated, axis=0)                               # (N, A)

        # bn2 (inference-mode, folded) + residual softplus
        atom = _softplus(atom + nbr_sumed * bn2_s_ref[l] + bn2_b_ref[l])  # (N, A) f32

    # --- pooling: per-crystal mean (f32 segment matmul with exact 0/1) ------
    rows = lax.broadcasted_iota(jnp.int32, (N0, N), 0)
    pool = jnp.where(rows == cid_ref[...], 1.0, 0.0)                     # (N0, N) f32
    crys = jnp.dot(pool, atom, preferred_element_type=f32) * icnt_ref[...]  # (N0, A)

    # --- head: softplus -> conv_to_fc -> softplus -> fc_out -----------------
    h = _softplus(crys)
    h = jnp.dot(h.astype(bf16), fc1_w_ref[...],
                preferred_element_type=f32) + fc1_b_ref[...]
    h = _softplus(h)
    out_ref[...] = jnp.dot(h.astype(bf16), out_w_ref[...],
                           preferred_element_type=f32) + out_b_ref[...]


# ---------------------------------------------------------------------------
# parameter init (deterministic, mirrors the nn.Module __init__ shapes)
# ---------------------------------------------------------------------------
def init_params(key, orig_atom_fea_len, nbr_fea_len,
                atom_fea_len=64, n_conv=3, h_fea_len=128):
    A, B, L, H = atom_fea_len, nbr_fea_len, n_conv, h_fea_len

    def linear(k, fan_in, fan_out):
        k1, k2 = jax.random.split(k)
        bound = float(fan_in) ** -0.5
        w = jax.random.uniform(k1, (fan_in, fan_out), jnp.float32, -bound, bound)
        b = jax.random.uniform(k2, (1, fan_out), jnp.float32, -bound, bound)
        return w, b

    ks = jax.random.split(key, 3 + L)
    emb_w, emb_b = linear(ks[0], orig_atom_fea_len, A)

    # BatchNorm1d at __init__ (inference): weight=1, bias=0, mean=0, var=1
    bn1_scale = jnp.full((1, 2 * A), (1.0 + EPS) ** -0.5, jnp.float32)
    bn1_shift = jnp.zeros((1, 2 * A), jnp.float32)
    bn2_scale = jnp.full((1, A), (1.0 + EPS) ** -0.5, jnp.float32)
    bn2_shift = jnp.zeros((1, A), jnp.float32)

    wsn, wb, b, bn2_s, bn2_b = [], [], [], [], []
    for i in range(L):
        # fc_full: Linear(2A + B, 2A); stored transposed (in, out)
        w_full, bias = linear(ks[3 + i], 2 * A + B, 2 * A)
        # fold bn1 (per-output-channel scale/shift) into weight columns / bias
        w_full = w_full * bn1_scale
        bias = bias * bn1_scale + bn1_shift
        # keep the full 2A (=128) output width lane-dense; fuse the self and
        # gathered input blocks into one (A, 4A) projection weight
        wsn.append(jnp.concatenate([w_full[:A, :], w_full[A:2 * A, :]], axis=1))
        wb.append(w_full[2 * A:, :])
        b.append(bias)
        bn2_s.append(bn2_scale)
        bn2_b.append(bn2_shift)

    fc1_w, fc1_b = linear(ks[1], A, H)   # conv_to_fc
    out_w, out_b = linear(ks[2], H, 1)   # fc_out (regression)

    stack = lambda xs: jnp.stack(xs, axis=0)
    tobf = lambda x: x.astype(jnp.bfloat16)
    return dict(
        emb_w=tobf(emb_w), emb_b=emb_b,
        wsn=tobf(stack(wsn)), wb=tobf(stack(wb)), b=stack(b),
        bn2_s=stack(bn2_s), bn2_b=stack(bn2_b),
        fc1_w=tobf(fc1_w), fc1_b=fc1_b,
        out_w=tobf(out_w), out_b=out_b,
    )


# ---------------------------------------------------------------------------
# forward pass wrapper (glue only: casts, layout reshapes, pooling metadata)
# ---------------------------------------------------------------------------
def crystal_graph_conv_net(params, atom_fea, nbr_fea, nbr_fea_idx,
                           crystal_atom_idx):
    N, M = nbr_fea_idx.shape
    B = nbr_fea.shape[-1]
    N0 = len(crystal_atom_idx)

    # glue: bf16 MXU operands; bond rows and neighbor indices m-major so the
    # kernel builds ONE stacked gather matrix with no in-kernel transposes.
    atom0 = atom_fea.astype(jnp.bfloat16)                                # (N, orig)
    nbr_flat = (jnp.transpose(nbr_fea, (1, 0, 2))
                .reshape(M * N, B).astype(jnp.bfloat16))                 # (M*N, B)
    idx_flat = (jnp.transpose(nbr_fea_idx.astype(jnp.int32), (1, 0))
                .reshape(M * N, 1))                                      # (M*N, 1)

    # glue: vectorized pooling metadata (no per-atom Python loop).
    # TODO(synk): precompute per-dataset when crystal_atom_idx is static.
    lens = np.asarray([int(np.asarray(ix).shape[0]) for ix in crystal_atom_idx])
    all_idx = np.concatenate([np.asarray(ix) for ix in crystal_atom_idx]).astype(np.int64)
    all_cid = np.repeat(np.arange(N0, dtype=np.int32), lens)
    cid_np = np.zeros((1, N), np.int32)
    cid_np[0, all_idx] = all_cid     # NOTE: padding atoms (if ever) would land in crystal 0
    icnt_np = (1.0 / lens.astype(np.float32)).reshape(N0, 1)
    cid = jnp.asarray(cid_np)
    icnt = jnp.asarray(icnt_np)

    n_inputs = 16
    fn = pl.pallas_call(
        _cgcnn_kernel,
        out_shape=jax.ShapeDtypeStruct((N0, 1), jnp.float32),
        in_specs=[_VMEM() for _ in range(n_inputs)],
        out_specs=_VMEM(),
        compiler_params=pltpu.CompilerParams(
            # v5e scoped default is 16 MiB; keep <= ~48 MiB so the same config
            # also fits v7x's 64 MiB physical VMEM. Raise on v6e for large N.
            vmem_limit_bytes=32 * 1024 * 1024),
    )
    return fn(atom0, nbr_flat, idx_flat, cid, icnt,
              params["emb_w"], params["emb_b"],
              params["wsn"], params["wb"], params["b"],
              params["bn2_s"], params["bn2_b"],
              params["fc1_w"], params["fc1_b"],
              params["out_w"], params["out_b"])            # (N0, 1) f32


# ---------------------------------------------------------------------------
if __name__ == "__main__":
    key = jax.random.PRNGKey(0)
    k_par, k_atom, k_nbr, k_idx = jax.random.split(key, 4)

    # small shapes consistent with the module defaults
    ORIG_ATOM_FEA_LEN = 16
    NBR_FEA_LEN = 32
    ATOM_FEA_LEN = 64
    N_CONV = 3
    H_FEA_LEN = 128
    N, M, N0 = 16, 8, 2            # 16 atoms, 8 neighbors, 2 crystals

    params = init_params(k_par, ORIG_ATOM_FEA_LEN, NBR_FEA_LEN,
                         ATOM_FEA_LEN, N_CONV, H_FEA_LEN)

    atom_fea = jax.random.normal(k_atom, (N, ORIG_ATOM_FEA_LEN), jnp.float32)
    nbr_fea = jax.random.normal(k_nbr, (N, M, NBR_FEA_LEN), jnp.float32)
    nbr_fea_idx = jax.random.randint(k_idx, (N, M), 0, N, jnp.int32)
    crystal_atom_idx = [jnp.arange(0, 8), jnp.arange(8, 16)]   # 2 crystals x 8 atoms

    out = crystal_graph_conv_net(params, atom_fea, nbr_fea, nbr_fea_idx,
                                 crystal_atom_idx)
    jax.block_until_ready(out)
    assert out.shape == (N0, 1) and out.dtype == jnp.float32
    assert bool(jnp.all(jnp.isfinite(out)))
    print("KERNEL_OK")
</pallas_src>

<mosaic_0001>
module attributes {stable_mosaic.version = 11 : i64} {
  func.func @_cgcnn_kernel(%arg0: memref<16x16xbf16, #tpu.memory_space<vmem>>, %arg1: memref<128x32xbf16, #tpu.memory_space<vmem>>, %arg2: memref<128x1xi32, #tpu.memory_space<vmem>>, %arg3: memref<1x16xi32, #tpu.memory_space<vmem>>, %arg4: memref<2x1xf32, #tpu.memory_space<vmem>>, %arg5: memref<16x64xbf16, #tpu.memory_space<vmem>>, %arg6: memref<1x64xf32, #tpu.memory_space<vmem>>, %arg7: memref<3x64x256xbf16, #tpu.memory_space<vmem>>, %arg8: memref<3x32x128xbf16, #tpu.memory_space<vmem>>, %arg9: memref<3x1x128xf32, #tpu.memory_space<vmem>>, %arg10: memref<3x1x64xf32, #tpu.memory_space<vmem>>, %arg11: memref<3x1x64xf32, #tpu.memory_space<vmem>>, %arg12: memref<64x128xbf16, #tpu.memory_space<vmem>>, %arg13: memref<1x128xf32, #tpu.memory_space<vmem>>, %arg14: memref<128x1xbf16, #tpu.memory_space<vmem>>, %arg15: memref<1x1xf32, #tpu.memory_space<vmem>>, %arg16: memref<2x1xf32, #tpu.memory_space<vmem>>) attributes {dimension_semantics = [], scalar_prefetch = 0 : i64, scratch_operands = 0 : i64, tpu.core_type = #tpu.core_type<tc>} {
    %c0 = arith.constant 0 : index
    %c0_0 = arith.constant 0 : index
    %0 = vector.load %arg0[%c0, %c0_0] : memref<16x16xbf16, #tpu.memory_space<vmem>>, vector<16x16xbf16>
    %c0_1 = arith.constant 0 : index
    %c0_2 = arith.constant 0 : index
    %1 = vector.load %arg5[%c0_1, %c0_2] : memref<16x64xbf16, #tpu.memory_space<vmem>>, vector<16x64xbf16>
    %cst = arith.constant dense<0.000000e+00> : vector<16x64xf32>
    %2 = tpu.matmul %0, %1, %cst {dimension_numbers = #tpu.dot_dimension_numbers<[1], [0], [0], [1], [0, 0, 1, 1], [], []>} : vector<16x16xbf16>, vector<16x64xbf16>, vector<16x64xf32> -> vector<16x64xf32>
    %c0_3 = arith.constant 0 : index
    %c0_4 = arith.constant 0 : index
    %3 = vector.load %arg6[%c0_3, %c0_4] : memref<1x64xf32, #tpu.memory_space<vmem>>, vector<1x64xf32>
    %4 = vector.broadcast %3 : vector<1x64xf32> to vector<16x64xf32>
    %5 = arith.addf %2, %4 : vector<16x64xf32>
    %6 = tpu.iota {dimensions = array<i32: 1>} : vector<128x16xi32>
    %c0_5 = arith.constant 0 : index
    %c0_6 = arith.constant 0 : index
    %7 = vector.load %arg2[%c0_5, %c0_6] : memref<128x1xi32, #tpu.memory_space<vmem>>, vector<128x1xi32>
    %8 = vector.broadcast %7 : vector<128x1xi32> to vector<128x16xi32>
    %9 = arith.cmpi eq, %8, %6 : vector<128x16xi32>
    %cst_7 = arith.constant 1.000000e+00 : f32
    %cst_8 = arith.constant 0.000000e+00 : f32
    %10 = vector.broadcast %cst_7 : f32 to vector<128x16xf32>
    %11 = vector.broadcast %cst_8 : f32 to vector<128x16xf32>
    %12 = arith.select %9, %10, %11 : vector<128x16xi1>, vector<128x16xf32>
    %13 = arith.truncf %12 : vector<128x16xf32> to vector<128x16xbf16>
    %c0_9 = arith.constant 0 : index
    %c0_10 = arith.constant 0 : index
    %14 = vector.load %arg1[%c0_9, %c0_10] : memref<128x32xbf16, #tpu.memory_space<vmem>>, vector<128x32xbf16>
    %15 = arith.truncf %5 : vector<16x64xf32> to vector<16x64xbf16>
    %c0_11 = arith.constant 0 : index
    %c0_12 = arith.constant 0 : index
    %c0_13 = arith.constant 0 : index
    %16 = vector.load %arg7[%c0_11, %c0_12, %c0_13] : memref<3x64x256xbf16, #tpu.memory_space<vmem>>, vector<1x64x256xbf16>
    %17 = vector.shape_cast %16 : vector<1x64x256xbf16> to vector<64x256xbf16>
    %cst_14 = arith.constant dense<0.000000e+00> : vector<16x256xf32>
    %18 = tpu.matmul %15, %17, %cst_14 {dimension_numbers = #tpu.dot_dimension_numbers<[1], [0], [0], [1], [0, 0, 1, 1], [], []>} : vector<16x64xbf16>, vector<64x256xbf16>, vector<16x256xf32> -> vector<16x256xf32>
    %19 = vector.extract_strided_slice %18 {offsets = [0, 0], sizes = [16, 128], strides = [1, 1]} : vector<16x256xf32> to vector<16x128xf32>
    %c0_15 = arith.constant 0 : index
    %c0_16 = arith.constant 0 : index
    %c0_17 = arith.constant 0 : index
    %20 = vector.load %arg9[%c0_15, %c0_16, %c0_17] : memref<3x1x128xf32, #tpu.memory_space<vmem>>, vector<1x1x128xf32>
    %21 = vector.shape_cast %20 : vector<1x1x128xf32> to vector<1x128xf32>
    %22 = vector.broadcast %21 : vector<1x128xf32> to vector<16x128xf32>
    %23 = arith.addf %19, %22 : vector<16x128xf32>
    %24 = vector.extract_strided_slice %18 {offsets = [0, 128], sizes = [16, 128], strides = [1, 1]} : vector<16x256xf32> to vector<16x128xf32>
    %c0_18 = arith.constant 0 : index
    %c0_19 = arith.constant 0 : index
    %c0_20 = arith.constant 0 : index
    %25 = vector.load %arg8[%c0_18, %c0_19, %c0_20] : memref<3x32x128xbf16, #tpu.memory_space<vmem>>, vector<1x32x128xbf16>
    %26 = vector.shape_cast %25 : vector<1x32x128xbf16> to vector<32x128xbf16>
    %cst_21 = arith.constant dense<0.000000e+00> : vector<128x128xf32>
    %27 = tpu.matmul %14, %26, %cst_21 {dimension_numbers = #tpu.dot_dimension_numbers<[1], [0], [0], [1], [0, 0, 1, 1], [], []>} : vector<128x32xbf16>, vector<32x128xbf16>, vector<128x128xf32> -> vector<128x128xf32>
    %28 = arith.truncf %24 : vector<16x128xf32> to vector<16x128xbf16>
    %cst_22 = arith.constant dense<0.000000e+00> : vector<128x128xf32>
    %29 = tpu.matmul %13, %28, %cst_22 {dimension_numbers = #tpu.dot_dimension_numbers<[1], [0], [0], [1], [0, 0, 1, 1], [], []>} : vector<128x16xbf16>, vector<16x128xbf16>, vector<128x128xf32> -> vector<128x128xf32>
    %30 = arith.addf %29, %27 : vector<128x128xf32>
    %31 = vector.shape_cast %30 : vector<128x128xf32> to vector<8x16x128xf32>
    %32 = vector.shape_cast %23 : vector<16x128xf32> to vector<1x16x128xf32>
    %33 = vector.broadcast %32 : vector<1x16x128xf32> to vector<8x16x128xf32>
    %34 = arith.addf %31, %33 : vector<8x16x128xf32>
    %35 = vector.extract_strided_slice %34 {offsets = [0, 0, 0], sizes = [8, 16, 64], strides = [1, 1, 1]} : vector<8x16x128xf32> to vector<8x16x64xf32>
    %cst_23 = arith.constant 0.000000e+00 : f32
    %36 = vector.broadcast %cst_23 : f32 to vector<8x16x64xf32>
    %37 = arith.subf %36, %35 : vector<8x16x64xf32>
    %38 = math.exp %37 : vector<8x16x64xf32>
    %cst_24 = arith.constant 1.000000e+00 : f32
    %39 = vector.broadcast %cst_24 : f32 to vector<8x16x64xf32>
    %40 = arith.addf %39, %38 : vector<8x16x64xf32>
    %41 = tpu.reciprocal %40 {approx = true} : vector<8x16x64xf32> -> vector<8x16x64xf32>
    %42 = vector.extract_strided_slice %34 {offsets = [0, 0, 64], sizes = [8, 16, 64], strides = [1, 1, 1]} : vector<8x16x128xf32> to vector<8x16x64xf32>
    %cst_25 = arith.constant 2.000000e+01 : f32
    %43 = vector.broadcast %cst_25 : f32 to vector<8x16x64xf32>
    %44 = arith.cmpf ogt, %42, %43 : vector<8x16x64xf32>
    %cst_26 = arith.constant 2.000000e+01 : f32
    %45 = vector.broadcast %cst_26 : f32 to vector<8x16x64xf32>
    %46 = arith.minimumf %42, %45 : vector<8x16x64xf32>
    %47 = math.exp %46 : vector<8x16x64xf32>
    %48 = math.log1p %47 : vector<8x16x64xf32>
    %49 = arith.select %44, %42, %48 : vector<8x16x64xi1>, vector<8x16x64xf32>
    %50 = arith.mulf %41, %49 : vector<8x16x64xf32>
    %cst_27 = arith.constant dense<0.000000e+00> : vector<16x64xf32>
    %51 = vector.multi_reduction <add>, %50, %cst_27 [0] : vector<8x16x64xf32> to vector<16x64xf32>
    %c0_28 = arith.constant 0 : index
    %c0_29 = arith.constant 0 : index
    %c0_30 = arith.constant 0 : index
    %52 = vector.load %arg10[%c0_28, %c0_29, %c0_30] : memref<3x1x64xf32, #tpu.memory_space<vmem>>, vector<1x1x64xf32>
    %53 = vector.shape_cast %52 : vector<1x1x64xf32> to vector<1x64xf32>
    %54 = vector.broadcast %53 : vector<1x64xf32> to vector<16x64xf32>
    %55 = arith.mulf %51, %54 : vector<16x64xf32>
    %56 = arith.addf %5, %55 : vector<16x64xf32>
    %c0_31 = arith.constant 0 : index
    %c0_32 = arith.constant 0 : index
    %c0_33 = arith.constant 0 : index
    %57 = vector.load %arg11[%c0_31, %c0_32, %c0_33] : memref<3x1x64xf32, #tpu.memory_space<vmem>>, vector<1x1x64xf32>
    %58 = vector.shape_cast %57 : vector<1x1x64xf32> to vector<1x64xf32>
    %59 = vector.broadcast %58 : vector<1x64xf32> to vector<16x64xf32>
    %60 = arith.addf %56, %59 : vector<16x64xf32>
    %cst_34 = arith.constant 2.000000e+01 : f32
    %61 = vector.broadcast %cst_34 : f32 to vector<16x64xf32>
    %62 = arith.cmpf ogt, %60, %61 : vector<16x64xf32>
    %cst_35 = arith.constant 2.000000e+01 : f32
    %63 = vector.broadcast %cst_35 : f32 to vector<16x64xf32>
    %64 = arith.minimumf %60, %63 : vector<16x64xf32>
    %65 = math.exp %64 : vector<16x64xf32>
    %66 = math.log1p %65 : vector<16x64xf32>
    %67 = arith.select %62, %60, %66 : vector<16x64xi1>, vector<16x64xf32>
    %68 = arith.truncf %67 : vector<16x64xf32> to vector<16x64xbf16>
    %c1 = arith.constant 1 : index
    %c0_36 = arith.constant 0 : index
    %c0_37 = arith.constant 0 : index
    %69 = vector.load %arg7[%c1, %c0_36, %c0_37] : memref<3x64x256xbf16, #tpu.memory_space<vmem>>, vector<1x64x256xbf16>
    %70 = vector.shape_cast %69 : vector<1x64x256xbf16> to vector<64x256xbf16>
    %cst_38 = arith.constant dense<0.000000e+00> : vector<16x256xf32>
    %71 = tpu.matmul %68, %70, %cst_38 {dimension_numbers = #tpu.dot_dimension_numbers<[1], [0], [0], [1], [0, 0, 1, 1], [], []>} : vector<16x64xbf16>, vector<64x256xbf16>, vector<16x256xf32> -> vector<16x256xf32>
    %72 = vector.extract_strided_slice %71 {offsets = [0, 0], sizes = [16, 128], strides = [1, 1]} : vector<16x256xf32> to vector<16x128xf32>
    %c1_39 = arith.constant 1 : index
    %c0_40 = arith.constant 0 : index
    %c0_41 = arith.constant 0 : index
    %73 = vector.load %arg9[%c1_39, %c0_40, %c0_41] : memref<3x1x128xf32, #tpu.memory_space<vmem>>, vector<1x1x128xf32>
    %74 = vector.shape_cast %73 : vector<1x1x128xf32> to vector<1x128xf32>
    %75 = vector.broadcast %74 : vector<1x128xf32> to vector<16x128xf32>
    %76 = arith.addf %72, %75 : vector<16x128xf32>
    %77 = vector.extract_strided_slice %71 {offsets = [0, 128], sizes = [16, 128], strides = [1, 1]} : vector<16x256xf32> to vector<16x128xf32>
    %c1_42 = arith.constant 1 : index
    %c0_43 = arith.constant 0 : index
    %c0_44 = arith.constant 0 : index
    %78 = vector.load %arg8[%c1_42, %c0_43, %c0_44] : memref<3x32x128xbf16, #tpu.memory_space<vmem>>, vector<1x32x128xbf16>
    %79 = vector.shape_cast %78 : vector<1x32x128xbf16> to vector<32x128xbf16>
    %cst_45 = arith.constant dense<0.000000e+00> : vector<128x128xf32>
    %80 = tpu.matmul %14, %79, %cst_45 {dimension_numbers = #tpu.dot_dimension_numbers<[1], [0], [0], [1], [0, 0, 1, 1], [], []>} : vector<128x32xbf16>, vector<32x128xbf16>, vector<128x128xf32> -> vector<128x128xf32>
    %81 = arith.truncf %77 : vector<16x128xf32> to vector<16x128xbf16>
    %cst_46 = arith.constant dense<0.000000e+00> : vector<128x128xf32>
    %82 = tpu.matmul %13, %81, %cst_46 {dimension_numbers = #tpu.dot_dimension_numbers<[1], [0], [0], [1], [0, 0, 1, 1], [], []>} : vector<128x16xbf16>, vector<16x128xbf16>, vector<128x128xf32> -> vector<128x128xf32>
    %83 = arith.addf %82, %80 : vector<128x128xf32>
    %84 = vector.shape_cast %83 : vector<128x128xf32> to vector<8x16x128xf32>
    %85 = vector.shape_cast %76 : vector<16x128xf32> to vector<1x16x128xf32>
    %86 = vector.broadcast %85 : vector<1x16x128xf32> to vector<8x16x128xf32>
    %87 = arith.addf %84, %86 : vector<8x16x128xf32>
    %88 = vector.extract_strided_slice %87 {offsets = [0, 0, 0], sizes = [8, 16, 64], strides = [1, 1, 1]} : vector<8x16x128xf32> to vector<8x16x64xf32>
    %cst_47 = arith.constant 0.000000e+00 : f32
    %89 = vector.broadcast %cst_47 : f32 to vector<8x16x64xf32>
    %90 = arith.subf %89, %88 : vector<8x16x64xf32>
    %91 = math.exp %90 : vector<8x16x64xf32>
    %cst_48 = arith.constant 1.000000e+00 : f32
    %92 = vector.broadcast %cst_48 : f32 to vector<8x16x64xf32>
    %93 = arith.addf %92, %91 : vector<8x16x64xf32>
    %94 = tpu.reciprocal %93 {approx = true} : vector<8x16x64xf32> -> vector<8x16x64xf32>
    %95 = vector.extract_strided_slice %87 {offsets = [0, 0, 64], sizes = [8, 16, 64], strides = [1, 1, 1]} : vector<8x16x128xf32> to vector<8x16x64xf32>
    %cst_49 = arith.constant 2.000000e+01 : f32
    %96 = vector.broadcast %cst_49 : f32 to vector<8x16x64xf32>
    %97 = arith.cmpf ogt, %95, %96 : vector<8x16x64xf32>
    %cst_50 = arith.constant 2.000000e+01 : f32
    %98 = vector.broadcast %cst_50 : f32 to vector<8x16x64xf32>
    %99 = arith.minimumf %95, %98 : vector<8x16x64xf32>
    %100 = math.exp %99 : vector<8x16x64xf32>
    %101 = math.log1p %100 : vector<8x16x64xf32>
    %102 = arith.select %97, %95, %101 : vector<8x16x64xi1>, vector<8x16x64xf32>
    %103 = arith.mulf %94, %102 : vector<8x16x64xf32>
    %cst_51 = arith.constant dense<0.000000e+00> : vector<16x64xf32>
    %104 = vector.multi_reduction <add>, %103, %cst_51 [0] : vector<8x16x64xf32> to vector<16x64xf32>
    %c1_52 = arith.constant 1 : index
    %c0_53 = arith.constant 0 : index
    %c0_54 = arith.constant 0 : index
    %105 = vector.load %arg10[%c1_52, %c0_53, %c0_54] : memref<3x1x64xf32, #tpu.memory_space<vmem>>, vector<1x1x64xf32>
    %106 = vector.shape_cast %105 : vector<1x1x64xf32> to vector<1x64xf32>
    %107 = vector.broadcast %106 : vector<1x64xf32> to vector<16x64xf32>
    %108 = arith.mulf %104, %107 : vector<16x64xf32>
    %109 = arith.addf %67, %108 : vector<16x64xf32>
    %c1_55 = arith.constant 1 : index
    %c0_56 = arith.constant 0 : index
    %c0_57 = arith.constant 0 : index
    %110 = vector.load %arg11[%c1_55, %c0_56, %c0_57] : memref<3x1x64xf32, #tpu.memory_space<vmem>>, vector<1x1x64xf32>
    %111 = vector.shape_cast %110 : vector<1x1x64xf32> to vector<1x64xf32>
    %112 = vector.broadcast %111 : vector<1x64xf32> to vector<16x64xf32>
    %113 = arith.addf %109, %112 : vector<16x64xf32>
    %cst_58 = arith.constant 2.000000e+01 : f32
    %114 = vector.broadcast %cst_58 : f32 to vector<16x64xf32>
    %115 = arith.cmpf ogt, %113, %114 : vector<16x64xf32>
    %cst_59 = arith.constant 2.000000e+01 : f32
    %116 = vector.broadcast %cst_59 : f32 to vector<16x64xf32>
    %117 = arith.minimumf %113, %116 : vector<16x64xf32>
    %118 = math.exp %117 : vector<16x64xf32>
    %119 = math.log1p %118 : vector<16x64xf32>
    %120 = arith.select %115, %113, %119 : vector<16x64xi1>, vector<16x64xf32>
    %121 = arith.truncf %120 : vector<16x64xf32> to vector<16x64xbf16>
    %c2 = arith.constant 2 : index
    %c0_60 = arith.constant 0 : index
    %c0_61 = arith.constant 0 : index
    %122 = vector.load %arg7[%c2, %c0_60, %c0_61] : memref<3x64x256xbf16, #tpu.memory_space<vmem>>, vector<1x64x256xbf16>
    %123 = vector.shape_cast %122 : vector<1x64x256xbf16> to vector<64x256xbf16>
    %cst_62 = arith.constant dense<0.000000e+00> : vector<16x256xf32>
    %124 = tpu.matmul %121, %123, %cst_62 {dimension_numbers = #tpu.dot_dimension_numbers<[1], [0], [0], [1], [0, 0, 1, 1], [], []>} : vector<16x64xbf16>, vector<64x256xbf16>, vector<16x256xf32> -> vector<16x256xf32>
    %125 = vector.extract_strided_slice %124 {offsets = [0, 0], sizes = [16, 128], strides = [1, 1]} : vector<16x256xf32> to vector<16x128xf32>
    %c2_63 = arith.constant 2 : index
    %c0_64 = arith.constant 0 : index
    %c0_65 = arith.constant 0 : index
    %126 = vector.load %arg9[%c2_63, %c0_64, %c0_65] : memref<3x1x128xf32, #tpu.memory_space<vmem>>, vector<1x1x128xf32>
    %127 = vector.shape_cast %126 : vector<1x1x128xf32> to vector<1x128xf32>
    %128 = vector.broadcast %127 : vector<1x128xf32> to vector<16x128xf32>
    %129 = arith.addf %125, %128 : vector<16x128xf32>
    %130 = vector.extract_strided_slice %124 {offsets = [0, 128], sizes = [16, 128], strides = [1, 1]} : vector<16x256xf32> to vector<16x128xf32>
    %c2_66 = arith.constant 2 : index
    %c0_67 = arith.constant 0 : index
    %c0_68 = arith.constant 0 : index
    %131 = vector.load %arg8[%c2_66, %c0_67, %c0_68] : memref<3x32x128xbf16, #tpu.memory_space<vmem>>, vector<1x32x128xbf16>
    %132 = vector.shape_cast %131 : vector<1x32x128xbf16> to vector<32x128xbf16>
    %cst_69 = arith.constant dense<0.000000e+00> : vector<128x128xf32>
    %133 = tpu.matmul %14, %132, %cst_69 {dimension_numbers = #tpu.dot_dimension_numbers<[1], [0], [0], [1], [0, 0, 1, 1], [], []>} : vector<128x32xbf16>, vector<32x128xbf16>, vector<128x128xf32> -> vector<128x128xf32>
    %134 = arith.truncf %130 : vector<16x128xf32> to vector<16x128xbf16>
    %cst_70 = arith.constant dense<0.000000e+00> : vector<128x128xf32>
    %135 = tpu.matmul %13, %134, %cst_70 {dimension_numbers = #tpu.dot_dimension_numbers<[1], [0], [0], [1], [0, 0, 1, 1], [], []>} : vector<128x16xbf16>, vector<16x128xbf16>, vector<128x128xf32> -> vector<128x128xf32>
    %136 = arith.addf %135, %133 : vector<128x128xf32>
    %137 = vector.shape_cast %136 : vector<128x128xf32> to vector<8x16x128xf32>
    %138 = vector.shape_cast %129 : vector<16x128xf32> to vector<1x16x128xf32>
    %139 = vector.broadcast %138 : vector<1x16x128xf32> to vector<8x16x128xf32>
    %140 = arith.addf %137, %139 : vector<8x16x128xf32>
    %141 = vector.extract_strided_slice %140 {offsets = [0, 0, 0], sizes = [8, 16, 64], strides = [1, 1, 1]} : vector<8x16x128xf32> to vector<8x16x64xf32>
    %cst_71 = arith.constant 0.000000e+00 : f32
    %142 = vector.broadcast %cst_71 : f32 to vector<8x16x64xf32>
    %143 = arith.subf %142, %141 : vector<8x16x64xf32>
    %144 = math.exp %143 : vector<8x16x64xf32>
    %cst_72 = arith.constant 1.000000e+00 : f32
    %145 = vector.broadcast %cst_72 : f32 to vector<8x16x64xf32>
    %146 = arith.addf %145, %144 : vector<8x16x64xf32>
    %147 = tpu.reciprocal %146 {approx = true} : vector<8x16x64xf32> -> vector<8x16x64xf32>
    %148 = vector.extract_strided_slice %140 {offsets = [0, 0, 64], sizes = [8, 16, 64], strides = [1, 1, 1]} : vector<8x16x128xf32> to vector<8x16x64xf32>
    %cst_73 = arith.constant 2.000000e+01 : f32
    %149 = vector.broadcast %cst_73 : f32 to vector<8x16x64xf32>
    %150 = arith.cmpf ogt, %148, %149 : vector<8x16x64xf32>
    %cst_74 = arith.constant 2.000000e+01 : f32
    %151 = vector.broadcast %cst_74 : f32 to vector<8x16x64xf32>
    %152 = arith.minimumf %148, %151 : vector<8x16x64xf32>
    %153 = math.exp %152 : vector<8x16x64xf32>
    %154 = math.log1p %153 : vector<8x16x64xf32>
    %155 = arith.select %150, %148, %154 : vector<8x16x64xi1>, vector<8x16x64xf32>
    %156 = arith.mulf %147, %155 : vector<8x16x64xf32>
    %cst_75 = arith.constant dense<0.000000e+00> : vector<16x64xf32>
    %157 = vector.multi_reduction <add>, %156, %cst_75 [0] : vector<8x16x64xf32> to vector<16x64xf32>
    %c2_76 = arith.constant 2 : index
    %c0_77 = arith.constant 0 : index
    %c0_78 = arith.constant 0 : index
    %158 = vector.load %arg10[%c2_76, %c0_77, %c0_78] : memref<3x1x64xf32, #tpu.memory_space<vmem>>, vector<1x1x64xf32>
    %159 = vector.shape_cast %158 : vector<1x1x64xf32> to vector<1x64xf32>
    %160 = vector.broadcast %159 : vector<1x64xf32> to vector<16x64xf32>
    %161 = arith.mulf %157, %160 : vector<16x64xf32>
    %162 = arith.addf %120, %161 : vector<16x64xf32>
    %c2_79 = arith.constant 2 : index
    %c0_80 = arith.constant 0 : index
    %c0_81 = arith.constant 0 : index
    %163 = vector.load %arg11[%c2_79, %c0_80, %c0_81] : memref<3x1x64xf32, #tpu.memory_space<vmem>>, vector<1x1x64xf32>
    %164 = vector.shape_cast %163 : vector<1x1x64xf32> to vector<1x64xf32>
    %165 = vector.broadcast %164 : vector<1x64xf32> to vector<16x64xf32>
    %166 = arith.addf %162, %165 : vector<16x64xf32>
    %cst_82 = arith.constant 2.000000e+01 : f32
    %167 = vector.broadcast %cst_82 : f32 to vector<16x64xf32>
    %168 = arith.cmpf ogt, %166, %167 : vector<16x64xf32>
    %cst_83 = arith.constant 2.000000e+01 : f32
    %169 = vector.broadcast %cst_83 : f32 to vector<16x64xf32>
    %170 = arith.minimumf %166, %169 : vector<16x64xf32>
    %171 = math.exp %170 : vector<16x64xf32>
    %172 = math.log1p %171 : vector<16x64xf32>
    %173 = arith.select %168, %166, %172 : vector<16x64xi1>, vector<16x64xf32>
    %174 = tpu.iota {dimensions = array<i32: 0>} : vector<2x16xi32>
    %c0_84 = arith.constant 0 : index
    %c0_85 = arith.constant 0 : index
    %175 = vector.load %arg3[%c0_84, %c0_85] : memref<1x16xi32, #tpu.memory_space<vmem>>, vector<1x16xi32>
    %176 = vector.broadcast %175 : vector<1x16xi32> to vector<2x16xi32>
    %177 = arith.cmpi eq, %174, %176 : vector<2x16xi32>
    %cst_86 = arith.constant 1.000000e+00 : f32
    %cst_87 = arith.constant 0.000000e+00 : f32
    %178 = vector.broadcast %cst_86 : f32 to vector<2x16xf32>
    %179 = vector.broadcast %cst_87 : f32 to vector<2x16xf32>
    %180 = arith.select %177, %178, %179 : vector<2x16xi1>, vector<2x16xf32>
    %cst_88 = arith.constant dense<0.000000e+00> : vector<2x64xf32>
    %181 = tpu.matmul %180, %173, %cst_88 {dimension_numbers = #tpu.dot_dimension_numbers<[1], [0], [0], [1], [0, 0, 1, 1], [], []>} : vector<2x16xf32>, vector<16x64xf32>, vector<2x64xf32> -> vector<2x64xf32>
    %c0_89 = arith.constant 0 : index
    %c0_90 = arith.constant 0 : index
    %182 = vector.load %arg4[%c0_89, %c0_90] : memref<2x1xf32, #tpu.memory_space<vmem>>, vector<2x1xf32>
    %183 = vector.broadcast %182 : vector<2x1xf32> to vector<2x64xf32>
    %184 = arith.mulf %181, %183 : vector<2x64xf32>
    %cst_91 = arith.constant 2.000000e+01 : f32
    %185 = vector.broadcast %cst_91 : f32 to vector<2x64xf32>
    %186 = arith.cmpf ogt, %184, %185 : vector<2x64xf32>
    %cst_92 = arith.constant 2.000000e+01 : f32
    %187 = vector.broadcast %cst_92 : f32 to vector<2x64xf32>
    %188 = arith.minimumf %184, %187 : vector<2x64xf32>
    %189 = math.exp %188 : vector<2x64xf32>
    %190 = math.log1p %189 : vector<2x64xf32>
    %191 = arith.select %186, %184, %190 : vector<2x64xi1>, vector<2x64xf32>
    %192 = arith.truncf %191 : vector<2x64xf32> to vector<2x64xbf16>
    %c0_93 = arith.constant 0 : index
    %c0_94 = arith.constant 0 : index
    %193 = vector.load %arg12[%c0_93, %c0_94] : memref<64x128xbf16, #tpu.memory_space<vmem>>, vector<64x128xbf16>
    %cst_95 = arith.constant dense<0.000000e+00> : vector<2x128xf32>
    %194 = tpu.matmul %192, %193, %cst_95 {dimension_numbers = #tpu.dot_dimension_numbers<[1], [0], [0], [1], [0, 0, 1, 1], [], []>} : vector<2x64xbf16>, vector<64x128xbf16>, vector<2x128xf32> -> vector<2x128xf32>
    %c0_96 = arith.constant 0 : index
    %c0_97 = arith.constant 0 : index
    %195 = vector.load %arg13[%c0_96, %c0_97] : memref<1x128xf32, #tpu.memory_space<vmem>>, vector<1x128xf32>
    %196 = vector.broadcast %195 : vector<1x128xf32> to vector<2x128xf32>
    %197 = arith.addf %194, %196 : vector<2x128xf32>
    %cst_98 = arith.constant 2.000000e+01 : f32
    %198 = vector.broadcast %cst_98 : f32 to vector<2x128xf32>
    %199 = arith.cmpf ogt, %197, %198 : vector<2x128xf32>
    %cst_99 = arith.constant 2.000000e+01 : f32
    %200 = vector.broadcast %cst_99 : f32 to vector<2x128xf32>
    %201 = arith.minimumf %197, %200 : vector<2x128xf32>
    %202 = math.exp %201 : vector<2x128xf32>
    %203 = math.log1p %202 : vector<2x128xf32>
    %204 = arith.select %199, %197, %203 : vector<2x128xi1>, vector<2x128xf32>
    %205 = arith.truncf %204 : vector<2x128xf32> to vector<2x128xbf16>
    %c0_100 = arith.constant 0 : index
    %c0_101 = arith.constant 0 : index
    %206 = vector.load %arg14[%c0_100, %c0_101] : memref<128x1xbf16, #tpu.memory_space<vmem>>, vector<128x1xbf16>
    %cst_102 = arith.constant dense<0.000000e+00> : vector<2x1xf32>
    %207 = tpu.matmul %205, %206, %cst_102 {dimension_numbers = #tpu.dot_dimension_numbers<[1], [0], [0], [1], [0, 0, 1, 1], [], []>} : vector<2x128xbf16>, vector<128x1xbf16>, vector<2x1xf32> -> vector<2x1xf32>
    %c0_103 = arith.constant 0 : index
    %c0_104 = arith.constant 0 : index
    %208 = vector.load %arg15[%c0_103, %c0_104] : memref<1x1xf32, #tpu.memory_space<vmem>>, vector<1x1xf32>
    %209 = vector.broadcast %208 : vector<1x1xf32> to vector<2x1xf32>
    %210 = arith.addf %207, %209 : vector<2x1xf32>
    %c0_105 = arith.constant 0 : index
    %c0_106 = arith.constant 0 : index
    %211 = vector.load %arg16[%c0_105, %c0_106] : memref<2x1xf32, #tpu.memory_space<vmem>>, vector<2x1xf32>
    tpu.vector_store %arg16[%c0_105, %c0_106], %210 {strides = array<i32>} : memref<2x1xf32, #tpu.memory_space<vmem>>, vector<2x1xf32>,
    return
  }
}

</mosaic_0001>

<llo_original>
// kernel: tpu_custom_call.1
$region0: #{tpu_custom_call.1}
  #allocation0 [shape = 'u32[]', space=smem, size = 0x4, offset = 0x4, fixed_abs, tag = 'smem constant byte address 0x4 - core index']
  #allocation1 [shape = 'u32[144,128]{1,0:T(1,128)}', space=vmem, size = 0x12000, scoped, tag = 'internal scratch']
  #allocation2 [shape = 'f32[1,1]{1,0:T(1,128)S(1)}', space=vmem, size = 0x200, scoped, tag = 'scoped memory for tpu_custom_call.1']
  %s0 = inlined_call_operand.vmem [shape: bf16[16,16], index: 0, kind: input, shape index: {}]
  %s1 = inlined_call_operand.vmem [shape: bf16[128,32], index: 1, kind: input, shape index: {}]
  %s2 = inlined_call_operand.vmem [shape: s32[128,1], index: 2, kind: input, shape index: {}]
  %s3 = inlined_call_operand.vmem [shape: s32[1,16], index: 3, kind: input, shape index: {}]
  %s4 = inlined_call_operand.vmem [shape: f32[2,1], index: 4, kind: input, shape index: {}]
  %s5 = inlined_call_operand.vmem [shape: bf16[16,64], index: 5, kind: input, shape index: {}]
  %s6 = inlined_call_operand.vmem [shape: f32[1,64], index: 6, kind: input, shape index: {}]
  %s7 = inlined_call_operand.vmem [shape: bf16[3,64,256], index: 7, kind: input, shape index: {}]
  %s8 = inlined_call_operand.vmem [shape: bf16[3,32,128], index: 8, kind: input, shape index: {}]
  %s9 = inlined_call_operand.vmem [shape: f32[3,1,128], index: 9, kind: input, shape index: {}]
  %s10 = inlined_call_operand.vmem [shape: f32[3,1,64], index: 10, kind: input, shape index: {}]
  %s11 = inlined_call_operand.vmem [shape: f32[3,1,64], index: 11, kind: input, shape index: {}]
  %s12 = inlined_call_operand.vmem [shape: bf16[64,128], index: 12, kind: input, shape index: {}]
  %s13 = inlined_call_operand.vmem [shape: f32[1,128], index: 13, kind: input, shape index: {}]
  %s14 = inlined_call_operand.vmem [shape: bf16[128,1], index: 14, kind: input, shape index: {}]
  %s15 = inlined_call_operand.<no memory space> [shape: f32[1,1], index: 15, kind: input, shape index: {}]
  %s16 = inlined_call_operand.vmem [shape: f32[2,1], index: 16, kind: output, shape index: {}]
  %s17 = sld [smem:[#allocation0]]
  $region74: #{tpu_custom_call.1} parent=0
    _
  %s19 = ssub.s32 1, %s17
  %s20 = scalar_select 0, %s19, %s17
  %v21 = vstv %s15
  %22 = vst [vmem:[#allocation2] sm:$0x1] %v21
  // Predicated region
  $region2: #{tpu_custom_call.1} parent=0 // pred_check
    _
  $region3: #{tpu_custom_call.1} parent=0 // pred_check_branch
    %24 = sbr.rel (0) target = $region5
  $region4: #{tpu_custom_call.1} parent=0 // pred_region
    _
  $region5: #{tpu_custom_call.1} parent=0 // pred_fallthru
    _
  // Predicated region
  $region6: #{tpu_custom_call.1} parent=0 // pred_check
    _
  $region7: #{tpu_custom_call.1} parent=0 // pred_check_branch
    %26 = sbr.rel (0) target = $region9
  $region8: #{tpu_custom_call.1} parent=0 // pred_region
    _
  $region9: #{tpu_custom_call.1} parent=0 // pred_fallthru
    _
  // Predicated region
  $region10: #{tpu_custom_call.1} parent=0 // pred_check
    _
  $region11: #{tpu_custom_call.1} parent=0 // pred_check_branch
    %28 = sbr.rel (0) target = $region13
  $region12: #{tpu_custom_call.1} parent=0 // pred_region
    _
  $region13: #{tpu_custom_call.1} parent=0 // pred_fallthru
    _
  // Predicated region
  $region14: #{tpu_custom_call.1} parent=0 // pred_check
    _
  $region15: #{tpu_custom_call.1} parent=0 // pred_check_branch
    %30 = sbr.rel (0) target = $region17
  $region16: #{tpu_custom_call.1} parent=0 // pred_region
    _
  $region17: #{tpu_custom_call.1} parent=0 // pred_fallthru
    _
  // Predicated region
  $region18: #{tpu_custom_call.1} parent=0 // pred_check
    _
  $region19: #{tpu_custom_call.1} parent=0 // pred_check_branch
    %32 = sbr.rel (0) target = $region21
  $region20: #{tpu_custom_call.1} parent=0 // pred_region
    _
  $region21: #{tpu_custom_call.1} parent=0 // pred_fallthru
    _
  // Predicated region
  $region22: #{tpu_custom_call.1} parent=0 // pred_check
    _
  $region23: #{tpu_custom_call.1} parent=0 // pred_check_branch
    %34 = sbr.rel (0) target = $region25
  $region24: #{tpu_custom_call.1} parent=0 // pred_region
    _
  $region25: #{tpu_custom_call.1} parent=0 // pred_fallthru
    _
  // Predicated region
  $region26: #{tpu_custom_call.1} parent=0 // pred_check
    _
  $region27: #{tpu_custom_call.1} parent=0 // pred_check_branch
    %36 = sbr.rel (0) target = $region29
  $region28: #{tpu_custom_call.1} parent=0 // pred_region
    _
  $region29: #{tpu_custom_call.1} parent=0 // pred_fallthru
    _
  // Predicated region
  $region30: #{tpu_custom_call.1} parent=0 // pred_check
    _
  $region31: #{tpu_custom_call.1} parent=0 // pred_check_branch
    %38 = sbr.rel (0) target = $region33
  $region32: #{tpu_custom_call.1} parent=0 // pred_region
    _
  $region33: #{tpu_custom_call.1} parent=0 // pred_fallthru
    _
  // Predicated region
  $region34: #{tpu_custom_call.1} parent=0 // pred_check
    _
  $region35: #{tpu_custom_call.1} parent=0 // pred_check_branch
    %40 = sbr.rel (0) target = $region37
  $region36: #{tpu_custom_call.1} parent=0 // pred_region
    _
  $region37: #{tpu_custom_call.1} parent=0 // pred_fallthru
    _
  // Predicated region
  $region38: #{tpu_custom_call.1} parent=0 // pred_check
    _
  $region39: #{tpu_custom_call.1} parent=0 // pred_check_branch
    %42 = sbr.rel (0) target = $region41
  $region40: #{tpu_custom_call.1} parent=0 // pred_region
    _
  $region41: #{tpu_custom_call.1} parent=0 // pred_fallthru
    _
  // Predicated region
  $region42: #{tpu_custom_call.1} parent=0 // pred_check
    _
  $region43: #{tpu_custom_call.1} parent=0 // pred_check_branch
    %44 = sbr.rel (0) target = $region45
  $region44: #{tpu_custom_call.1} parent=0 // pred_region
    _
  $region45: #{tpu_custom_call.1} parent=0 // pred_fallthru
    _
  // Predicated region
  $region46: #{tpu_custom_call.1} parent=0 // pred_check
    _
  $region47: #{tpu_custom_call.1} parent=0 // pred_check_branch
    %46 = sbr.rel (0) target = $region49
  $region48: #{tpu_custom_call.1} parent=0 // pred_region
    _
  $region49: #{tpu_custom_call.1} parent=0 // pred_fallthru
    _
  // Predicated region
  $region50: #{tpu_custom_call.1} parent=0 // pred_check
    _
  $region51: #{tpu_custom_call.1} parent=0 // pred_check_branch
    %48 = sbr.rel (0) target = $region53
  $region52: #{tpu_custom_call.1} parent=0 // pred_region
    _
  $region53: #{tpu_custom_call.1} parent=0 // pred_fallthru
    _
  // Predicated region
  $region54: #{tpu_custom_call.1} parent=0 // pred_check
    _
  $region55: #{tpu_custom_call.1} parent=0 // pred_check_branch
    %50 = sbr.rel (0) target = $region57
  $region56: #{tpu_custom_call.1} parent=0 // pred_region
    _
  $region57: #{tpu_custom_call.1} parent=0 // pred_fallthru
    _
  // Predicated region
  $region58: #{tpu_custom_call.1} parent=0 // pred_check
    _
  $region59: #{tpu_custom_call.1} parent=0 // pred_check_branch
    %52 = sbr.rel (0) target = $region61
  $region60: #{tpu_custom_call.1} parent=0 // pred_region
    _
  $region61: #{tpu_custom_call.1} parent=0 // pred_fallthru
    _
  // Predicated region
  $region62: #{tpu_custom_call.1} parent=0 // pred_check
    _
  $region63: #{tpu_custom_call.1} parent=0 // pred_check_branch
    %54 = sbr.rel (0) target = $region65
  $region64: #{tpu_custom_call.1} parent=0 // pred_region
    _
  $region65: #{tpu_custom_call.1} parent=0 // pred_fallthru
    _
  %v56 = vld [vmem:[%s0] sm:$0xf]
  %v57 = vld [vmem:[%s0 + $0x4] sm:$0xf]
  %v58 = vld [vmem:[%s5] sm:$0xf]
  %v59 = vld [vmem:[%s5 + $0x4] sm:$0xf]
  %v60 = vld [vmem:[%s6] sm:$0x1]
  %v62 = vlaneseq
  %v63 = vshrl.u32 %v62, 7
  %v64 = vsub.s32 0, %v63
  %v65 = vrot.slane %v60, %v64
  %v69 = vunpack.c.l.b16 %v56
  %v70 = vunpack.c.l.b16 %v57
  %v71 = vpack.c.b16 %v70, %v69
  %v74 = vunpack.c.l.b16 %v58
  %v75 = vunpack.c.l.b16 %v59
  %v76 = vpack.c.b16 %v75, %v74
  %vm78 = vcmask 130048
  %v80 = vsel %vm78, %v71, 0
  %82 = vmatprep.subr.bf16.mxu0 0
  %83 = vmatpush1.bf16.msra.mxu0 %v76
  %84 = vmatprep.subr.bf16.mxu0 0
  %85 = vmatpush1.bf16.msra.mxu0 0
  %86 = vmatprep.subr.bf16.mxu0 0
  %87 = vmatpush1.bf16.msra.mxu0 0
  %88 = vmatprep.subr.bf16.mxu0 0
  %89 = vmatpush1.bf16.msra.mxu0 0
  %90 = vmatprep.subr.bf16.mxu0 0
  %91 = vmatpush1.bf16.msra.mxu0 0
  %92 = vmatprep.subr.bf16.mxu0 0
  %93 = vmatpush1.bf16.msra.mxu0 0
  %94 = vmatprep.subr.bf16.mxu0 0
  %95 = vmatpush1.bf16.msra.mxu0 0
  %96 = vmatprep.subr.bf16.mxu0 0
  %97 = vmatpush1.bf16.msra.mxu0 0
  %98 = vmatprep.subr.bf16.mxu0 0
  %99 = vmatpush1.bf16.msra.mxu0 0
  %100 = vmatprep.subr.bf16.mxu0 0
  %101 = vmatpush1.bf16.msra.mxu0 0
  %102 = vmatprep.subr.bf16.mxu0 0
  %103 = vmatpush1.bf16.msra.mxu0 0
  %104 = vmatprep.subr.bf16.mxu0 0
  %105 = vmatpush1.bf16.msra.mxu0 0
  %106 = vmatprep.subr.bf16.mxu0 0
  %107 = vmatpush1.bf16.msra.mxu0 0
  %108 = vmatprep.subr.bf16.mxu0 0
  %109 = vmatpush1.bf16.msra.mxu0 0
  %110 = vmatprep.subr.bf16.mxu0 0
  %111 = vmatpush1.bf16.msra.mxu0 0
  %112 = vmatprep.subr.bf16.mxu0 0
  %113 = vmatpush1.bf16.msra.mxu0 0
  %114 = vmatprep.mubr.bf16.mxu0 0
  %115 = vmatmul.mubr.bf16.gmra.mrb[0].mxu0 %v80
  %v116 = vpop.f32.mrb[0].mxu0
  %v117 = vadd.f32 %v65, %v116
  %v118 = vpop.f32.mrb[0].mxu0
  %v119 = vpop.f32.mrb[0].mxu0
  %v120 = vadd.f32 %v65, %v119
  %v121 = vpop.f32.mrb[0].mxu0
  %122 = vdwg.mxu0
  %v123 = vlaneseq
  %v124 = vand.u32 %v123, 127
  %v125 = vld [vmem:[%s2] sm:$0xff]
  %v126 = vld [vmem:[%s2 + $0x8] sm:$0xff]
  %v127 = vld [vmem:[%s2 + $0x10] sm:$0xff]
  %v128 = vld [vmem:[%s2 + $0x18] sm:$0xff]
  %v129 = vld [vmem:[%s2 + $0x20] sm:$0xff]
  %v130 = vld [vmem:[%s2 + $0x28] sm:$0xff]
  %v131 = vld [vmem:[%s2 + $0x30] sm:$0xff]
  %v132 = vld [vmem:[%s2 + $0x38] sm:$0xff]
  %v133 = vld [vmem:[%s2 + $0x40] sm:$0xff]
  %v134 = vld [vmem:[%s2 + $0x48] sm:$0xff]
  %v135 = vld [vmem:[%s2 + $0x50] sm:$0xff]
  %v136 = vld [vmem:[%s2 + $0x58] sm:$0xff]
  %v137 = vld [vmem:[%s2 + $0x60] sm:$0xff]
  %v138 = vld [vmem:[%s2 + $0x68] sm:$0xff]
  %v139 = vld [vmem:[%s2 + $0x70] sm:$0xff]
  %v140 = vld [vmem:[%s2 + $0x78] sm:$0xff]
  %141 = vset.pattern.permute.xlu0 0
  %142 = vperm.xlu0 %141, %v125
  %v143 = vpop.permute.xlu0 %142
  %144 = vset.pattern.permute.xlu0 0
  %145 = vperm.xlu0 %144, %v126
  %v146 = vpop.permute.xlu0 %145
  %147 = vset.pattern.permute.xlu0 0
  %148 = vperm.xlu0 %147, %v127
  %v149 = vpop.permute.xlu0 %148
  %150 = vset.pattern.permute.xlu0 0
  %151 = vperm.xlu0 %150, %v128
  %v152 = vpop.permute.xlu0 %151
  %153 = vset.pattern.permute.xlu0 0
  %154 = vperm.xlu0 %153, %v129
  %v155 = vpop.permute.xlu0 %154
  %156 = vset.pattern.permute.xlu0 0
  %157 = vperm.xlu0 %156, %v130
  %v158 = vpop.permute.xlu0 %157
  %159 = vset.pattern.permute.xlu0 0
  %160 = vperm.xlu0 %159, %v131
  %v161 = vpop.permute.xlu0 %160
  %162 = vset.pattern.permute.xlu0 0
  %163 = vperm.xlu0 %162, %v132
  %v164 = vpop.permute.xlu0 %163
  %165 = vset.pattern.permute.xlu0 0
  %166 = vperm.xlu0 %165, %v133
  %v167 = vpop.permute.xlu0 %166
  %168 = vset.pattern.permute.xlu0 0
  %169 = vperm.xlu0 %168, %v134
  %v170 = vpop.permute.xlu0 %169
  %171 = vset.pattern.permute.xlu0 0
  %172 = vperm.xlu0 %171, %v135
  %v173 = vpop.permute.xlu0 %172
  %174 = vset.pattern.permute.xlu0 0
  %175 = vperm.xlu0 %174, %v136
  %v176 = vpop.permute.xlu0 %175
  %177 = vset.pattern.permute.xlu0 0
  %178 = vperm.xlu0 %177, %v137
  %v179 = vpop.permute.xlu0 %178
  %180 = vset.pattern.permute.xlu0 0
  %181 = vperm.xlu0 %180, %v138
  %v182 = vpop.permute.xlu0 %181
  %183 = vset.pattern.permute.xlu0 0
  %184 = vperm.xlu0 %183, %v139
  %v185 = vpop.permute.xlu0 %184
  %186 = vset.pattern.permute.xlu0 0
  %187 = vperm.xlu0 %186, %v140
  %v188 = vpop.permute.xlu0 %187
  %vm189 = vcmp.eq.s32.totalorder %v143, %v124
  %vm190 = vcmp.eq.s32.totalorder %v146, %v124
  %vm191 = vcmp.eq.s32.totalorder %v149, %v124
  %vm192 = vcmp.eq.s32.totalorder %v152, %v124
  %vm193 = vcmp.eq.s32.totalorder %v155, %v124
  %vm194 = vcmp.eq.s32.totalorder %v158, %v124
  %vm195 = vcmp.eq.s32.totalorder %v161, %v124
  %vm196 = vcmp.eq.s32.totalorder %v164, %v124
  %vm197 = vcmp.eq.s32.totalorder %v167, %v124
  %vm198 = vcmp.eq.s32.totalorder %v170, %v124
  %vm199 = vcmp.eq.s32.totalorder %v173, %v124
  %vm200 = vcmp.eq.s32.totalorder %v176, %v124
  %vm201 = vcmp.eq.s32.totalorder %v179, %v124
  %vm202 = vcmp.eq.s32.totalorder %v182, %v124
  %vm203 = vcmp.eq.s32.totalorder %v185, %v124
  %vm204 = vcmp.eq.s32.totalorder %v188, %v124
  %v205 = vsel %vm189, 1.0, 0.0
  %v206 = vsel %vm190, 1.0, 0.0
  %v207 = vsel %vm191, 1.0, 0.0
  %v208 = vsel %vm192, 1.0, 0.0
  %v209 = vsel %vm193, 1.0, 0.0
  %v210 = vsel %vm194, 1.0, 0.0
  %v211 = vsel %vm195, 1.0, 0.0
  %v212 = vsel %vm196, 1.0, 0.0
  %v213 = vsel %vm197, 1.0, 0.0
  %v214 = vsel %vm198, 1.0, 0.0
  %v215 = vsel %vm199, 1.0, 0.0
  %v216 = vsel %vm200, 1.0, 0.0
  %v217 = vsel %vm201, 1.0, 0.0
  %v218 = vsel %vm202, 1.0, 0.0
  %v219 = vsel %vm203, 1.0, 0.0
  %v220 = vsel %vm204, 1.0, 0.0
  %v221 = vpack.c.bf16 %v206, %v205
  %v222 = vpack.c.bf16 %v208, %v207
  %v223 = vpack.c.bf16 %v210, %v209
  %v224 = vpack.c.bf16 %v212, %v211
  %v225 = vpack.c.bf16 %v214, %v213
  %v226 = vpack.c.bf16 %v216, %v215
  %v227 = vpack.c.bf16 %v218, %v217
  %v228 = vpack.c.bf16 %v220, %v219
  %v229 = vld [vmem:[%s1] sm:$0xf]
  %v230 = vld [vmem:[%s1 + $0x4] sm:$0xf]
  %v231 = vld [vmem:[%s1 + $0x8] sm:$0xf]
  %v232 = vld [vmem:[%s1 + $0xc] sm:$0xf]
  %v233 = vld [vmem:[%s1 + $0x10] sm:$0xf]
  %v234 = vld [vmem:[%s1 + $0x14] sm:$0xf]
  %v235 = vld [vmem:[%s1 + $0x18] sm:$0xf]
  %v236 = vld [vmem:[%s1 + $0x1c] sm:$0xf]
  %v237 = vld [vmem:[%s1 + $0x20] sm:$0xf]
  %v238 = vld [vmem:[%s1 + $0x24] sm:$0xf]
  %v239 = vld [vmem:[%s1 + $0x28] sm:$0xf]
  %v240 = vld [vmem:[%s1 + $0x2c] sm:$0xf]
  %v241 = vld [vmem:[%s1 + $0x30] sm:$0xf]
  %v242 = vld [vmem:[%s1 + $0x34] sm:$0xf]
  %v243 = vld [vmem:[%s1 + $0x38] sm:$0xf]
  %v244 = vld [vmem:[%s1 + $0x3c] sm:$0xf]
  %v245 = vpack.c.bf16 %v120, %v117
  %v246 = vld [vmem:[%s7] sm:$0xff]
  %v247 = vld [vmem:[%s7 + $0x8] sm:$0xff]
  %v248 = vld [vmem:[%s7 + $0x10] sm:$0xff]
  %v249 = vld [vmem:[%s7 + $0x18] sm:$0xff]
  %v250 = vld [vmem:[%s7 + $0x20] sm:$0xff]
  %v251 = vld [vmem:[%s7 + $0x28] sm:$0xff]
  %v252 = vld [vmem:[%s7 + $0x30] sm:$0xff]
  %v253 = vld [vmem:[%s7 + $0x38] sm:$0xff]
  %v262 = vunpack.c.l.b16 %v246
  %v263 = vunpack.c.h.b16 %v246
  %v264 = vunpack.c.l.b16 %v247
  %v265 = vunpack.c.h.b16 %v247
  %v266 = vunpack.c.l.b16 %v248
  %v267 = vunpack.c.h.b16 %v248
  %v268 = vunpack.c.l.b16 %v249
  %v269 = vunpack.c.h.b16 %v249
  %v270 = vunpack.c.l.b16 %v250
  %v271 = vunpack.c.h.b16 %v250
  %v272 = vunpack.c.l.b16 %v251
  %v273 = vunpack.c.h.b16 %v251
  %v274 = vunpack.c.l.b16 %v252
  %v275 = vunpack.c.h.b16 %v252
  %v276 = vunpack.c.l.b16 %v253
  %v277 = vunpack.c.h.b16 %v253
  %v278 = vpack.c.b16 %v264, %v262
  %v279 = vpack.c.b16 %v265, %v263
  %v280 = vpack.c.b16 %v268, %v266
  %v281 = vpack.c.b16 %v269, %v267
  %v282 = vpack.c.b16 %v272, %v270
  %v283 = vpack.c.b16 %v273, %v271
  %v284 = vpack.c.b16 %v276, %v274
  %v285 = vpack.c.b16 %v277, %v275
  %vm294 = vcmask 523264
  %v296 = vsel %vm294, %v245, 0
  %298 = vmatprep.subr.bf16.mxu0 %v279
  %299 = vmatpush1.bf16.msra.mxu0 %v278
  %300 = vmatprep.subr.bf16.mxu0 %v281
  %301 = vmatpush1.bf16.msra.mxu0 %v280
  %302 = vmatprep.subr.bf16.mxu0 %v283
  %303 = vmatpush1.bf16.msra.mxu0 %v282
  %304 = vmatprep.subr.bf16.mxu0 %v285
  %305 = vmatpush1.bf16.msra.mxu0 %v284
  %306 = vmatprep.subr.bf16.mxu0 0
  %307 = vmatpush1.bf16.msra.mxu0 0
  %308 = vmatprep.subr.bf16.mxu0 0
  %309 = vmatpush1.bf16.msra.mxu0 0
  %310 = vmatprep.subr.bf16.mxu0 0
  %311 = vmatpush1.bf16.msra.mxu0 0
  %312 = vmatprep.subr.bf16.mxu0 0
  %313 = vmatpush1.bf16.msra.mxu0 0
  %314 = vmatprep.subr.bf16.mxu0 0
  %315 = vmatpush1.bf16.msra.mxu0 0
  %316 = vmatprep.subr.bf16.mxu0 0
  %317 = vmatpush1.bf16.msra.mxu0 0
  %318 = vmatprep.subr.bf16.mxu0 0
  %319 = vmatpush1.bf16.msra.mxu0 0
  %320 = vmatprep.subr.bf16.mxu0 0
  %321 = vmatpush1.bf16.msra.mxu0 0
  %322 = vmatprep.subr.bf16.mxu0 0
  %323 = vmatpush1.bf16.msra.mxu0 0
  %324 = vmatprep.subr.bf16.mxu0 0
  %325 = vmatpush1.bf16.msra.mxu0 0
  %326 = vmatprep.subr.bf16.mxu0 0
  %327 = vmatpush1.bf16.msra.mxu0 0
  %328 = vmatprep.subr.bf16.mxu0 0
  %329 = vmatpush1.bf16.msra.mxu0 0
  %330 = vmatprep.mubr.bf16.mxu0 0
  %331 = vmatmul.mubr.bf16.gmra.mrb[0].mxu0 %v296
  %v332 = vpop.f32.mrb[0].mxu0
  %v333 = vadd.f32 0.0, %v332
  %v334 = vpop.f32.mrb[0].mxu0
  %v335 = vadd.f32 0.0, %v334
  %v336 = vpop.f32.mrb[0].mxu0
  %v337 = vadd.f32 0.0, %v336
  %v338 = vpop.f32.mrb[0].mxu0
  %v339 = vadd.f32 0.0, %v338
  %340 = vdwg.mxu0
  %v341 = vld [vmem:[%s9] sm:$0x1]
  %v343 = vlaneseq
  %v344 = vshrl.u32 %v343, 7
  %v345 = vsub.s32 0, %v344
  %v346 = vrot.slane %v341, %v345
  %v348 = vadd.f32 %v333, %v346
  %v349 = vadd.f32 %v337, %v346
  %v350 = vld [vmem:[%s8] sm:$0xf]
  %v351 = vld [vmem:[%s8 + $0x4] sm:$0xf]
  %v352 = vld [vmem:[%s8 + $0x8] sm:$0xf]
  %v353 = vld [vmem:[%s8 + $0xc] sm:$0xf]
  %v370 = vunpack.c.l.b16 %v229
  %v371 = vunpack.c.l.b16 %v230
  %v372 = vunpack.c.l.b16 %v231
  %v373 = vunpack.c.l.b16 %v232
  %v374 = vunpack.c.l.b16 %v233
  %v375 = vunpack.c.l.b16 %v234
  %v376 = vunpack.c.l.b16 %v235
  %v377 = vunpack.c.l.b16 %v236
  %v378 = vunpack.c.l.b16 %v237
  %v379 = vunpack.c.l.b16 %v238
  %v380 = vunpack.c.l.b16 %v239
  %v381 = vunpack.c.l.b16 %v240
  %v382 = vunpack.c.l.b16 %v241
  %v383 = vunpack.c.l.b16 %v242
  %v384 = vunpack.c.l.b16 %v243
  %v385 = vunpack.c.l.b16 %v244
  %v386 = vpack.c.b16 %v371, %v370
  %v387 = vpack.c.b16 %v373, %v372
  %v388 = vpack.c.b16 %v375, %v374
  %v389 = vpack.c.b16 %v377, %v376
  %v390 = vpack.c.b16 %v379, %v378
  %v391 = vpack.c.b16 %v381, %v380
  %v392 = vpack.c.b16 %v383, %v382
  %v393 = vpack.c.b16 %v385, %v384
  %v398 = vunpack.c.l.b16 %v350
  %v399 = vunpack.c.l.b16 %v351
  %v400 = vunpack.c.l.b16 %v352
  %v401 = vunpack.c.l.b16 %v353
  %v402 = vpack.c.b16 %v399, %v398
  %v403 = vpack.c.b16 %v401, %v400
  %vm406 = vcmask 261120
  %v408 = vsel %vm406, %v386, 0
  %v411 = vsel %vm406, %v387, 0
  %v414 = vsel %vm406, %v388, 0
  %v417 = vsel %vm406, %v389, 0
  %v420 = vsel %vm406, %v390, 0
  %v423 = vsel %vm406, %v391, 0
  %v426 = vsel %vm406, %v392, 0
  %v429 = vsel %vm406, %v393, 0
  %431 = vmatprep.subr.bf16.mxu0 0
  %432 = vmatpush1.bf16.msra.mxu0 %v402
  %433 = vmatprep.subr.bf16.mxu0 0
  %434 = vmatpush1.bf16.msra.mxu0 %v403
  %435 = vmatprep.subr.bf16.mxu0 0
  %436 = vmatpush1.bf16.msra.mxu0 0
  %437 = vmatprep.subr.bf16.mxu0 0
  %438 = vmatpush1.bf16.msra.mxu0 0
  %439 = vmatprep.subr.bf16.mxu0 0
  %440 = vmatpush1.bf16.msra.mxu0 0
  %441 = vmatprep.subr.bf16.mxu0 0
  %442 = vmatpush1.bf16.msra.mxu0 0
  %443 = vmatprep.subr.bf16.mxu0 0
  %444 = vmatpush1.bf16.msra.mxu0 0
  %445 = vmatprep.subr.bf16.mxu0 0
  %446 = vmatpush1.bf16.msra.mxu0 0
  %447 = vmatprep.subr.bf16.mxu0 0
  %448 = vmatpush1.bf16.msra.mxu0 0
  %449 = vmatprep.subr.bf16.mxu0 0
  %450 = vmatpush1.bf16.msra.mxu0 0
  %451 = vmatprep.subr.bf16.mxu0 0
  %452 = vmatpush1.bf16.msra.mxu0 0
  %453 = vmatprep.subr.bf16.mxu0 0
  %454 = vmatpush1.bf16.msra.mxu0 0
  %455 = vmatprep.subr.bf16.mxu0 0
  %456 = vmatpush1.bf16.msra.mxu0 0
  %457 = vmatprep.subr.bf16.mxu0 0
  %458 = vmatpush1.bf16.msra.mxu0 0
  %459 = vmatprep.subr.bf16.mxu0 0
  %460 = vmatpush1.bf16.msra.mxu0 0
  %461 = vmatprep.subr.bf16.mxu0 0
  %462 = vmatpush1.bf16.msra.mxu0 0
  %463 = vmatprep.mubr.bf16.mxu0 0
  %464 = vmatmul.mubr.bf16.gmra.mrb[0].mxu0 %v408
  %v465 = vpop.f32.mrb[0].mxu0
  %v466 = vadd.f32 0.0, %v465
  %v467 = vpop.f32.mrb[0].mxu0
  %v468 = vpop.f32.mrb[0].mxu0
  %v469 = vadd.f32 0.0, %v468
  %v470 = vpop.f32.mrb[0].mxu0
  %471 = vmatprep.mubr.bf16.mxu0 0
  %472 = vmatmul.mubr.bf16.gmra.mrb[0].mxu0 %v411
  %v473 = vpop.f32.mrb[0].mxu0
  %v474 = vadd.f32 0.0, %v473
  %v475 = vpop.f32.mrb[0].mxu0
  %v476 = vpop.f32.mrb[0].mxu0
  %v477 = vadd.f32 0.0, %v476
  %v478 = vpop.f32.mrb[0].mxu0
  %479 = vmatprep.mubr.bf16.mxu0 0
  %480 = vmatmul.mubr.bf16.gmra.mrb[0].mxu0 %v414
  %v481 = vpop.f32.mrb[0].mxu0
  %v482 = vadd.f32 0.0, %v481
  %v483 = vpop.f32.mrb[0].mxu0
  %v484 = vpop.f32.mrb[0].mxu0
  %v485 = vadd.f32 0.0, %v484
  %v486 = vpop.f32.mrb[0].mxu0
  %487 = vmatprep.mubr.bf16.mxu0 0
  %488 = vmatmul.mubr.bf16.gmra.mrb[0].mxu0 %v417
  %v489 = vpop.f32.mrb[0].mxu0
  %v490 = vadd.f32 0.0, %v489
  %v491 = vpop.f32.mrb[0].mxu0
  %v492 = vpop.f32.mrb[0].mxu0
  %v493 = vadd.f32 0.0, %v492
  %v494 = vpop.f32.mrb[0].mxu0
  %495 = vmatprep.mubr.bf16.mxu0 0
  %496 = vmatmul.mubr.bf16.gmra.mrb[0].mxu0 %v420
  %v497 = vpop.f32.mrb[0].mxu0
  %v498 = vadd.f32 0.0, %v497
  %v499 = vpop.f32.mrb[0].mxu0
  %v500 = vpop.f32.mrb[0].mxu0
  %v501 = vadd.f32 0.0, %v500
  %v502 = vpop.f32.mrb[0].mxu0
  %503 = vmatprep.mubr.bf16.mxu0 0
  %504 = vmatmul.mubr.bf16.gmra.mrb[0].mxu0 %v423
  %v505 = vpop.f32.mrb[0].mxu0
  %v506 = vadd.f32 0.0, %v505
  %v507 = vpop.f32.mrb[0].mxu0
  %v508 = vpop.f32.mrb[0].mxu0
  %v509 = vadd.f32 0.0, %v508
  %v510 = vpop.f32.mrb[0].mxu0
  %511 = vmatprep.mubr.bf16.mxu0 0
  %512 = vmatmul.mubr.bf16.gmra.mrb[0].mxu0 %v426
  %v513 = vpop.f32.mrb[0].mxu0
  %v514 = vadd.f32 0.0, %v513
  %v515 = vpop.f32.mrb[0].mxu0
  %v516 = vpop.f32.mrb[0].mxu0
  %v517 = vadd.f32 0.0, %v516
  %v518 = vpop.f32.mrb[0].mxu0
  %519 = vmatprep.mubr.bf16.mxu0 0
  %520 = vmatmul.mubr.bf16.gmra.mrb[0].mxu0 %v429
  %v521 = vpop.f32.mrb[0].mxu0
  %v522 = vadd.f32 0.0, %v521
  %v523 = vpop.f32.mrb[0].mxu0
  %v524 = vpop.f32.mrb[0].mxu0
  %v525 = vadd.f32 0.0, %v524
  %v526 = vpop.f32.mrb[0].mxu0
  %527 = vdwg.mxu0
  %v528 = vpack.c.bf16 %v339, %v335
  %v530 = vsel %vm78, %v221, 0
  %v533 = vsel %vm78, %v222, 0
  %v536 = vsel %vm78, %v223, 0
  %v539 = vsel %vm78, %v224, 0
  %v542 = vsel %vm78, %v225, 0
  %v545 = vsel %vm78, %v226, 0
  %v548 = vsel %vm78, %v227, 0
  %v551 = vsel %vm78, %v228, 0
  %553 = vmatprep.subr.bf16.mxu0 0
  %554 = vmatpush1.bf16.msra.mxu0 %v528
  %555 = vmatprep.subr.bf16.mxu0 0
  %556 = vmatpush1.bf16.msra.mxu0 0
  %557 = vmatprep.subr.bf16.mxu0 0
  %558 = vmatpush1.bf16.msra.mxu0 0
  %559 = vmatprep.subr.bf16.mxu0 0
  %560 = vmatpush1.bf16.msra.mxu0 0
  %561 = vmatprep.subr.bf16.mxu0 0
  %562 = vmatpush1.bf16.msra.mxu0 0
  %563 = vmatprep.subr.bf16.mxu0 0
  %564 = vmatpush1.bf16.msra.mxu0 0
  %565 = vmatprep.subr.bf16.mxu0 0
  %566 = vmatpush1.bf16.msra.mxu0 0
  %567 = vmatprep.subr.bf16.mxu0 0
  %568 = vmatpush1.bf16.msra.mxu0 0
  %569 = vmatprep.subr.bf16.mxu0 0
  %570 = vmatpush1.bf16.msra.mxu0 0
  %571 = vmatprep.subr.bf16.mxu0 0
  %572 = vmatpush1.bf16.msra.mxu0 0
  %573 = vmatprep.subr.bf16.mxu0 0
  %574 = vmatpush1.bf16.msra.mxu0 0
  %575 = vmatprep.subr.bf16.mxu0 0
  %576 = vmatpush1.bf16.msra.mxu0 0
  %577 = vmatprep.subr.bf16.mxu0 0
  %578 = vmatpush1.bf16.msra.mxu0 0
  %579 = vmatprep.subr.bf16.mxu0 0
  %580 = vmatpush1.bf16.msra.mxu0 0
  %581 = vmatprep.subr.bf16.mxu0 0
  %582 = vmatpush1.bf16.msra.mxu0 0
  %583 = vmatprep.subr.bf16.mxu0 0
  %584 = vmatpush1.bf16.msra.mxu0 0
  %585 = vmatprep.mubr.bf16.mxu0 0
  %586 = vmatmul.mubr.bf16.gmra.mrb[0].mxu0 %v530
  %v587 = vpop.f32.mrb[0].mxu0
  %v588 = vadd.f32 %v466, %v587
  %v589 = vpop.f32.mrb[0].mxu0
  %v590 = vpop.f32.mrb[0].mxu0
  %v591 = vadd.f32 %v469, %v590
  %v592 = vpop.f32.mrb[0].mxu0
  %593 = vmatprep.mubr.bf16.mxu0 0
  %594 = vmatmul.mubr.bf16.gmra.mrb[0].mxu0 %v533
  %v595 = vpop.f32.mrb[0].mxu0
  %v596 = vadd.f32 %v474, %v595
  %v597 = vpop.f32.mrb[0].mxu0
  %v598 = vpop.f32.mrb[0].mxu0
  %v599 = vadd.f32 %v477, %v598
  %v600 = vpop.f32.mrb[0].mxu0
  %601 = vmatprep.mubr.bf16.mxu0 0
  %602 = vmatmul.mubr.bf16.gmra.mrb[0].mxu0 %v536
  %v603 = vpop.f32.mrb[0].mxu0
  %v604 = vadd.f32 %v482, %v603
  %v605 = vpop.f32.mrb[0].mxu0
  %v606 = vpop.f32.mrb[0].mxu0
  %v607 = vadd.f32 %v485, %v606
  %v608 = vpop.f32.mrb[0].mxu0
  %609 = vmatprep.mubr.bf16.mxu0 0
  %610 = vmatmul.mubr.bf16.gmra.mrb[0].mxu0 %v539
  %v611 = vpop.f32.mrb[0].mxu0
  %v612 = vadd.f32 %v490, %v611
  %v613 = vpop.f32.mrb[0].mxu0
  %v614 = vpop.f32.mrb[0].mxu0
  %v615 = vadd.f32 %v493, %v614
  %v616 = vpop.f32.mrb[0].mxu0
  %617 = vmatprep.mubr.bf16.mxu0 0
  %618 = vmatmul.mubr.bf16.gmra.mrb[0].mxu0 %v542
  %v619 = vpop.f32.mrb[0].mxu0
  %v620 = vadd.f32 %v498, %v619
  %v621 = vpop.f32.mrb[0].mxu0
  %v622 = vpop.f32.mrb[0].mxu0
  %v623 = vadd.f32 %v501, %v622
  %v624 = vpop.f32.mrb[0].mxu0
  %625 = vmatprep.mubr.bf16.mxu0 0
  %626 = vmatmul.mubr.bf16.gmra.mrb[0].mxu0 %v545
  %v627 = vpop.f32.mrb[0].mxu0
  %v628 = vadd.f32 %v506, %v627
  %v629 = vpop.f32.mrb[0].mxu0
  %v630 = vpop.f32.mrb[0].mxu0
  %v631 = vadd.f32 %v509, %v630
  %v632 = vpop.f32.mrb[0].mxu0
  %633 = vmatprep.mubr.bf16.mxu0 0
  %634 = vmatmul.mubr.bf16.gmra.mrb[0].mxu0 %v548
  %v635 = vpop.f32.mrb[0].mxu0
  %v636 = vadd.f32 %v514, %v635
  %v637 = vpop.f32.mrb[0].mxu0
  %v638 = vpop.f32.mrb[0].mxu0
  %v639 = vadd.f32 %v517, %v638
  %v640 = vpop.f32.mrb[0].mxu0
  %641 = vmatprep.mubr.bf16.mxu0 0
  %642 = vmatmul.mubr.bf16.gmra.mrb[0].mxu0 %v551
  %v643 = vpop.f32.mrb[0].mxu0
  %v644 = vadd.f32 %v522, %v643
  %v645 = vpop.f32.mrb[0].mxu0
  %v646 = vpop.f32.mrb[0].mxu0
  %v647 = vadd.f32 %v525, %v646
  %v648 = vpop.f32.mrb[0].mxu0
  %649 = vdwg.mxu0
  %v650 = vadd.f32 %v588, %v348
  %v651 = vadd.f32 %v591, %v349
  %v652 = vadd.f32 %v596, %v348
  %v653 = vadd.f32 %v599, %v349
  %v654 = vadd.f32 %v604, %v348
  %v655 = vadd.f32 %v607, %v349
  %v656 = vadd.f32 %v612, %v348
  %v657 = vadd.f32 %v615, %v349
  %v658 = vadd.f32 %v620, %v348
  %v659 = vadd.f32 %v623, %v349
  %v660 = vadd.f32 %v628, %v348
  %v661 = vadd.f32 %v631, %v349
  %v662 = vadd.f32 %v636, %v348
  %v663 = vadd.f32 %v639, %v349
  %v664 = vadd.f32 %v644, %v348
  %v665 = vadd.f32 %v647, %v349
  %v666 = vsub.f32 0.0, %v650
  %v667 = vsub.f32 0.0, %v651
  %v668 = vsub.f32 0.0, %v652
  %v669 = vsub.f32 0.0, %v653
  %v670 = vsub.f32 0.0, %v654
  %v671 = vsub.f32 0.0, %v655
  %v672 = vsub.f32 0.0, %v656
  %v673 = vsub.f32 0.0, %v657
  %v674 = vsub.f32 0.0, %v658
  %v675 = vsub.f32 0.0, %v659
  %v676 = vsub.f32 0.0, %v660
  %v677 = vsub.f32 0.0, %v661
  %v678 = vsub.f32 0.0, %v662
  %v679 = vsub.f32 0.0, %v663
  %v680 = vsub.f32 0.0, %v664
  %v681 = vsub.f32 0.0, %v665
  %v682 = vmul.f32 %v666, 1.442695
  %v683 = vpow.pop %v682
  %v684 = vmul.f32 %v667, 1.442695
  %v685 = vpow.pop %v684
  %v686 = vmul.f32 %v668, 1.442695
  %v687 = vpow.pop %v686
  %v688 = vmul.f32 %v669, 1.442695
  %v689 = vpow.pop %v688
  %v690 = vmul.f32 %v670, 1.442695
  %v691 = vpow.pop %v690
  %v692 = vmul.f32 %v671, 1.442695
  %v693 = vpow.pop %v692
  %v694 = vmul.f32 %v672, 1.442695
  %v695 = vpow.pop %v694
  %v696 = vmul.f32 %v673, 1.442695
  %v697 = vpow.pop %v696
  %v698 = vmul.f32 %v674, 1.442695
  %v699 = vpow.pop %v698
  %v700 = vmul.f32 %v675, 1.442695
  %v701 = vpow.pop %v700
  %v702 = vmul.f32 %v676, 1.442695
  %v703 = vpow.pop %v702
  %v704 = vmul.f32 %v677, 1.442695
  %v705 = vpow.pop %v704
  %v706 = vmul.f32 %v678, 1.442695
  %v707 = vpow.pop %v706
  %v708 = vmul.f32 %v679, 1.442695
  %v709 = vpow.pop %v708
  %v710 = vmul.f32 %v680, 1.442695
  %v711 = vpow.pop %v710
  %v712 = vmul.f32 %v681, 1.442695
  %v713 = vpow.pop %v712
  %v714 = vadd.f32 %v683, 1.0
  %v715 = vadd.f32 %v685, 1.0
  %v716 = vadd.f32 %v687, 1.0
  %v717 = vadd.f32 %v689, 1.0
  %v718 = vadd.f32 %v691, 1.0
  %v719 = vadd.f32 %v693, 1.0
  %v720 = vadd.f32 %v695, 1.0
  %v721 = vadd.f32 %v697, 1.0
  %v722 = vadd.f32 %v699, 1.0
  %v723 = vadd.f32 %v701, 1.0
  %v724 = vadd.f32 %v703, 1.0
  %v725 = vadd.f32 %v705, 1.0
  %v726 = vadd.f32 %v707, 1.0
  %v727 = vadd.f32 %v709, 1.0
  %v728 = vadd.f32 %v711, 1.0
  %v729 = vadd.f32 %v713, 1.0
  %v730 = vrcp.pop %v714
  %v731 = vrcp.pop %v715
  %v732 = vrcp.pop %v716
  %v733 = vrcp.pop %v717
  %v734 = vrcp.pop %v718
  %v735 = vrcp.pop %v719
  %v736 = vrcp.pop %v720
  %v737 = vrcp.pop %v721
  %v738 = vrcp.pop %v722
  %v739 = vrcp.pop %v723
  %v740 = vrcp.pop %v724
  %v741 = vrcp.pop %v725
  %v742 = vrcp.pop %v726
  %v743 = vrcp.pop %v727
  %v744 = vrcp.pop %v728
  %v745 = vrcp.pop %v729
  %vm746 = vcmp.gt.f32.partialorder %v650, 20.0
  %vm747 = vcmp.gt.f32.partialorder %v651, 20.0
  %vm748 = vcmp.gt.f32.partialorder %v652, 20.0
  %vm749 = vcmp.gt.f32.partialorder %v653, 20.0
  %vm750 = vcmp.gt.f32.partialorder %v654, 20.0
  %vm751 = vcmp.gt.f32.partialorder %v655, 20.0
  %vm752 = vcmp.gt.f32.partialorder %v656, 20.0
  %vm753 = vcmp.gt.f32.partialorder %v657, 20.0
  %vm754 = vcmp.gt.f32.partialorder %v658, 20.0
  %vm755 = vcmp.gt.f32.partialorder %v659, 20.0
  %vm756 = vcmp.gt.f32.partialorder %v660, 20.0
  %vm757 = vcmp.gt.f32.partialorder %v661, 20.0
  %vm758 = vcmp.gt.f32.partialorder %v662, 20.0
  %vm759 = vcmp.gt.f32.partialorder %v663, 20.0
  %vm760 = vcmp.gt.f32.partialorder %v664, 20.0
  %vm761 = vcmp.gt.f32.partialorder %v665, 20.0
  %v762 = vmin.f32 %v650, 20.0
  %v763 = vmin.f32 %v651, 20.0
  %v764 = vmin.f32 %v652, 20.0
  %v765 = vmin.f32 %v653, 20.0
  %v766 = vmin.f32 %v654, 20.0
  %v767 = vmin.f32 %v655, 20.0
  %v768 = vmin.f32 %v656, 20.0
  %v769 = vmin.f32 %v657, 20.0
  %v770 = vmin.f32 %v658, 20.0
  %v771 = vmin.f32 %v659, 20.0
  %v772 = vmin.f32 %v660, 20.0
  %v773 = vmin.f32 %v661, 20.0
  %v774 = vmin.f32 %v662, 20.0
  %v775 = vmin.f32 %v663, 20.0
  %v776 = vmin.f32 %v664, 20.0
  %v777 = vmin.f32 %v665, 20.0
  %v778 = vmul.f32 %v762, 1.442695
  %v779 = vpow.pop %v778
  %v780 = vmul.f32 %v763, 1.442695
  %v781 = vpow.pop %v780
  %v782 = vmul.f32 %v764, 1.442695
  %v783 = vpow.pop %v782
  %v784 = vmul.f32 %v765, 1.442695
  %v785 = vpow.pop %v784
  %v786 = vmul.f32 %v766, 1.442695
  %v787 = vpow.pop %v786
  %v788 = vmul.f32 %v767, 1.442695
  %v789 = vpow.pop %v788
  %v790 = vmul.f32 %v768, 1.442695
  %v791 = vpow.pop %v790
  %v792 = vmul.f32 %v769, 1.442695
  %v793 = vpow.pop %v792
  %v794 = vmul.f32 %v770, 1.442695
  %v795 = vpow.pop %v794
  %v796 = vmul.f32 %v771, 1.442695
  %v797 = vpow.pop %v796
  %v798 = vmul.f32 %v772, 1.442695
  %v799 = vpow.pop %v798
  %v800 = vmul.f32 %v773, 1.442695
  %v801 = vpow.pop %v800
  %v802 = vmul.f32 %v774, 1.442695
  %v803 = vpow.pop %v802
  %v804 = vmul.f32 %v775, 1.442695
  %v805 = vpow.pop %v804
  %v806 = vmul.f32 %v776, 1.442695
  %v807 = vpow.pop %v806
  %v808 = vmul.f32 %v777, 1.442695
  %v809 = vpow.pop %v808
  %v810 = vadd.f32 %v779, 1.0
  %v811 = vlog2.pop %v810
  %v812 = vmul.f32 %v811, 0.6931472
  %v813 = vmul.f32 -0.5, %v779
  %v814 = vadd.f32 %v813, 1.0
  %v815 = vmul.f32 %v814, %v779
  %v816 = vand.u32 2147483647, %v779
  %vm817 = vcmp.lt.f32.partialorder %v816, 0.0004427343
  %v818 = vsel %vm817, %v815, %v812
  %v819 = vadd.f32 %v781, 1.0
  %v820 = vlog2.pop %v819
  %v821 = vmul.f32 %v820, 0.6931472
  %v822 = vmul.f32 -0.5, %v781
  %v823 = vadd.f32 %v822, 1.0
  %v824 = vmul.f32 %v823, %v781
  %v825 = vand.u32 2147483647, %v781
  %vm826 = vcmp.lt.f32.partialorder %v825, 0.0004427343
  %v827 = vsel %vm826, %v824, %v821
  %v828 = vadd.f32 %v783, 1.0
  %v829 = vlog2.pop %v828
  %v830 = vmul.f32 %v829, 0.6931472
  %v831 = vmul.f32 -0.5, %v783
  %v832 = vadd.f32 %v831, 1.0
  %v833 = vmul.f32 %v832, %v783
  %v834 = vand.u32 2147483647, %v783
  %vm835 = vcmp.lt.f32.partialorder %v834, 0.0004427343
  %v836 = vsel %vm835, %v833, %v830
  %v837 = vadd.f32 %v785, 1.0
  %v838 = vlog2.pop %v837
  %v839 = vmul.f32 %v838, 0.6931472
  %v840 = vmul.f32 -0.5, %v785
  %v841 = vadd.f32 %v840, 1.0
  %v842 = vmul.f32 %v841, %v785
  %v843 = vand.u32 2147483647, %v785
  %vm844 = vcmp.lt.f32.partialorder %v843, 0.0004427343
  %v845 = vsel %vm844, %v842, %v839
  %v846 = vadd.f32 %v787, 1.0
  %v847 = vlog2.pop %v846
  %v848 = vmul.f32 %v847, 0.6931472
  %v849 = vmul.f32 -0.5, %v787
  %v850 = vadd.f32 %v849, 1.0
  %v851 = vmul.f32 %v850, %v787
  %v852 = vand.u32 2147483647, %v787
  %vm853 = vcmp.lt.f32.partialorder %v852, 0.0004427343
  %v854 = vsel %vm853, %v851, %v848
  %v855 = vadd.f32 %v789, 1.0
  %v856 = vlog2.pop %v855
  %v857 = vmul.f32 %v856, 0.6931472
  %v858 = vmul.f32 -0.5, %v789
  %v859 = vadd.f32 %v858, 1.0
  %v860 = vmul.f32 %v859, %v789
  %v861 = vand.u32 2147483647, %v789
  %vm862 = vcmp.lt.f32.partialorder %v861, 0.0004427343
  %v863 = vsel %vm862, %v860, %v857
  %v864 = vadd.f32 %v791, 1.0
  %v865 = vlog2.pop %v864
  %v866 = vmul.f32 %v865, 0.6931472
  %v867 = vmul.f32 -0.5, %v791
  %v868 = vadd.f32 %v867, 1.0
  %v869 = vmul.f32 %v868, %v791
  %v870 = vand.u32 2147483647, %v791
  %vm871 = vcmp.lt.f32.partialorder %v870, 0.0004427343
  %v872 = vsel %vm871, %v869, %v866
  %v873 = vadd.f32 %v793, 1.0
  %v874 = vlog2.pop %v873
  %v875 = vmul.f32 %v874, 0.6931472
  %v876 = vmul.f32 -0.5, %v793
  %v877 = vadd.f32 %v876, 1.0
  %v878 = vmul.f32 %v877, %v793
  %v879 = vand.u32 2147483647, %v793
  %vm880 = vcmp.lt.f32.partialorder %v879, 0.0004427343
  %v881 = vsel %vm880, %v878, %v875
  %v882 = vadd.f32 %v795, 1.0
  %v883 = vlog2.pop %v882
  %v884 = vmul.f32 %v883, 0.6931472
  %v885 = vmul.f32 -0.5, %v795
  %v886 = vadd.f32 %v885, 1.0
  %v887 = vmul.f32 %v886, %v795
  %v888 = vand.u32 2147483647, %v795
  %vm889 = vcmp.lt.f32.partialorder %v888, 0.0004427343
  %v890 = vsel %vm889, %v887, %v884
  %v891 = vadd.f32 %v797, 1.0
  %v892 = vlog2.pop %v891
  %v893 = vmul.f32 %v892, 0.6931472
  %v894 = vmul.f32 -0.5, %v797
  %v895 = vadd.f32 %v894, 1.0
  %v896 = vmul.f32 %v895, %v797
  %v897 = vand.u32 2147483647, %v797
  %vm898 = vcmp.lt.f32.partialorder %v897, 0.0004427343
  %v899 = vsel %vm898, %v896, %v893
  %v900 = vadd.f32 %v799, 1.0
  %v901 = vlog2.pop %v900
  %v902 = vmul.f32 %v901, 0.6931472
  %v903 = vmul.f32 -0.5, %v799
  %v904 = vadd.f32 %v903, 1.0
  %v905 = vmul.f32 %v904, %v799
  %v906 = vand.u32 2147483647, %v799
  %vm907 = vcmp.lt.f32.partialorder %v906, 0.0004427343
  %v908 = vsel %vm907, %v905, %v902
  %v909 = vadd.f32 %v801, 1.0
  %v910 = vlog2.pop %v909
  %v911 = vmul.f32 %v910, 0.6931472
  %v912 = vmul.f32 -0.5, %v801
  %v913 = vadd.f32 %v912, 1.0
  %v914 = vmul.f32 %v913, %v801
  %v915 = vand.u32 2147483647, %v801
  %vm916 = vcmp.lt.f32.partialorder %v915, 0.0004427343
  %v917 = vsel %vm916, %v914, %v911
  %v918 = vadd.f32 %v803, 1.0
  %v919 = vlog2.pop %v918
  %v920 = vmul.f32 %v919, 0.6931472
  %v921 = vmul.f32 -0.5, %v803
  %v922 = vadd.f32 %v921, 1.0
  %v923 = vmul.f32 %v922, %v803
  %v924 = vand.u32 2147483647, %v803
  %vm925 = vcmp.lt.f32.partialorder %v924, 0.0004427343
  %v926 = vsel %vm925, %v923, %v920
  %v927 = vadd.f32 %v805, 1.0
  %v928 = vlog2.pop %v927
  %v929 = vmul.f32 %v928, 0.6931472
  %v930 = vmul.f32 -0.5, %v805
  %v931 = vadd.f32 %v930, 1.0
  %v932 = vmul.f32 %v931, %v805
  %v933 = vand.u32 2147483647, %v805
  %vm934 = vcmp.lt.f32.partialorder %v933, 0.0004427343
  %v935 = vsel %vm934, %v932, %v929
  %v936 = vadd.f32 %v807, 1.0
  %v937 = vlog2.pop %v936
  %v938 = vmul.f32 %v937, 0.6931472
  %v939 = vmul.f32 -0.5, %v807
  %v940 = vadd.f32 %v939, 1.0
  %v941 = vmul.f32 %v940, %v807
  %v942 = vand.u32 2147483647, %v807
  %vm943 = vcmp.lt.f32.partialorder %v942, 0.0004427343
  %v944 = vsel %vm943, %v941, %v938
  %v945 = vadd.f32 %v809, 1.0
  %v946 = vlog2.pop %v945
  %v947 = vmul.f32 %v946, 0.6931472
  %v948 = vmul.f32 -0.5, %v809
  %v949 = vadd.f32 %v948, 1.0
  %v950 = vmul.f32 %v949, %v809
  %v951 = vand.u32 2147483647, %v809
  %vm952 = vcmp.lt.f32.partialorder %v951, 0.0004427343
  %v953 = vsel %vm952, %v950, %v947
  %v954 = vsel %vm746, %v650, %v818
  %v955 = vsel %vm747, %v651, %v827
  %v956 = vsel %vm748, %v652, %v836
  %v957 = vsel %vm749, %v653, %v845
  %v958 = vsel %vm750, %v654, %v854
  %v959 = vsel %vm751, %v655, %v863
  %v960 = vsel %vm752, %v656, %v872
  %v961 = vsel %vm753, %v657, %v881
  %v962 = vsel %vm754, %v658, %v890
  %v963 = vsel %vm755, %v659, %v899
  %v964 = vsel %vm756, %v660, %v908
  %v965 = vsel %vm757, %v661, %v917
  %v966 = vsel %vm758, %v662, %v926
  %v967 = vsel %vm759, %v663, %v935
  %v968 = vsel %vm760, %v664, %v944
  %v969 = vsel %vm761, %v665, %v953
  %986 = vrot.lane.b32.xlu0 %v954, 64
  %v987 = vpop.permute.xlu0 %986
  %988 = vrot.lane.b32.xlu0 %v955, 64
  %v989 = vpop.permute.xlu0 %988
  %990 = vrot.lane.b32.xlu0 %v956, 64
  %v991 = vpop.permute.xlu0 %990
  %992 = vrot.lane.b32.xlu0 %v957, 64
  %v993 = vpop.permute.xlu0 %992
  %994 = vrot.lane.b32.xlu0 %v958, 64
  %v995 = vpop.permute.xlu0 %994
  %996 = vrot.lane.b32.xlu0 %v959, 64
  %v997 = vpop.permute.xlu0 %996
  %998 = vrot.lane.b32.xlu0 %v960, 64
  %v999 = vpop.permute.xlu0 %998
  %1000 = vrot.lane.b32.xlu0 %v961, 64
  %v1001 = vpop.permute.xlu0 %1000
  %1002 = vrot.lane.b32.xlu0 %v962, 64
  %v1003 = vpop.permute.xlu0 %1002
  %1004 = vrot.lane.b32.xlu0 %v963, 64
  %v1005 = vpop.permute.xlu0 %1004
  %1006 = vrot.lane.b32.xlu0 %v964, 64
  %v1007 = vpop.permute.xlu0 %1006
  %1008 = vrot.lane.b32.xlu0 %v965, 64
  %v1009 = vpop.permute.xlu0 %1008
  %1010 = vrot.lane.b32.xlu0 %v966, 64
  %v1011 = vpop.permute.xlu0 %1010
  %1012 = vrot.lane.b32.xlu0 %v967, 64
  %v1013 = vpop.permute.xlu0 %1012
  %1014 = vrot.lane.b32.xlu0 %v968, 64
  %v1015 = vpop.permute.xlu0 %1014
  %1016 = vrot.lane.b32.xlu0 %v969, 64
  %v1017 = vpop.permute.xlu0 %1016
  %v1034 = vmul.f32 %v730, %v987
  %v1035 = vmul.f32 %v731, %v989
  %v1036 = vmul.f32 %v732, %v991
  %v1037 = vmul.f32 %v733, %v993
  %v1038 = vmul.f32 %v734, %v995
  %v1039 = vmul.f32 %v735, %v997
  %v1040 = vmul.f32 %v736, %v999
  %v1041 = vmul.f32 %v737, %v1001
  %v1042 = vmul.f32 %v738, %v1003
  %v1043 = vmul.f32 %v739, %v1005
  %v1044 = vmul.f32 %v740, %v1007
  %v1045 = vmul.f32 %v741, %v1009
  %v1046 = vmul.f32 %v742, %v1011
  %v1047 = vmul.f32 %v743, %v1013
  %v1048 = vmul.f32 %v744, %v1015
  %v1049 = vmul.f32 %v745, %v1017
  %v1050 = vsel %vm294, %v1034, 0.0
  %v1051 = vsel %vm294, %v1036, 0.0
  %v1052 = vadd.f32 %v1050, %v1051
  %v1053 = vsel %vm294, %v1038, 0.0
  %v1054 = vadd.f32 %v1052, %v1053
  %v1055 = vsel %vm294, %v1040, 0.0
  %v1056 = vadd.f32 %v1054, %v1055
  %v1057 = vsel %vm294, %v1042, 0.0
  %v1058 = vadd.f32 %v1056, %v1057
  %v1059 = vsel %vm294, %v1044, 0.0
  %v1060 = vadd.f32 %v1058, %v1059
  %v1061 = vsel %vm294, %v1046, 0.0
  %v1062 = vadd.f32 %v1060, %v1061
  %v1063 = vsel %vm294, %v1048, 0.0
  %v1064 = vadd.f32 %v1062, %v1063
  %v1065 = vsel %vm294, %v1035, 0.0
  %v1066 = vsel %vm294, %v1037, 0.0
  %v1067 = vadd.f32 %v1065, %v1066
  %v1068 = vsel %vm294, %v1039, 0.0
  %v1069 = vadd.f32 %v1067, %v1068
  %v1070 = vsel %vm294, %v1041, 0.0
  %v1071 = vadd.f32 %v1069, %v1070
  %v1072 = vsel %vm294, %v1043, 0.0
  %v1073 = vadd.f32 %v1071, %v1072
  %v1074 = vsel %vm294, %v1045, 0.0
  %v1075 = vadd.f32 %v1073, %v1074
  %v1076 = vsel %vm294, %v1047, 0.0
  %v1077 = vadd.f32 %v1075, %v1076
  %v1078 = vsel %vm294, %v1049, 0.0
  %v1079 = vadd.f32 %v1077, %v1078
  %v1080 = vld [vmem:[%s10] sm:$0x1]
  %v1082 = vlaneseq
  %v1083 = vshrl.u32 %v1082, 7
  %v1084 = vsub.s32 0, %v1083
  %v1085 = vrot.slane %v1080, %v1084
  %v1087 = vmul.f32 %v1064, %v1085
  %v1088 = vmul.f32 %v1079, %v1085
  %v1089 = vadd.f32 %v117, %v1087
  %v1090 = vadd.f32 %v120, %v1088
  %v1091 = vld [vmem:[%s11] sm:$0x1]
  %v1093 = vlaneseq
  %v1094 = vshrl.u32 %v1093, 7
  %v1095 = vsub.s32 0, %v1094
  %v1096 = vrot.slane %v1091, %v1095
  %v1098 = vadd.f32 %v1089, %v1096
  %v1099 = vadd.f32 %v1090, %v1096
  %vm1100 = vcmp.gt.f32.partialorder %v1098, 20.0
  %vm1101 = vcmp.gt.f32.partialorder %v1099, 20.0
  %v1102 = vmin.f32 %v1098, 20.0
  %v1103 = vmin.f32 %v1099, 20.0
  %v1104 = vmul.f32 %v1102, 1.442695
  %v1105 = vpow.pop %v1104
  %v1106 = vmul.f32 %v1103, 1.442695
  %v1107 = vpow.pop %v1106
  %v1108 = vadd.f32 %v1105, 1.0
  %v1109 = vlog2.pop %v1108
  %v1110 = vmul.f32 %v1109, 0.6931472
  %v1111 = vmul.f32 -0.5, %v1105
  %v1112 = vadd.f32 %v1111, 1.0
  %v1113 = vmul.f32 %v1112, %v1105
  %v1114 = vand.u32 2147483647, %v1105
  %vm1115 = vcmp.lt.f32.partialorder %v1114, 0.0004427343
  %v1116 = vsel %vm1115, %v1113, %v1110
  %v1117 = vadd.f32 %v1107, 1.0
  %v1118 = vlog2.pop %v1117
  %v1119 = vmul.f32 %v1118, 0.6931472
  %v1120 = vmul.f32 -0.5, %v1107
  %v1121 = vadd.f32 %v1120, 1.0
  %v1122 = vmul.f32 %v1121, %v1107
  %v1123 = vand.u32 2147483647, %v1107
  %vm1124 = vcmp.lt.f32.partialorder %v1123, 0.0004427343
  %v1125 = vsel %vm1124, %v1122, %v1119
  %v1126 = vsel %vm1100, %v1098, %v1116
  %v1127 = vsel %vm1101, %v1099, %v1125
  %v1128 = vpack.c.bf16 %v1127, %v1126
  %s1129 = scalar_lea.vmem %s7, 64
  %v1130 = vld [vmem:[%s1129] sm:$0xff]
  %v1131 = vld [vmem:[%s1129 + $0x8] sm:$0xff]
  %v1132 = vld [vmem:[%s1129 + $0x10] sm:$0xff]
  %v1133 = vld [vmem:[%s1129 + $0x18] sm:$0xff]
  %v1134 = vld [vmem:[%s1129 + $0x20] sm:$0xff]
  %v1135 = vld [vmem:[%s1129 + $0x28] sm:$0xff]
  %v1136 = vld [vmem:[%s1129 + $0x30] sm:$0xff]
  %v1137 = vld [vmem:[%s1129 + $0x38] sm:$0xff]
  %v1146 = vunpack.c.l.b16 %v1130
  %v1147 = vunpack.c.h.b16 %v1130
  %v1148 = vunpack.c.l.b16 %v1131
  %v1149 = vunpack.c.h.b16 %v1131
  %v1150 = vunpack.c.l.b16 %v1132
  %v1151 = vunpack.c.h.b16 %v1132
  %v1152 = vunpack.c.l.b16 %v1133
  %v1153 = vunpack.c.h.b16 %v1133
  %v1154 = vunpack.c.l.b16 %v1134
  %v1155 = vunpack.c.h.b16 %v1134
  %v1156 = vunpack.c.l.b16 %v1135
  %v1157 = vunpack.c.h.b16 %v1135
  %v1158 = vunpack.c.l.b16 %v1136
  %v1159 = vunpack.c.h.b16 %v1136
  %v1160 = vunpack.c.l.b16 %v1137
  %v1161 = vunpack.c.h.b16 %v1137
  %v1162 = vpack.c.b16 %v1148, %v1146
  %v1163 = vpack.c.b16 %v1149, %v1147
  %v1164 = vpack.c.b16 %v1152, %v1150
  %v1165 = vpack.c.b16 %v1153, %v1151
  %v1166 = vpack.c.b16 %v1156, %v1154
  %v1167 = vpack.c.b16 %v1157, %v1155
  %v1168 = vpack.c.b16 %v1160, %v1158
  %v1169 = vpack.c.b16 %v1161, %v1159
  %v1179 = vsel %vm294, %v1128, 0
  %1181 = vmatprep.subr.bf16.mxu0 %v1163
  %1182 = vmatpush1.bf16.msra.mxu0 %v1162
  %1183 = vmatprep.subr.bf16.mxu0 %v1165
  %1184 = vmatpush1.bf16.msra.mxu0 %v1164
  %1185 = vmatprep.subr.bf16.mxu0 %v1167
  %1186 = vmatpush1.bf16.msra.mxu0 %v1166
  %1187 = vmatprep.subr.bf16.mxu0 %v1169
  %1188 = vmatpush1.bf16.msra.mxu0 %v1168
  %1189 = vmatprep.subr.bf16.mxu0 0
  %1190 = vmatpush1.bf16.msra.mxu0 0
  %1191 = vmatprep.subr.bf16.mxu0 0
  %1192 = vmatpush1.bf16.msra.mxu0 0
  %1193 = vmatprep.subr.bf16.mxu0 0
  %1194 = vmatpush1.bf16.msra.mxu0 0
  %1195 = vmatprep.subr.bf16.mxu0 0
  %1196 = vmatpush1.bf16.msra.mxu0 0
  %1197 = vmatprep.subr.bf16.mxu0 0
  %1198 = vmatpush1.bf16.msra.mxu0 0
  %1199 = vmatprep.subr.bf16.mxu0 0
  %1200 = vmatpush1.bf16.msra.mxu0 0
  %1201 = vmatprep.subr.bf16.mxu0 0
  %1202 = vmatpush1.bf16.msra.mxu0 0
  %1203 = vmatprep.subr.bf16.mxu0 0
  %1204 = vmatpush1.bf16.msra.mxu0 0
  %1205 = vmatprep.subr.bf16.mxu0 0
  %1206 = vmatpush1.bf16.msra.mxu0 0
  %1207 = vmatprep.subr.bf16.mxu0 0
  %1208 = vmatpush1.bf16.msra.mxu0 0
  %1209 = vmatprep.subr.bf16.mxu0 0
  %1210 = vmatpush1.bf16.msra.mxu0 0
  %1211 = vmatprep.subr.bf16.mxu0 0
  %1212 = vmatpush1.bf16.msra.mxu0 0
  %1213 = vmatprep.mubr.bf16.mxu0 0
  %1214 = vmatmul.mubr.bf16.gmra.mrb[0].mxu0 %v1179
  %v1215 = vpop.f32.mrb[0].mxu0
  %v1216 = vadd.f32 0.0, %v1215
  %v1217 = vpop.f32.mrb[0].mxu0
  %v1218 = vadd.f32 0.0, %v1217
  %v1219 = vpop.f32.mrb[0].mxu0
  %v1220 = vadd.f32 0.0, %v1219
  %v1221 = vpop.f32.mrb[0].mxu0
  %v1222 = vadd.f32 0.0, %v1221
  %1223 = vdwg.mxu0
  %s1224 = scalar_lea.vmem %s9, 1
  %v1225 = vld [vmem:[%s1224] sm:$0x1]
  %v1227 = vlaneseq
  %v1228 = vshrl.u32 %v1227, 7
  %v1229 = vsub.s32 0, %v1228
  %v1230 = vrot.slane %v1225, %v1229
  %v1232 = vadd.f32 %v1216, %v1230
  %v1233 = vadd.f32 %v1220, %v1230
  %s1234 = scalar_lea.vmem %s8, 16
  %v1235 = vld [vmem:[%s1234] sm:$0xf]
  %v1236 = vld [vmem:[%s1234 + $0x4] sm:$0xf]
  %v1237 = vld [vmem:[%s1234 + $0x8] sm:$0xf]
  %v1238 = vld [vmem:[%s1234 + $0xc] sm:$0xf]
  %v1243 = vunpack.c.l.b16 %v1235
  %v1244 = vunpack.c.l.b16 %v1236
  %v1245 = vunpack.c.l.b16 %v1237
  %v1246 = vunpack.c.l.b16 %v1238
  %v1247 = vpack.c.b16 %v1244, %v1243
  %v1248 = vpack.c.b16 %v1246, %v1245
  %1251 = vmatprep.subr.bf16.mxu0 0
  %1252 = vmatpush1.bf16.msra.mxu0 %v1247
  %1253 = vmatprep.subr.bf16.mxu0 0
  %1254 = vmatpush1.bf16.msra.mxu0 %v1248
  %1255 = vmatprep.subr.bf16.mxu0 0
  %1256 = vmatpush1.bf16.msra.mxu0 0
  %1257 = vmatprep.subr.bf16.mxu0 0
  %1258 = vmatpush1.bf16.msra.mxu0 0
  %1259 = vmatprep.subr.bf16.mxu0 0
  %1260 = vmatpush1.bf16.msra.mxu0 0
  %1261 = vmatprep.subr.bf16.mxu0 0
  %1262 = vmatpush1.bf16.msra.mxu0 0
  %1263 = vmatprep.subr.bf16.mxu0 0
  %1264 = vmatpush1.bf16.msra.mxu0 0
  %1265 = vmatprep.subr.bf16.mxu0 0
  %1266 = vmatpush1.bf16.msra.mxu0 0
  %1267 = vmatprep.subr.bf16.mxu0 0
  %1268 = vmatpush1.bf16.msra.mxu0 0
  %1269 = vmatprep.subr.bf16.mxu0 0
  %1270 = vmatpush1.bf16.msra.mxu0 0
  %1271 = vmatprep.subr.bf16.mxu0 0
  %1272 = vmatpush1.bf16.msra.mxu0 0
  %1273 = vmatprep.subr.bf16.mxu0 0
  %1274 = vmatpush1.bf16.msra.mxu0 0
  %1275 = vmatprep.subr.bf16.mxu0 0
  %1276 = vmatpush1.bf16.msra.mxu0 0
  %1277 = vmatprep.subr.bf16.mxu0 0
  %1278 = vmatpush1.bf16.msra.mxu0 0
  %1279 = vmatprep.subr.bf16.mxu0 0
  %1280 = vmatpush1.bf16.msra.mxu0 0
  %1281 = vmatprep.subr.bf16.mxu0 0
  %1282 = vmatpush1.bf16.msra.mxu0 0
  %1283 = vmatprep.mubr.bf16.mxu0 0
  %1284 = vmatmul.mubr.bf16.gmra.mrb[0].mxu0 %v408
  %v1285 = vpop.f32.mrb[0].mxu0
  %v1286 = vadd.f32 0.0, %v1285
  %v1287 = vpop.f32.mrb[0].mxu0
  %v1288 = vpop.f32.mrb[0].mxu0
  %v1289 = vadd.f32 0.0, %v1288
  %v1290 = vpop.f32.mrb[0].mxu0
  %1291 = vmatprep.mubr.bf16.mxu0 0
  %1292 = vmatmul.mubr.bf16.gmra.mrb[0].mxu0 %v411
  %v1293 = vpop.f32.mrb[0].mxu0
  %v1294 = vadd.f32 0.0, %v1293
  %v1295 = vpop.f32.mrb[0].mxu0
  %v1296 = vpop.f32.mrb[0].mxu0
  %v1297 = vadd.f32 0.0, %v1296
  %v1298 = vpop.f32.mrb[0].mxu0
  %1299 = vmatprep.mubr.bf16.mxu0 0
  %1300 = vmatmul.mubr.bf16.gmra.mrb[0].mxu0 %v414
  %v1301 = vpop.f32.mrb[0].mxu0
  %v1302 = vadd.f32 0.0, %v1301
  %v1303 = vpop.f32.mrb[0].mxu0
  %v1304 = vpop.f32.mrb[0].mxu0
  %v1305 = vadd.f32 0.0, %v1304
  %v1306 = vpop.f32.mrb[0].mxu0
  %1307 = vmatprep.mubr.bf16.mxu0 0
  %1308 = vmatmul.mubr.bf16.gmra.mrb[0].mxu0 %v417
  %v1309 = vpop.f32.mrb[0].mxu0
  %v1310 = vadd.f32 0.0, %v1309
  %v1311 = vpop.f32.mrb[0].mxu0
  %v1312 = vpop.f32.mrb[0].mxu0
  %v1313 = vadd.f32 0.0, %v1312
  %v1314 = vpop.f32.mrb[0].mxu0
  %1315 = vmatprep.mubr.bf16.mxu0 0
  %1316 = vmatmul.mubr.bf16.gmra.mrb[0].mxu0 %v420
  %v1317 = vpop.f32.mrb[0].mxu0
  %v1318 = vadd.f32 0.0, %v1317
  %v1319 = vpop.f32.mrb[0].mxu0
  %v1320 = vpop.f32.mrb[0].mxu0
  %v1321 = vadd.f32 0.0, %v1320
  %v1322 = vpop.f32.mrb[0].mxu0
  %1323 = vmatprep.mubr.bf16.mxu0 0
  %1324 = vmatmul.mubr.bf16.gmra.mrb[0].mxu0 %v423
  %v1325 = vpop.f32.mrb[0].mxu0
  %v1326 = vadd.f32 0.0, %v1325
  %v1327 = vpop.f32.mrb[0].mxu0
  %v1328 = vpop.f32.mrb[0].mxu0
  %v1329 = vadd.f32 0.0, %v1328
  %v1330 = vpop.f32.mrb[0].mxu0
  %1331 = vmatprep.mubr.bf16.mxu0 0
  %1332 = vmatmul.mubr.bf16.gmra.mrb[0].mxu0 %v426
  %v1333 = vpop.f32.mrb[0].mxu0
  %v1334 = vadd.f32 0.0, %v1333
  %v1335 = vpop.f32.mrb[0].mxu0
  %v1336 = vpop.f32.mrb[0].mxu0
  %v1337 = vadd.f32 0.0, %v1336
  %v1338 = vpop.f32.mrb[0].mxu0
  %1339 = vmatprep.mubr.bf16.mxu0 0
  %1340 = vmatmul.mubr.bf16.gmra.mrb[0].mxu0 %v429
  %v1341 = vpop.f32.mrb[0].mxu0
  %v1342 = vadd.f32 0.0, %v1341
  %v1343 = vpop.f32.mrb[0].mxu0
  %v1344 = vpop.f32.mrb[0].mxu0
  %v1345 = vadd.f32 0.0, %v1344
  %v1346 = vpop.f32.mrb[0].mxu0
  %1347 = vdwg.mxu0
  %v1348 = vpack.c.bf16 %v1222, %v1218
  %1349 = vmatprep.subr.bf16.mxu0 0
  %1350 = vmatpush1.bf16.msra.mxu0 %v1348
  %1351 = vmatprep.subr.bf16.mxu0 0
  %1352 = vmatpush1.bf16.msra.mxu0 0
  %1353 = vmatprep.subr.bf16.mxu0 0
  %1354 = vmatpush1.bf16.msra.mxu0 0
  %1355 = vmatprep.subr.bf16.mxu0 0
  %1356 = vmatpush1.bf16.msra.mxu0 0
  %1357 = vmatprep.subr.bf16.mxu0 0
  %1358 = vmatpush1.bf16.msra.mxu0 0
  %1359 = vmatprep.subr.bf16.mxu0 0
  %1360 = vmatpush1.bf16.msra.mxu0 0
  %1361 = vmatprep.subr.bf16.mxu0 0
  %1362 = vmatpush1.bf16.msra.mxu0 0
  %1363 = vmatprep.subr.bf16.mxu0 0
  %1364 = vmatpush1.bf16.msra.mxu0 0
  %1365 = vmatprep.subr.bf16.mxu0 0
  %1366 = vmatpush1.bf16.msra.mxu0 0
  %1367 = vmatprep.subr.bf16.mxu0 0
  %1368 = vmatpush1.bf16.msra.mxu0 0
  %1369 = vmatprep.subr.bf16.mxu0 0
  %1370 = vmatpush1.bf16.msra.mxu0 0
  %1371 = vmatprep.subr.bf16.mxu0 0
  %1372 = vmatpush1.bf16.msra.mxu0 0
  %1373 = vmatprep.subr.bf16.mxu0 0
  %1374 = vmatpush1.bf16.msra.mxu0 0
  %1375 = vmatprep.subr.bf16.mxu0 0
  %1376 = vmatpush1.bf16.msra.mxu0 0
  %1377 = vmatprep.subr.bf16.mxu0 0
  %1378 = vmatpush1.bf16.msra.mxu0 0
  %1379 = vmatprep.subr.bf16.mxu0 0
  %1380 = vmatpush1.bf16.msra.mxu0 0
  %1381 = vmatprep.mubr.bf16.mxu0 0
  %1382 = vmatmul.mubr.bf16.gmra.mrb[0].mxu0 %v530
  %v1383 = vpop.f32.mrb[0].mxu0
  %v1384 = vadd.f32 %v1286, %v1383
  %v1385 = vpop.f32.mrb[0].mxu0
  %v1386 = vpop.f32.mrb[0].mxu0
  %v1387 = vadd.f32 %v1289, %v1386
  %v1388 = vpop.f32.mrb[0].mxu0
  %1389 = vmatprep.mubr.bf16.mxu0 0
  %1390 = vmatmul.mubr.bf16.gmra.mrb[0].mxu0 %v533
  %v1391 = vpop.f32.mrb[0].mxu0
  %v1392 = vadd.f32 %v1294, %v1391
  %v1393 = vpop.f32.mrb[0].mxu0
  %v1394 = vpop.f32.mrb[0].mxu0
  %v1395 = vadd.f32 %v1297, %v1394
  %v1396 = vpop.f32.mrb[0].mxu0
  %1397 = vmatprep.mubr.bf16.mxu0 0
  %1398 = vmatmul.mubr.bf16.gmra.mrb[0].mxu0 %v536
  %v1399 = vpop.f32.mrb[0].mxu0
  %v1400 = vadd.f32 %v1302, %v1399
  %v1401 = vpop.f32.mrb[0].mxu0
  %v1402 = vpop.f32.mrb[0].mxu0
  %v1403 = vadd.f32 %v1305, %v1402
  %v1404 = vpop.f32.mrb[0].mxu0
  %1405 = vmatprep.mubr.bf16.mxu0 0
  %1406 = vmatmul.mubr.bf16.gmra.mrb[0].mxu0 %v539
  %v1407 = vpop.f32.mrb[0].mxu0
  %v1408 = vadd.f32 %v1310, %v1407
  %v1409 = vpop.f32.mrb[0].mxu0
  %v1410 = vpop.f32.mrb[0].mxu0
  %v1411 = vadd.f32 %v1313, %v1410
  %v1412 = vpop.f32.mrb[0].mxu0
  %1413 = vmatprep.mubr.bf16.mxu0 0
  %1414 = vmatmul.mubr.bf16.gmra.mrb[0].mxu0 %v542
  %v1415 = vpop.f32.mrb[0].mxu0
  %v1416 = vadd.f32 %v1318, %v1415
  %v1417 = vpop.f32.mrb[0].mxu0
  %v1418 = vpop.f32.mrb[0].mxu0
  %v1419 = vadd.f32 %v1321, %v1418
  %v1420 = vpop.f32.mrb[0].mxu0
  %1421 = vmatprep.mubr.bf16.mxu0 0
  %1422 = vmatmul.mubr.bf16.gmra.mrb[0].mxu0 %v545
  %v1423 = vpop.f32.mrb[0].mxu0
  %v1424 = vadd.f32 %v1326, %v1423
  %v1425 = vpop.f32.mrb[0].mxu0
  %v1426 = vpop.f32.mrb[0].mxu0
  %v1427 = vadd.f32 %v1329, %v1426
  %v1428 = vpop.f32.mrb[0].mxu0
  %1429 = vmatprep.mubr.bf16.mxu0 0
  %1430 = vmatmul.mubr.bf16.gmra.mrb[0].mxu0 %v548
  %v1431 = vpop.f32.mrb[0].mxu0
  %v1432 = vadd.f32 %v1334, %v1431
  %v1433 = vpop.f32.mrb[0].mxu0
  %v1434 = vpop.f32.mrb[0].mxu0
  %v1435 = vadd.f32 %v1337, %v1434
  %v1436 = vpop.f32.mrb[0].mxu0
  %1437 = vmatprep.mubr.bf16.mxu0 0
  %1438 = vmatmul.mubr.bf16.gmra.mrb[0].mxu0 %v551
  %v1439 = vpop.f32.mrb[0].mxu0
  %v1440 = vadd.f32 %v1342, %v1439
  %v1441 = vpop.f32.mrb[0].mxu0
  %v1442 = vpop.f32.mrb[0].mxu0
  %v1443 = vadd.f32 %v1345, %v1442
  %v1444 = vpop.f32.mrb[0].mxu0
  %1445 = vdwg.mxu0
  %v1446 = vadd.f32 %v1384, %v1232
  %v1447 = vadd.f32 %v1387, %v1233
  %v1448 = vadd.f32 %v1392, %v1232
  %v1449 = vadd.f32 %v1395, %v1233
  %v1450 = vadd.f32 %v1400, %v1232
  %v1451 = vadd.f32 %v1403, %v1233
  %v1452 = vadd.f32 %v1408, %v1232
  %v1453 = vadd.f32 %v1411, %v1233
  %v1454 = vadd.f32 %v1416, %v1232
  %v1455 = vadd.f32 %v1419, %v1233
  %v1456 = vadd.f32 %v1424, %v1232
  %v1457 = vadd.f32 %v1427, %v1233
  %v1458 = vadd.f32 %v1432, %v1232
  %v1459 = vadd.f32 %v1435, %v1233
  %v1460 = vadd.f32 %v1440, %v1232
  %v1461 = vadd.f32 %v1443, %v1233
  %v1462 = vsub.f32 0.0, %v1446
  %v1463 = vsub.f32 0.0, %v1447
  %v1464 = vsub.f32 0.0, %v1448
  %v1465 = vsub.f32 0.0, %v1449
  %v1466 = vsub.f32 0.0, %v1450
  %v1467 = vsub.f32 0.0, %v1451
  %v1468 = vsub.f32 0.0, %v1452
  %v1469 = vsub.f32 0.0, %v1453
  %v1470 = vsub.f32 0.0, %v1454
  %v1471 = vsub.f32 0.0, %v1455
  %v1472 = vsub.f32 0.0, %v1456
  %v1473 = vsub.f32 0.0, %v1457
  %v1474 = vsub.f32 0.0, %v1458
  %v1475 = vsub.f32 0.0, %v1459
  %v1476 = vsub.f32 0.0, %v1460
  %v1477 = vsub.f32 0.0, %v1461
  %v1478 = vmul.f32 %v1462, 1.442695
  %v1479 = vpow.pop %v1478
  %v1480 = vmul.f32 %v1463, 1.442695
  %v1481 = vpow.pop %v1480
  %v1482 = vmul.f32 %v1464, 1.442695
  %v1483 = vpow.pop %v1482
  %v1484 = vmul.f32 %v1465, 1.442695
  %v1485 = vpow.pop %v1484
  %v1486 = vmul.f32 %v1466, 1.442695
  %v1487 = vpow.pop %v1486
  %v1488 = vmul.f32 %v1467, 1.442695
  %v1489 = vpow.pop %v1488
  %v1490 = vmul.f32 %v1468, 1.442695
  %v1491 = vpow.pop %v1490
  %v1492 = vmul.f32 %v1469, 1.442695
  %v1493 = vpow.pop %v1492
  %v1494 = vmul.f32 %v1470, 1.442695
  %v1495 = vpow.pop %v1494
  %v1496 = vmul.f32 %v1471, 1.442695
  %v1497 = vpow.pop %v1496
  %v1498 = vmul.f32 %v1472, 1.442695
  %v1499 = vpow.pop %v1498
  %v1500 = vmul.f32 %v1473, 1.442695
  %v1501 = vpow.pop %v1500
  %v1502 = vmul.f32 %v1474, 1.442695
  %v1503 = vpow.pop %v1502
  %v1504 = vmul.f32 %v1475, 1.442695
  %v1505 = vpow.pop %v1504
  %v1506 = vmul.f32 %v1476, 1.442695
  %v1507 = vpow.pop %v1506
  %v1508 = vmul.f32 %v1477, 1.442695
  %v1509 = vpow.pop %v1508
  %v1510 = vadd.f32 %v1479, 1.0
  %v1511 = vadd.f32 %v1481, 1.0
  %v1512 = vadd.f32 %v1483, 1.0
  %v1513 = vadd.f32 %v1485, 1.0
  %v1514 = vadd.f32 %v1487, 1.0
  %v1515 = vadd.f32 %v1489, 1.0
  %v1516 = vadd.f32 %v1491, 1.0
  %v1517 = vadd.f32 %v1493, 1.0
  %v1518 = vadd.f32 %v1495, 1.0
  %v1519 = vadd.f32 %v1497, 1.0
  %v1520 = vadd.f32 %v1499, 1.0
  %v1521 = vadd.f32 %v1501, 1.0
  %v1522 = vadd.f32 %v1503, 1.0
  %v1523 = vadd.f32 %v1505, 1.0
  %v1524 = vadd.f32 %v1507, 1.0
  %v1525 = vadd.f32 %v1509, 1.0
  %v1526 = vrcp.pop %v1510
  %v1527 = vrcp.pop %v1511
  %v1528 = vrcp.pop %v1512
  %v1529 = vrcp.pop %v1513
  %v1530 = vrcp.pop %v1514
  %v1531 = vrcp.pop %v1515
  %v1532 = vrcp.pop %v1516
  %v1533 = vrcp.pop %v1517
  %v1534 = vrcp.pop %v1518
  %v1535 = vrcp.pop %v1519
  %v1536 = vrcp.pop %v1520
  %v1537 = vrcp.pop %v1521
  %v1538 = vrcp.pop %v1522
  %v1539 = vrcp.pop %v1523
  %v1540 = vrcp.pop %v1524
  %v1541 = vrcp.pop %v1525
  %vm1542 = vcmp.gt.f32.partialorder %v1446, 20.0
  %vm1543 = vcmp.gt.f32.partialorder %v1447, 20.0
  %vm1544 = vcmp.gt.f32.partialorder %v1448, 20.0
  %vm1545 = vcmp.gt.f32.partialorder %v1449, 20.0
  %vm1546 = vcmp.gt.f32.partialorder %v1450, 20.0
  %vm1547 = vcmp.gt.f32.partialorder %v1451, 20.0
  %vm1548 = vcmp.gt.f32.partialorder %v1452, 20.0
  %vm1549 = vcmp.gt.f32.partialorder %v1453, 20.0
  %vm1550 = vcmp.gt.f32.partialorder %v1454, 20.0
  %vm1551 = vcmp.gt.f32.partialorder %v1455, 20.0
  %vm1552 = vcmp.gt.f32.partialorder %v1456, 20.0
  %vm1553 = vcmp.gt.f32.partialorder %v1457, 20.0
  %vm1554 = vcmp.gt.f32.partialorder %v1458, 20.0
  %vm1555 = vcmp.gt.f32.partialorder %v1459, 20.0
  %vm1556 = vcmp.gt.f32.partialorder %v1460, 20.0
  %vm1557 = vcmp.gt.f32.partialorder %v1461, 20.0
  %v1558 = vmin.f32 %v1446, 20.0
  %v1559 = vmin.f32 %v1447, 20.0
  %v1560 = vmin.f32 %v1448, 20.0
  %v1561 = vmin.f32 %v1449, 20.0
  %v1562 = vmin.f32 %v1450, 20.0
  %v1563 = vmin.f32 %v1451, 20.0
  %v1564 = vmin.f32 %v1452, 20.0
  %v1565 = vmin.f32 %v1453, 20.0
  %v1566 = vmin.f32 %v1454, 20.0
  %v1567 = vmin.f32 %v1455, 20.0
  %v1568 = vmin.f32 %v1456, 20.0
  %v1569 = vmin.f32 %v1457, 20.0
  %v1570 = vmin.f32 %v1458, 20.0
  %v1571 = vmin.f32 %v1459, 20.0
  %v1572 = vmin.f32 %v1460, 20.0
  %v1573 = vmin.f32 %v1461, 20.0
  %v1574 = vmul.f32 %v1558, 1.442695
  %v1575 = vpow.pop %v1574
  %v1576 = vmul.f32 %v1559, 1.442695
  %v1577 = vpow.pop %v1576
  %v1578 = vmul.f32 %v1560, 1.442695
  %v1579 = vpow.pop %v1578
  %v1580 = vmul.f32 %v1561, 1.442695
  %v1581 = vpow.pop %v1580
  %v1582 = vmul.f32 %v1562, 1.442695
  %v1583 = vpow.pop %v1582
  %v1584 = vmul.f32 %v1563, 1.442695
  %v1585 = vpow.pop %v1584
  %v1586 = vmul.f32 %v1564, 1.442695
  %v1587 = vpow.pop %v1586
  %v1588 = vmul.f32 %v1565, 1.442695
  %v1589 = vpow.pop %v1588
  %v1590 = vmul.f32 %v1566, 1.442695
  %v1591 = vpow.pop %v1590
  %v1592 = vmul.f32 %v1567, 1.442695
  %v1593 = vpow.pop %v1592
  %v1594 = vmul.f32 %v1568, 1.442695
  %v1595 = vpow.pop %v1594
  %v1596 = vmul.f32 %v1569, 1.442695
  %v1597 = vpow.pop %v1596
  %v1598 = vmul.f32 %v1570, 1.442695
  %v1599 = vpow.pop %v1598
  %v1600 = vmul.f32 %v1571, 1.442695
  %v1601 = vpow.pop %v1600
  %v1602 = vmul.f32 %v1572, 1.442695
  %v1603 = vpow.pop %v1602
  %v1604 = vmul.f32 %v1573, 1.442695
  %v1605 = vpow.pop %v1604
  %v1606 = vadd.f32 %v1575, 1.0
  %v1607 = vlog2.pop %v1606
  %v1608 = vmul.f32 %v1607, 0.6931472
  %v1609 = vmul.f32 -0.5, %v1575
  %v1610 = vadd.f32 %v1609, 1.0
  %v1611 = vmul.f32 %v1610, %v1575
  %v1612 = vand.u32 2147483647, %v1575
  %vm1613 = vcmp.lt.f32.partialorder %v1612, 0.0004427343
  %v1614 = vsel %vm1613, %v1611, %v1608
  %v1615 = vadd.f32 %v1577, 1.0
  %v1616 = vlog2.pop %v1615
  %v1617 = vmul.f32 %v1616, 0.6931472
  %v1618 = vmul.f32 -0.5, %v1577
  %v1619 = vadd.f32 %v1618, 1.0
  %v1620 = vmul.f32 %v1619, %v1577
  %v1621 = vand.u32 2147483647, %v1577
  %vm1622 = vcmp.lt.f32.partialorder %v1621, 0.0004427343
  %v1623 = vsel %vm1622, %v1620, %v1617
  %v1624 = vadd.f32 %v1579, 1.0
  %v1625 = vlog2.pop %v1624
  %v1626 = vmul.f32 %v1625, 0.6931472
  %v1627 = vmul.f32 -0.5, %v1579
  %v1628 = vadd.f32 %v1627, 1.0
  %v1629 = vmul.f32 %v1628, %v1579
  %v1630 = vand.u32 2147483647, %v1579
  %vm1631 = vcmp.lt.f32.partialorder %v1630, 0.0004427343
  %v1632 = vsel %vm1631, %v1629, %v1626
  %v1633 = vadd.f32 %v1581, 1.0
  %v1634 = vlog2.pop %v1633
  %v1635 = vmul.f32 %v1634, 0.6931472
  %v1636 = vmul.f32 -0.5, %v1581
  %v1637 = vadd.f32 %v1636, 1.0
  %v1638 = vmul.f32 %v1637, %v1581
  %v1639 = vand.u32 2147483647, %v1581
  %vm1640 = vcmp.lt.f32.partialorder %v1639, 0.0004427343
  %v1641 = vsel %vm1640, %v1638, %v1635
  %v1642 = vadd.f32 %v1583, 1.0
  %v1643 = vlog2.pop %v1642
  %v1644 = vmul.f32 %v1643, 0.6931472
  %v1645 = vmul.f32 -0.5, %v1583
  %v1646 = vadd.f32 %v1645, 1.0
  %v1647 = vmul.f32 %v1646, %v1583
  %v1648 = vand.u32 2147483647, %v1583
  %vm1649 = vcmp.lt.f32.partialorder %v1648, 0.0004427343
  %v1650 = vsel %vm1649, %v1647, %v1644
  %v1651 = vadd.f32 %v1585, 1.0
  %v1652 = vlog2.pop %v1651
  %v1653 = vmul.f32 %v1652, 0.6931472
  %v1654 = vmul.f32 -0.5, %v1585
  %v1655 = vadd.f32 %v1654, 1.0
  %v1656 = vmul.f32 %v1655, %v1585
  %v1657 = vand.u32 2147483647, %v1585
  %vm1658 = vcmp.lt.f32.partialorder %v1657, 0.0004427343
  %v1659 = vsel %vm1658, %v1656, %v1653
  %v1660 = vadd.f32 %v1587, 1.0
  %v1661 = vlog2.pop %v1660
  %v1662 = vmul.f32 %v1661, 0.6931472
  %v1663 = vmul.f32 -0.5, %v1587
  %v1664 = vadd.f32 %v1663, 1.0
  %v1665 = vmul.f32 %v1664, %v1587
  %v1666 = vand.u32 2147483647, %v1587
  %vm1667 = vcmp.lt.f32.partialorder %v1666, 0.0004427343
  %v1668 = vsel %vm1667, %v1665, %v1662
  %v1669 = vadd.f32 %v1589, 1.0
  %v1670 = vlog2.pop %v1669
  %v1671 = vmul.f32 %v1670, 0.6931472
  %v1672 = vmul.f32 -0.5, %v1589
  %v1673 = vadd.f32 %v1672, 1.0
  %v1674 = vmul.f32 %v1673, %v1589
  %v1675 = vand.u32 2147483647, %v1589
  %vm1676 = vcmp.lt.f32.partialorder %v1675, 0.0004427343
  %v1677 = vsel %vm1676, %v1674, %v1671
  %v1678 = vadd.f32 %v1591, 1.0
  %v1679 = vlog2.pop %v1678
  %v1680 = vmul.f32 %v1679, 0.6931472
  %v1681 = vmul.f32 -0.5, %v1591
  %v1682 = vadd.f32 %v1681, 1.0
  %v1683 = vmul.f32 %v1682, %v1591
  %v1684 = vand.u32 2147483647, %v1591
  %vm1685 = vcmp.lt.f32.partialorder %v1684, 0.0004427343
  %v1686 = vsel %vm1685, %v1683, %v1680
  %v1687 = vadd.f32 %v1593, 1.0
  %v1688 = vlog2.pop %v1687
  %v1689 = vmul.f32 %v1688, 0.6931472
  %v1690 = vmul.f32 -0.5, %v1593
  %v1691 = vadd.f32 %v1690, 1.0
  %v1692 = vmul.f32 %v1691, %v1593
  %v1693 = vand.u32 2147483647, %v1593
  %vm1694 = vcmp.lt.f32.partialorder %v1693, 0.0004427343
  %v1695 = vsel %vm1694, %v1692, %v1689
  %v1696 = vadd.f32 %v1595, 1.0
  %v1697 = vlog2.pop %v1696
  %v1698 = vmul.f32 %v1697, 0.6931472
  %v1699 = vmul.f32 -0.5, %v1595
  %v1700 = vadd.f32 %v1699, 1.0
  %v1701 = vmul.f32 %v1700, %v1595
  %v1702 = vand.u32 2147483647, %v1595
  %vm1703 = vcmp.lt.f32.partialorder %v1702, 0.0004427343
  %v1704 = vsel %vm1703, %v1701, %v1698
  %v1705 = vadd.f32 %v1597, 1.0
  %v1706 = vlog2.pop %v1705
  %v1707 = vmul.f32 %v1706, 0.6931472
  %v1708 = vmul.f32 -0.5, %v1597
  %v1709 = vadd.f32 %v1708, 1.0
  %v1710 = vmul.f32 %v1709, %v1597
  %v1711 = vand.u32 2147483647, %v1597
  %vm1712 = vcmp.lt.f32.partialorder %v1711, 0.0004427343
  %v1713 = vsel %vm1712, %v1710, %v1707
  %v1714 = vadd.f32 %v1599, 1.0
  %v1715 = vlog2.pop %v1714
  %v1716 = vmul.f32 %v1715, 0.6931472
  %v1717 = vmul.f32 -0.5, %v1599
  %v1718 = vadd.f32 %v1717, 1.0
  %v1719 = vmul.f32 %v1718, %v1599
  %v1720 = vand.u32 2147483647, %v1599
  %vm1721 = vcmp.lt.f32.partialorder %v1720, 0.0004427343
  %v1722 = vsel %vm1721, %v1719, %v1716
  %v1723 = vadd.f32 %v1601, 1.0
  %v1724 = vlog2.pop %v1723
  %v1725 = vmul.f32 %v1724, 0.6931472
  %v1726 = vmul.f32 -0.5, %v1601
  %v1727 = vadd.f32 %v1726, 1.0
  %v1728 = vmul.f32 %v1727, %v1601
  %v1729 = vand.u32 2147483647, %v1601
  %vm1730 = vcmp.lt.f32.partialorder %v1729, 0.0004427343
  %v1731 = vsel %vm1730, %v1728, %v1725
  %v1732 = vadd.f32 %v1603, 1.0
  %v1733 = vlog2.pop %v1732
  %v1734 = vmul.f32 %v1733, 0.6931472
  %v1735 = vmul.f32 -0.5, %v1603
  %v1736 = vadd.f32 %v1735, 1.0
  %v1737 = vmul.f32 %v1736, %v1603
  %v1738 = vand.u32 2147483647, %v1603
  %vm1739 = vcmp.lt.f32.partialorder %v1738, 0.0004427343
  %v1740 = vsel %vm1739, %v1737, %v1734
  %v1741 = vadd.f32 %v1605, 1.0
  %v1742 = vlog2.pop %v1741
  %v1743 = vmul.f32 %v1742, 0.6931472
  %v1744 = vmul.f32 -0.5, %v1605
  %v1745 = vadd.f32 %v1744, 1.0
  %v1746 = vmul.f32 %v1745, %v1605
  %v1747 = vand.u32 2147483647, %v1605
  %vm1748 = vcmp.lt.f32.partialorder %v1747, 0.0004427343
  %v1749 = vsel %vm1748, %v1746, %v1743
  %v1750 = vsel %vm1542, %v1446, %v1614
  %v1751 = vsel %vm1543, %v1447, %v1623
  %v1752 = vsel %vm1544, %v1448, %v1632
  %v1753 = vsel %vm1545, %v1449, %v1641
  %v1754 = vsel %vm1546, %v1450, %v1650
  %v1755 = vsel %vm1547, %v1451, %v1659
  %v1756 = vsel %vm1548, %v1452, %v1668
  %v1757 = vsel %vm1549, %v1453, %v1677
  %v1758 = vsel %vm1550, %v1454, %v1686
  %v1759 = vsel %vm1551, %v1455, %v1695
  %v1760 = vsel %vm1552, %v1456, %v1704
  %v1761 = vsel %vm1553, %v1457, %v1713
  %v1762 = vsel %vm1554, %v1458, %v1722
  %v1763 = vsel %vm1555, %v1459, %v1731
  %v1764 = vsel %vm1556, %v1460, %v1740
  %v1765 = vsel %vm1557, %v1461, %v1749
  %1782 = vrot.lane.b32.xlu0 %v1750, 64
  %v1783 = vpop.permute.xlu0 %1782
  %1784 = vrot.lane.b32.xlu0 %v1751, 64
  %v1785 = vpop.permute.xlu0 %1784
  %1786 = vrot.lane.b32.xlu0 %v1752, 64
  %v1787 = vpop.permute.xlu0 %1786
  %1788 = vrot.lane.b32.xlu0 %v1753, 64
  %v1789 = vpop.permute.xlu0 %1788
  %1790 = vrot.lane.b32.xlu0 %v1754, 64
  %v1791 = vpop.permute.xlu0 %1790
  %1792 = vrot.lane.b32.xlu0 %v1755, 64
  %v1793 = vpop.permute.xlu0 %1792
  %1794 = vrot.lane.b32.xlu0 %v1756, 64
  %v1795 = vpop.permute.xlu0 %1794
  %1796 = vrot.lane.b32.xlu0 %v1757, 64
  %v1797 = vpop.permute.xlu0 %1796
  %1798 = vrot.lane.b32.xlu0 %v1758, 64
  %v1799 = vpop.permute.xlu0 %1798
  %1800 = vrot.lane.b32.xlu0 %v1759, 64
  %v1801 = vpop.permute.xlu0 %1800
  %1802 = vrot.lane.b32.xlu0 %v1760, 64
  %v1803 = vpop.permute.xlu0 %1802
  %1804 = vrot.lane.b32.xlu0 %v1761, 64
  %v1805 = vpop.permute.xlu0 %1804
  %1806 = vrot.lane.b32.xlu0 %v1762, 64
  %v1807 = vpop.permute.xlu0 %1806
  %1808 = vrot.lane.b32.xlu0 %v1763, 64
  %v1809 = vpop.permute.xlu0 %1808
  %1810 = vrot.lane.b32.xlu0 %v1764, 64
  %v1811 = vpop.permute.xlu0 %1810
  %1812 = vrot.lane.b32.xlu0 %v1765, 64
  %v1813 = vpop.permute.xlu0 %1812
  %v1830 = vmul.f32 %v1526, %v1783
  %v1831 = vmul.f32 %v1527, %v1785
  %v1832 = vmul.f32 %v1528, %v1787
  %v1833 = vmul.f32 %v1529, %v1789
  %v1834 = vmul.f32 %v1530, %v1791
  %v1835 = vmul.f32 %v1531, %v1793
  %v1836 = vmul.f32 %v1532, %v1795
  %v1837 = vmul.f32 %v1533, %v1797
  %v1838 = vmul.f32 %v1534, %v1799
  %v1839 = vmul.f32 %v1535, %v1801
  %v1840 = vmul.f32 %v1536, %v1803
  %v1841 = vmul.f32 %v1537, %v1805
  %v1842 = vmul.f32 %v1538, %v1807
  %v1843 = vmul.f32 %v1539, %v1809
  %v1844 = vmul.f32 %v1540, %v1811
  %v1845 = vmul.f32 %v1541, %v1813
  %v1846 = vsel %vm294, %v1830, 0.0
  %v1847 = vsel %vm294, %v1832, 0.0
  %v1848 = vadd.f32 %v1846, %v1847
  %v1849 = vsel %vm294, %v1834, 0.0
  %v1850 = vadd.f32 %v1848, %v1849
  %v1851 = vsel %vm294, %v1836, 0.0
  %v1852 = vadd.f32 %v1850, %v1851
  %v1853 = vsel %vm294, %v1838, 0.0
  %v1854 = vadd.f32 %v1852, %v1853
  %v1855 = vsel %vm294, %v1840, 0.0
  %v1856 = vadd.f32 %v1854, %v1855
  %v1857 = vsel %vm294, %v1842, 0.0
  %v1858 = vadd.f32 %v1856, %v1857
  %v1859 = vsel %vm294, %v1844, 0.0
  %v1860 = vadd.f32 %v1858, %v1859
  %v1861 = vsel %vm294, %v1831, 0.0
  %v1862 = vsel %vm294, %v1833, 0.0
  %v1863 = vadd.f32 %v1861, %v1862
  %v1864 = vsel %vm294, %v1835, 0.0
  %v1865 = vadd.f32 %v1863, %v1864
  %v1866 = vsel %vm294, %v1837, 0.0
  %v1867 = vadd.f32 %v1865, %v1866
  %v1868 = vsel %vm294, %v1839, 0.0
  %v1869 = vadd.f32 %v1867, %v1868
  %v1870 = vsel %vm294, %v1841, 0.0
  %v1871 = vadd.f32 %v1869, %v1870
  %v1872 = vsel %vm294, %v1843, 0.0
  %v1873 = vadd.f32 %v1871, %v1872
  %v1874 = vsel %vm294, %v1845, 0.0
  %v1875 = vadd.f32 %v1873, %v1874
  %s1876 = scalar_lea.vmem %s10, 1
  %v1877 = vld [vmem:[%s1876] sm:$0x1]
  %v1879 = vlaneseq
  %v1880 = vshrl.u32 %v1879, 7
  %v1881 = vsub.s32 0, %v1880
  %v1882 = vrot.slane %v1877, %v1881
  %v1884 = vmul.f32 %v1860, %v1882
  %v1885 = vmul.f32 %v1875, %v1882
  %v1886 = vadd.f32 %v1126, %v1884
  %v1887 = vadd.f32 %v1127, %v1885
  %s1888 = scalar_lea.vmem %s11, 1
  %v1889 = vld [vmem:[%s1888] sm:$0x1]
  %v1891 = vlaneseq
  %v1892 = vshrl.u32 %v1891, 7
  %v1893 = vsub.s32 0, %v1892
  %v1894 = vrot.slane %v1889, %v1893
  %v1896 = vadd.f32 %v1886, %v1894
  %v1897 = vadd.f32 %v1887, %v1894
  %vm1898 = vcmp.gt.f32.partialorder %v1896, 20.0
  %vm1899 = vcmp.gt.f32.partialorder %v1897, 20.0
  %v1900 = vmin.f32 %v1896, 20.0
  %v1901 = vmin.f32 %v1897, 20.0
  %v1902 = vmul.f32 %v1900, 1.442695
  %v1903 = vpow.pop %v1902
  %v1904 = vmul.f32 %v1901, 1.442695
  %v1905 = vpow.pop %v1904
  %v1906 = vadd.f32 %v1903, 1.0
  %v1907 = vlog2.pop %v1906
  %v1908 = vmul.f32 %v1907, 0.6931472
  %v1909 = vmul.f32 -0.5, %v1903
  %v1910 = vadd.f32 %v1909, 1.0
  %v1911 = vmul.f32 %v1910, %v1903
  %v1912 = vand.u32 2147483647, %v1903
  %vm1913 = vcmp.lt.f32.partialorder %v1912, 0.0004427343
  %v1914 = vsel %vm1913, %v1911, %v1908
  %v1915 = vadd.f32 %v1905, 1.0
  %v1916 = vlog2.pop %v1915
  %v1917 = vmul.f32 %v1916, 0.6931472
  %v1918 = vmul.f32 -0.5, %v1905
  %v1919 = vadd.f32 %v1918, 1.0
  %v1920 = vmul.f32 %v1919, %v1905
  %v1921 = vand.u32 2147483647, %v1905
  %vm1922 = vcmp.lt.f32.partialorder %v1921, 0.0004427343
  %v1923 = vsel %vm1922, %v1920, %v1917
  %v1924 = vsel %vm1898, %v1896, %v1914
  %v1925 = vsel %vm1899, %v1897, %v1923
  %v1926 = vpack.c.bf16 %v1925, %v1924
  %s1927 = scalar_lea.vmem %s7, 128
  %v1928 = vld [vmem:[%s1927] sm:$0xff]
  %v1929 = vld [vmem:[%s1927 + $0x8] sm:$0xff]
  %v1930 = vld [vmem:[%s1927 + $0x10] sm:$0xff]
  %v1931 = vld [vmem:[%s1927 + $0x18] sm:$0xff]
  %v1932 = vld [vmem:[%s1927 + $0x20] sm:$0xff]
  %v1933 = vld [vmem:[%s1927 + $0x28] sm:$0xff]
  %v1934 = vld [vmem:[%s1927 + $0x30] sm:$0xff]
  %v1935 = vld [vmem:[%s1927 + $0x38] sm:$0xff]
  %v1944 = vunpack.c.l.b16 %v1928
  %v1945 = vunpack.c.h.b16 %v1928
  %v1946 = vunpack.c.l.b16 %v1929
  %v1947 = vunpack.c.h.b16 %v1929
  %v1948 = vunpack.c.l.b16 %v1930
  %v1949 = vunpack.c.h.b16 %v1930
  %v1950 = vunpack.c.l.b16 %v1931
  %v1951 = vunpack.c.h.b16 %v1931
  %v1952 = vunpack.c.l.b16 %v1932
  %v1953 = vunpack.c.h.b16 %v1932
  %v1954 = vunpack.c.l.b16 %v1933
  %v1955 = vunpack.c.h.b16 %v1933
  %v1956 = vunpack.c.l.b16 %v1934
  %v1957 = vunpack.c.h.b16 %v1934
  %v1958 = vunpack.c.l.b16 %v1935
  %v1959 = vunpack.c.h.b16 %v1935
  %v1960 = vpack.c.b16 %v1946, %v1944
  %v1961 = vpack.c.b16 %v1947, %v1945
  %v1962 = vpack.c.b16 %v1950, %v1948
  %v1963 = vpack.c.b16 %v1951, %v1949
  %v1964 = vpack.c.b16 %v1954, %v1952
  %v1965 = vpack.c.b16 %v1955, %v1953
  %v1966 = vpack.c.b16 %v1958, %v1956
  %v1967 = vpack.c.b16 %v1959, %v1957
  %v1977 = vsel %vm294, %v1926, 0
  %1979 = vmatprep.subr.bf16.mxu0 %v1961
  %1980 = vmatpush1.bf16.msra.mxu0 %v1960
  %1981 = vmatprep.subr.bf16.mxu0 %v1963
  %1982 = vmatpush1.bf16.msra.mxu0 %v1962
  %1983 = vmatprep.subr.bf16.mxu0 %v1965
  %1984 = vmatpush1.bf16.msra.mxu0 %v1964
  %1985 = vmatprep.subr.bf16.mxu0 %v1967
  %1986 = vmatpush1.bf16.msra.mxu0 %v1966
  %1987 = vmatprep.subr.bf16.mxu0 0
  %1988 = vmatpush1.bf16.msra.mxu0 0
  %1989 = vmatprep.subr.bf16.mxu0 0
  %1990 = vmatpush1.bf16.msra.mxu0 0
  %1991 = vmatprep.subr.bf16.mxu0 0
  %1992 = vmatpush1.bf16.msra.mxu0 0
  %1993 = vmatprep.subr.bf16.mxu0 0
  %1994 = vmatpush1.bf16.msra.mxu0 0
  %1995 = vmatprep.subr.bf16.mxu0 0
  %1996 = vmatpush1.bf16.msra.mxu0 0
  %1997 = vmatprep.subr.bf16.mxu0 0
  %1998 = vmatpush1.bf16.msra.mxu0 0
  %1999 = vmatprep.subr.bf16.mxu0 0
  %2000 = vmatpush1.bf16.msra.mxu0 0
  %2001 = vmatprep.subr.bf16.mxu0 0
  %2002 = vmatpush1.bf16.msra.mxu0 0
  %2003 = vmatprep.subr.bf16.mxu0 0
  %2004 = vmatpush1.bf16.msra.mxu0 0
  %2005 = vmatprep.subr.bf16.mxu0 0
  %2006 = vmatpush1.bf16.msra.mxu0 0
  %2007 = vmatprep.subr.bf16.mxu0 0
  %2008 = vmatpush1.bf16.msra.mxu0 0
  %2009 = vmatprep.subr.bf16.mxu0 0
  %2010 = vmatpush1.bf16.msra.mxu0 0
  %2011 = vmatprep.mubr.bf16.mxu0 0
  %2012 = vmatmul.mubr.bf16.gmra.mrb[0].mxu0 %v1977
  %v2013 = vpop.f32.mrb[0].mxu0
  %v2014 = vadd.f32 0.0, %v2013
  %v2015 = vpop.f32.mrb[0].mxu0
  %v2016 = vadd.f32 0.0, %v2015
  %v2017 = vpop.f32.mrb[0].mxu0
  %v2018 = vadd.f32 0.0, %v2017
  %v2019 = vpop.f32.mrb[0].mxu0
  %v2020 = vadd.f32 0.0, %v2019
  %2021 = vdwg.mxu0
  %s2022 = scalar_lea.vmem %s9, 2
  %v2023 = vld [vmem:[%s2022] sm:$0x1]
  %v2025 = vlaneseq
  %v2026 = vshrl.u32 %v2025, 7
  %v2027 = vsub.s32 0, %v2026
  %v2028 = vrot.slane %v2023, %v2027
  %v2030 = vadd.f32 %v2014, %v2028
  %v2031 = vadd.f32 %v2018, %v2028
  %s2032 = scalar_lea.vmem %s8, 32
  %v2033 = vld [vmem:[%s2032] sm:$0xf]
  %v2034 = vld [vmem:[%s2032 + $0x4] sm:$0xf]
  %v2035 = vld [vmem:[%s2032 + $0x8] sm:$0xf]
  %v2036 = vld [vmem:[%s2032 + $0xc] sm:$0xf]
  %v2041 = vunpack.c.l.b16 %v2033
  %v2042 = vunpack.c.l.b16 %v2034
  %v2043 = vunpack.c.l.b16 %v2035
  %v2044 = vunpack.c.l.b16 %v2036
  %v2045 = vpack.c.b16 %v2042, %v2041
  %v2046 = vpack.c.b16 %v2044, %v2043
  %2049 = vmatprep.subr.bf16.mxu0 0
  %2050 = vmatpush1.bf16.msra.mxu0 %v2045
  %2051 = vmatprep.subr.bf16.mxu0 0
  %2052 = vmatpush1.bf16.msra.mxu0 %v2046
  %2053 = vmatprep.subr.bf16.mxu0 0
  %2054 = vmatpush1.bf16.msra.mxu0 0
  %2055 = vmatprep.subr.bf16.mxu0 0
  %2056 = vmatpush1.bf16.msra.mxu0 0
  %2057 = vmatprep.subr.bf16.mxu0 0
  %2058 = vmatpush1.bf16.msra.mxu0 0
  %2059 = vmatprep.subr.bf16.mxu0 0
  %2060 = vmatpush1.bf16.msra.mxu0 0
  %2061 = vmatprep.subr.bf16.mxu0 0
  %2062 = vmatpush1.bf16.msra.mxu0 0
  %2063 = vmatprep.subr.bf16.mxu0 0
  %2064 = vmatpush1.bf16.msra.mxu0 0
  %2065 = vmatprep.subr.bf16.mxu0 0
  %2066 = vmatpush1.bf16.msra.mxu0 0
  %2067 = vmatprep.subr.bf16.mxu0 0
  %2068 = vmatpush1.bf16.msra.mxu0 0
  %2069 = vmatprep.subr.bf16.mxu0 0
  %2070 = vmatpush1.bf16.msra.mxu0 0
  %2071 = vmatprep.subr.bf16.mxu0 0
  %2072 = vmatpush1.bf16.msra.mxu0 0
  %2073 = vmatprep.subr.bf16.mxu0 0
  %2074 = vmatpush1.bf16.msra.mxu0 0
  %2075 = vmatprep.subr.bf16.mxu0 0
  %2076 = vmatpush1.bf16.msra.mxu0 0
  %2077 = vmatprep.subr.bf16.mxu0 0
  %2078 = vmatpush1.bf16.msra.mxu0 0
  %2079 = vmatprep.subr.bf16.mxu0 0
  %2080 = vmatpush1.bf16.msra.mxu0 0
  %2081 = vmatprep.mubr.bf16.mxu0 0
  %2082 = vmatmul.mubr.bf16.gmra.mrb[0].mxu0 %v408
  %v2083 = vpop.f32.mrb[0].mxu0
  %v2084 = vadd.f32 0.0, %v2083
  %v2085 = vpop.f32.mrb[0].mxu0
  %v2086 = vpop.f32.mrb[0].mxu0
  %v2087 = vadd.f32 0.0, %v2086
  %v2088 = vpop.f32.mrb[0].mxu0
  %2089 = vmatprep.mubr.bf16.mxu0 0
  %2090 = vmatmul.mubr.bf16.gmra.mrb[0].mxu0 %v411
  %v2091 = vpop.f32.mrb[0].mxu0
  %v2092 = vadd.f32 0.0, %v2091
  %v2093 = vpop.f32.mrb[0].mxu0
  %v2094 = vpop.f32.mrb[0].mxu0
  %v2095 = vadd.f32 0.0, %v2094
  %v2096 = vpop.f32.mrb[0].mxu0
  %2097 = vmatprep.mubr.bf16.mxu0 0
  %2098 = vmatmul.mubr.bf16.gmra.mrb[0].mxu0 %v414
  %v2099 = vpop.f32.mrb[0].mxu0
  %v2100 = vadd.f32 0.0, %v2099
  %v2101 = vpop.f32.mrb[0].mxu0
  %v2102 = vpop.f32.mrb[0].mxu0
  %v2103 = vadd.f32 0.0, %v2102
  %v2104 = vpop.f32.mrb[0].mxu0
  %2105 = vmatprep.mubr.bf16.mxu0 0
  %2106 = vmatmul.mubr.bf16.gmra.mrb[0].mxu0 %v417
  %v2107 = vpop.f32.mrb[0].mxu0
  %v2108 = vadd.f32 0.0, %v2107
  %v2109 = vpop.f32.mrb[0].mxu0
  %v2110 = vpop.f32.mrb[0].mxu0
  %v2111 = vadd.f32 0.0, %v2110
  %v2112 = vpop.f32.mrb[0].mxu0
  %2113 = vmatprep.mubr.bf16.mxu0 0
  %2114 = vmatmul.mubr.bf16.gmra.mrb[0].mxu0 %v420
  %v2115 = vpop.f32.mrb[0].mxu0
  %v2116 = vadd.f32 0.0, %v2115
  %v2117 = vpop.f32.mrb[0].mxu0
  %v2118 = vpop.f32.mrb[0].mxu0
  %v2119 = vadd.f32 0.0, %v2118
  %v2120 = vpop.f32.mrb[0].mxu0
  %2121 = vmatprep.mubr.bf16.mxu0 0
  %2122 = vmatmul.mubr.bf16.gmra.mrb[0].mxu0 %v423
  %v2123 = vpop.f32.mrb[0].mxu0
  %v2124 = vadd.f32 0.0, %v2123
  %v2125 = vpop.f32.mrb[0].mxu0
  %v2126 = vpop.f32.mrb[0].mxu0
  %v2127 = vadd.f32 0.0, %v2126
  %v2128 = vpop.f32.mrb[0].mxu0
  %2129 = vmatprep.mubr.bf16.mxu0 0
  %2130 = vmatmul.mubr.bf16.gmra.mrb[0].mxu0 %v426
  %v2131 = vpop.f32.mrb[0].mxu0
  %v2132 = vadd.f32 0.0, %v2131
  %v2133 = vpop.f32.mrb[0].mxu0
  %v2134 = vpop.f32.mrb[0].mxu0
  %v2135 = vadd.f32 0.0, %v2134
  %v2136 = vpop.f32.mrb[0].mxu0
  %2137 = vmatprep.mubr.bf16.mxu0 0
  %2138 = vmatmul.mubr.bf16.gmra.mrb[0].mxu0 %v429
  %v2139 = vpop.f32.mrb[0].mxu0
  %v2140 = vadd.f32 0.0, %v2139
  %v2141 = vpop.f32.mrb[0].mxu0
  %v2142 = vpop.f32.mrb[0].mxu0
  %v2143 = vadd.f32 0.0, %v2142
  %v2144 = vpop.f32.mrb[0].mxu0
  %2145 = vdwg.mxu0
  %v2146 = vpack.c.bf16 %v2020, %v2016
  %2147 = vmatprep.subr.bf16.mxu0 0
  %2148 = vmatpush1.bf16.msra.mxu0 %v2146
  %2149 = vmatprep.subr.bf16.mxu0 0
  %2150 = vmatpush1.bf16.msra.mxu0 0
  %2151 = vmatprep.subr.bf16.mxu0 0
  %2152 = vmatpush1.bf16.msra.mxu0 0
  %2153 = vmatprep.subr.bf16.mxu0 0
  %2154 = vmatpush1.bf16.msra.mxu0 0
  %2155 = vmatprep.subr.bf16.mxu0 0
  %2156 = vmatpush1.bf16.msra.mxu0 0
  %2157 = vmatprep.subr.bf16.mxu0 0
  %2158 = vmatpush1.bf16.msra.mxu0 0
  %2159 = vmatprep.subr.bf16.mxu0 0
  %2160 = vmatpush1.bf16.msra.mxu0 0
  %2161 = vmatprep.subr.bf16.mxu0 0
  %2162 = vmatpush1.bf16.msra.mxu0 0
  %2163 = vmatprep.subr.bf16.mxu0 0
  %2164 = vmatpush1.bf16.msra.mxu0 0
  %2165 = vmatprep.subr.bf16.mxu0 0
  %2166 = vmatpush1.bf16.msra.mxu0 0
  %2167 = vmatprep.subr.bf16.mxu0 0
  %2168 = vmatpush1.bf16.msra.mxu0 0
  %2169 = vmatprep.subr.bf16.mxu0 0
  %2170 = vmatpush1.bf16.msra.mxu0 0
  %2171 = vmatprep.subr.bf16.mxu0 0
  %2172 = vmatpush1.bf16.msra.mxu0 0
  %2173 = vmatprep.subr.bf16.mxu0 0
  %2174 = vmatpush1.bf16.msra.mxu0 0
  %2175 = vmatprep.subr.bf16.mxu0 0
  %2176 = vmatpush1.bf16.msra.mxu0 0
  %2177 = vmatprep.subr.bf16.mxu0 0
  %2178 = vmatpush1.bf16.msra.mxu0 0
  %2179 = vmatprep.mubr.bf16.mxu0 0
  %2180 = vmatmul.mubr.bf16.gmra.mrb[0].mxu0 %v530
  %v2181 = vpop.f32.mrb[0].mxu0
  %v2182 = vadd.f32 %v2084, %v2181
  %v2183 = vpop.f32.mrb[0].mxu0
  %v2184 = vpop.f32.mrb[0].mxu0
  %v2185 = vadd.f32 %v2087, %v2184
  %v2186 = vpop.f32.mrb[0].mxu0
  %2187 = vmatprep.mubr.bf16.mxu0 0
  %2188 = vmatmul.mubr.bf16.gmra.mrb[0].mxu0 %v533
  %v2189 = vpop.f32.mrb[0].mxu0
  %v2190 = vadd.f32 %v2092, %v2189
  %v2191 = vpop.f32.mrb[0].mxu0
  %v2192 = vpop.f32.mrb[0].mxu0
  %v2193 = vadd.f32 %v2095, %v2192
  %v2194 = vpop.f32.mrb[0].mxu0
  %2195 = vmatprep.mubr.bf16.mxu0 0
  %2196 = vmatmul.mubr.bf16.gmra.mrb[0].mxu0 %v536
  %v2197 = vpop.f32.mrb[0].mxu0
  %v2198 = vadd.f32 %v2100, %v2197
  %v2199 = vpop.f32.mrb[0].mxu0
  %v2200 = vpop.f32.mrb[0].mxu0
  %v2201 = vadd.f32 %v2103, %v2200
  %v2202 = vpop.f32.mrb[0].mxu0
  %2203 = vmatprep.mubr.bf16.mxu0 0
  %2204 = vmatmul.mubr.bf16.gmra.mrb[0].mxu0 %v539
  %v2205 = vpop.f32.mrb[0].mxu0
  %v2206 = vadd.f32 %v2108, %v2205
  %v2207 = vpop.f32.mrb[0].mxu0
  %v2208 = vpop.f32.mrb[0].mxu0
  %v2209 = vadd.f32 %v2111, %v2208
  %v2210 = vpop.f32.mrb[0].mxu0
  %2211 = vmatprep.mubr.bf16.mxu0 0
  %2212 = vmatmul.mubr.bf16.gmra.mrb[0].mxu0 %v542
  %v2213 = vpop.f32.mrb[0].mxu0
  %v2214 = vadd.f32 %v2116, %v2213
  %v2215 = vpop.f32.mrb[0].mxu0
  %v2216 = vpop.f32.mrb[0].mxu0
  %v2217 = vadd.f32 %v2119, %v2216
  %v2218 = vpop.f32.mrb[0].mxu0
  %2219 = vmatprep.mubr.bf16.mxu0 0
  %2220 = vmatmul.mubr.bf16.gmra.mrb[0].mxu0 %v545
  %v2221 = vpop.f32.mrb[0].mxu0
  %v2222 = vadd.f32 %v2124, %v2221
  %v2223 = vpop.f32.mrb[0].mxu0
  %v2224 = vpop.f32.mrb[0].mxu0
  %v2225 = vadd.f32 %v2127, %v2224
  %v2226 = vpop.f32.mrb[0].mxu0
  %2227 = vmatprep.mubr.bf16.mxu0 0
  %2228 = vmatmul.mubr.bf16.gmra.mrb[0].mxu0 %v548
  %v2229 = vpop.f32.mrb[0].mxu0
  %v2230 = vadd.f32 %v2132, %v2229
  %v2231 = vpop.f32.mrb[0].mxu0
  %v2232 = vpop.f32.mrb[0].mxu0
  %v2233 = vadd.f32 %v2135, %v2232
  %v2234 = vpop.f32.mrb[0].mxu0
  %2235 = vmatprep.mubr.bf16.mxu0 0
  %2236 = vmatmul.mubr.bf16.gmra.mrb[0].mxu0 %v551
  %v2237 = vpop.f32.mrb[0].mxu0
  %v2238 = vadd.f32 %v2140, %v2237
  %v2239 = vpop.f32.mrb[0].mxu0
  %v2240 = vpop.f32.mrb[0].mxu0
  %v2241 = vadd.f32 %v2143, %v2240
  %v2242 = vpop.f32.mrb[0].mxu0
  %2243 = vdwg.mxu0
  %v2244 = vadd.f32 %v2182, %v2030
  %v2245 = vadd.f32 %v2185, %v2031
  %v2246 = vadd.f32 %v2190, %v2030
  %v2247 = vadd.f32 %v2193, %v2031
  %v2248 = vadd.f32 %v2198, %v2030
  %v2249 = vadd.f32 %v2201, %v2031
  %v2250 = vadd.f32 %v2206, %v2030
  %v2251 = vadd.f32 %v2209, %v2031
  %v2252 = vadd.f32 %v2214, %v2030
  %v2253 = vadd.f32 %v2217, %v2031
  %v2254 = vadd.f32 %v2222, %v2030
  %v2255 = vadd.f32 %v2225, %v2031
  %v2256 = vadd.f32 %v2230, %v2030
  %v2257 = vadd.f32 %v2233, %v2031
  %v2258 = vadd.f32 %v2238, %v2030
  %v2259 = vadd.f32 %v2241, %v2031
  %v2260 = vsub.f32 0.0, %v2244
  %v2261 = vsub.f32 0.0, %v2245
  %v2262 = vsub.f32 0.0, %v2246
  %v2263 = vsub.f32 0.0, %v2247
  %v2264 = vsub.f32 0.0, %v2248
  %v2265 = vsub.f32 0.0, %v2249
  %v2266 = vsub.f32 0.0, %v2250
  %v2267 = vsub.f32 0.0, %v2251
  %v2268 = vsub.f32 0.0, %v2252
  %v2269 = vsub.f32 0.0, %v2253
  %v2270 = vsub.f32 0.0, %v2254
  %v2271 = vsub.f32 0.0, %v2255
  %v2272 = vsub.f32 0.0, %v2256
  %v2273 = vsub.f32 0.0, %v2257
  %v2274 = vsub.f32 0.0, %v2258
  %v2275 = vsub.f32 0.0, %v2259
  %v2276 = vmul.f32 %v2260, 1.442695
  %v2277 = vpow.pop %v2276
  %v2278 = vmul.f32 %v2261, 1.442695
  %v2279 = vpow.pop %v2278
  %v2280 = vmul.f32 %v2262, 1.442695
  %v2281 = vpow.pop %v2280
  %v2282 = vmul.f32 %v2263, 1.442695
  %v2283 = vpow.pop %v2282
  %v2284 = vmul.f32 %v2264, 1.442695
  %v2285 = vpow.pop %v2284
  %v2286 = vmul.f32 %v2265, 1.442695
  %v2287 = vpow.pop %v2286
  %v2288 = vmul.f32 %v2266, 1.442695
  %v2289 = vpow.pop %v2288
  %v2290 = vmul.f32 %v2267, 1.442695
  %v2291 = vpow.pop %v2290
  %v2292 = vmul.f32 %v2268, 1.442695
  %v2293 = vpow.pop %v2292
  %v2294 = vmul.f32 %v2269, 1.442695
  %v2295 = vpow.pop %v2294
  %v2296 = vmul.f32 %v2270, 1.442695
  %v2297 = vpow.pop %v2296
  %v2298 = vmul.f32 %v2271, 1.442695
  %v2299 = vpow.pop %v2298
  %v2300 = vmul.f32 %v2272, 1.442695
  %v2301 = vpow.pop %v2300
  %v2302 = vmul.f32 %v2273, 1.442695
  %v2303 = vpow.pop %v2302
  %v2304 = vmul.f32 %v2274, 1.442695
  %v2305 = vpow.pop %v2304
  %v2306 = vmul.f32 %v2275, 1.442695
  %v2307 = vpow.pop %v2306
  %v2308 = vadd.f32 %v2277, 1.0
  %v2309 = vadd.f32 %v2279, 1.0
  %v2310 = vadd.f32 %v2281, 1.0
  %v2311 = vadd.f32 %v2283, 1.0
  %v2312 = vadd.f32 %v2285, 1.0
  %v2313 = vadd.f32 %v2287, 1.0
  %v2314 = vadd.f32 %v2289, 1.0
  %v2315 = vadd.f32 %v2291, 1.0
  %v2316 = vadd.f32 %v2293, 1.0
  %v2317 = vadd.f32 %v2295, 1.0
  %v2318 = vadd.f32 %v2297, 1.0
  %v2319 = vadd.f32 %v2299, 1.0
  %v2320 = vadd.f32 %v2301, 1.0
  %v2321 = vadd.f32 %v2303, 1.0
  %v2322 = vadd.f32 %v2305, 1.0
  %v2323 = vadd.f32 %v2307, 1.0
  %v2324 = vrcp.pop %v2308
  %v2325 = vrcp.pop %v2309
  %v2326 = vrcp.pop %v2310
  %v2327 = vrcp.pop %v2311
  %v2328 = vrcp.pop %v2312
  %v2329 = vrcp.pop %v2313
  %v2330 = vrcp.pop %v2314
  %v2331 = vrcp.pop %v2315
  %v2332 = vrcp.pop %v2316
  %v2333 = vrcp.pop %v2317
  %v2334 = vrcp.pop %v2318
  %v2335 = vrcp.pop %v2319
  %v2336 = vrcp.pop %v2320
  %v2337 = vrcp.pop %v2321
  %v2338 = vrcp.pop %v2322
  %v2339 = vrcp.pop %v2323
  %vm2340 = vcmp.gt.f32.partialorder %v2244, 20.0
  %vm2341 = vcmp.gt.f32.partialorder %v2245, 20.0
  %vm2342 = vcmp.gt.f32.partialorder %v2246, 20.0
  %vm2343 = vcmp.gt.f32.partialorder %v2247, 20.0
  %vm2344 = vcmp.gt.f32.partialorder %v2248, 20.0
  %vm2345 = vcmp.gt.f32.partialorder %v2249, 20.0
  %vm2346 = vcmp.gt.f32.partialorder %v2250, 20.0
  %vm2347 = vcmp.gt.f32.partialorder %v2251, 20.0
  %vm2348 = vcmp.gt.f32.partialorder %v2252, 20.0
  %vm2349 = vcmp.gt.f32.partialorder %v2253, 20.0
  %vm2350 = vcmp.gt.f32.partialorder %v2254, 20.0
  %vm2351 = vcmp.gt.f32.partialorder %v2255, 20.0
  %vm2352 = vcmp.gt.f32.partialorder %v2256, 20.0
  %vm2353 = vcmp.gt.f32.partialorder %v2257, 20.0
  %vm2354 = vcmp.gt.f32.partialorder %v2258, 20.0
  %vm2355 = vcmp.gt.f32.partialorder %v2259, 20.0
  %v2356 = vmin.f32 %v2244, 20.0
  %v2357 = vmin.f32 %v2245, 20.0
  %v2358 = vmin.f32 %v2246, 20.0
  %v2359 = vmin.f32 %v2247, 20.0
  %v2360 = vmin.f32 %v2248, 20.0
  %v2361 = vmin.f32 %v2249, 20.0
  %v2362 = vmin.f32 %v2250, 20.0
  %v2363 = vmin.f32 %v2251, 20.0
  %v2364 = vmin.f32 %v2252, 20.0
  %v2365 = vmin.f32 %v2253, 20.0
  %v2366 = vmin.f32 %v2254, 20.0
  %v2367 = vmin.f32 %v2255, 20.0
  %v2368 = vmin.f32 %v2256, 20.0
  %v2369 = vmin.f32 %v2257, 20.0
  %v2370 = vmin.f32 %v2258, 20.0
  %v2371 = vmin.f32 %v2259, 20.0
  %v2372 = vmul.f32 %v2356, 1.442695
  %v2373 = vpow.pop %v2372
  %v2374 = vmul.f32 %v2357, 1.442695
  %v2375 = vpow.pop %v2374
  %v2376 = vmul.f32 %v2358, 1.442695
  %v2377 = vpow.pop %v2376
  %v2378 = vmul.f32 %v2359, 1.442695
  %v2379 = vpow.pop %v2378
  %v2380 = vmul.f32 %v2360, 1.442695
  %v2381 = vpow.pop %v2380
  %v2382 = vmul.f32 %v2361, 1.442695
  %v2383 = vpow.pop %v2382
  %v2384 = vmul.f32 %v2362, 1.442695
  %v2385 = vpow.pop %v2384
  %v2386 = vmul.f32 %v2363, 1.442695
  %v2387 = vpow.pop %v2386
  %v2388 = vmul.f32 %v2364, 1.442695
  %v2389 = vpow.pop %v2388
  %v2390 = vmul.f32 %v2365, 1.442695
  %v2391 = vpow.pop %v2390
  %v2392 = vmul.f32 %v2366, 1.442695
  %v2393 = vpow.pop %v2392
  %v2394 = vmul.f32 %v2367, 1.442695
  %v2395 = vpow.pop %v2394
  %v2396 = vmul.f32 %v2368, 1.442695
  %v2397 = vpow.pop %v2396
  %v2398 = vmul.f32 %v2369, 1.442695
  %v2399 = vpow.pop %v2398
  %v2400 = vmul.f32 %v2370, 1.442695
  %v2401 = vpow.pop %v2400
  %v2402 = vmul.f32 %v2371, 1.442695
  %v2403 = vpow.pop %v2402
  %v2404 = vadd.f32 %v2373, 1.0
  %v2405 = vlog2.pop %v2404
  %v2406 = vmul.f32 %v2405, 0.6931472
  %v2407 = vmul.f32 -0.5, %v2373
  %v2408 = vadd.f32 %v2407, 1.0
  %v2409 = vmul.f32 %v2408, %v2373
  %v2410 = vand.u32 2147483647, %v2373
  %vm2411 = vcmp.lt.f32.partialorder %v2410, 0.0004427343
  %v2412 = vsel %vm2411, %v2409, %v2406
  %v2413 = vadd.f32 %v2375, 1.0
  %v2414 = vlog2.pop %v2413
  %v2415 = vmul.f32 %v2414, 0.6931472
  %v2416 = vmul.f32 -0.5, %v2375
  %v2417 = vadd.f32 %v2416, 1.0
  %v2418 = vmul.f32 %v2417, %v2375
  %v2419 = vand.u32 2147483647, %v2375
  %vm2420 = vcmp.lt.f32.partialorder %v2419, 0.0004427343
  %v2421 = vsel %vm2420, %v2418, %v2415
  %v2422 = vadd.f32 %v2377, 1.0
  %v2423 = vlog2.pop %v2422
  %v2424 = vmul.f32 %v2423, 0.6931472
  %v2425 = vmul.f32 -0.5, %v2377
  %v2426 = vadd.f32 %v2425, 1.0
  %v2427 = vmul.f32 %v2426, %v2377
  %v2428 = vand.u32 2147483647, %v2377
  %vm2429 = vcmp.lt.f32.partialorder %v2428, 0.0004427343
  %v2430 = vsel %vm2429, %v2427, %v2424
  %v2431 = vadd.f32 %v2379, 1.0
  %v2432 = vlog2.pop %v2431
  %v2433 = vmul.f32 %v2432, 0.6931472
  %v2434 = vmul.f32 -0.5, %v2379
  %v2435 = vadd.f32 %v2434, 1.0
  %v2436 = vmul.f32 %v2435, %v2379
  %v2437 = vand.u32 2147483647, %v2379
  %vm2438 = vcmp.lt.f32.partialorder %v2437, 0.0004427343
  %v2439 = vsel %vm2438, %v2436, %v2433
  %v2440 = vadd.f32 %v2381, 1.0
  %v2441 = vlog2.pop %v2440
  %v2442 = vmul.f32 %v2441, 0.6931472
  %v2443 = vmul.f32 -0.5, %v2381
  %v2444 = vadd.f32 %v2443, 1.0
  %v2445 = vmul.f32 %v2444, %v2381
  %v2446 = vand.u32 2147483647, %v2381
  %vm2447 = vcmp.lt.f32.partialorder %v2446, 0.0004427343
  %v2448 = vsel %vm2447, %v2445, %v2442
  %v2449 = vadd.f32 %v2383, 1.0
  %v2450 = vlog2.pop %v2449
  %v2451 = vmul.f32 %v2450, 0.6931472
  %v2452 = vmul.f32 -0.5, %v2383
  %v2453 = vadd.f32 %v2452, 1.0
  %v2454 = vmul.f32 %v2453, %v2383
  %v2455 = vand.u32 2147483647, %v2383
  %vm2456 = vcmp.lt.f32.partialorder %v2455, 0.0004427343
  %v2457 = vsel %vm2456, %v2454, %v2451
  %v2458 = vadd.f32 %v2385, 1.0
  %v2459 = vlog2.pop %v2458
  %v2460 = vmul.f32 %v2459, 0.6931472
  %v2461 = vmul.f32 -0.5, %v2385
  %v2462 = vadd.f32 %v2461, 1.0
  %v2463 = vmul.f32 %v2462, %v2385
  %v2464 = vand.u32 2147483647, %v2385
  %vm2465 = vcmp.lt.f32.partialorder %v2464, 0.0004427343
  %v2466 = vsel %vm2465, %v2463, %v2460
  %v2467 = vadd.f32 %v2387, 1.0
  %v2468 = vlog2.pop %v2467
  %v2469 = vmul.f32 %v2468, 0.6931472
  %v2470 = vmul.f32 -0.5, %v2387
  %v2471 = vadd.f32 %v2470, 1.0
  %v2472 = vmul.f32 %v2471, %v2387
  %v2473 = vand.u32 2147483647, %v2387
  %vm2474 = vcmp.lt.f32.partialorder %v2473, 0.0004427343
  %v2475 = vsel %vm2474, %v2472, %v2469
  %v2476 = vadd.f32 %v2389, 1.0
  %v2477 = vlog2.pop %v2476
  %v2478 = vmul.f32 %v2477, 0.6931472
  %v2479 = vmul.f32 -0.5, %v2389
  %v2480 = vadd.f32 %v2479, 1.0
  %v2481 = vmul.f32 %v2480, %v2389
  %v2482 = vand.u32 2147483647, %v2389
  %vm2483 = vcmp.lt.f32.partialorder %v2482, 0.0004427343
  %v2484 = vsel %vm2483, %v2481, %v2478
  %v2485 = vadd.f32 %v2391, 1.0
  %v2486 = vlog2.pop %v2485
  %v2487 = vmul.f32 %v2486, 0.6931472
  %v2488 = vmul.f32 -0.5, %v2391
  %v2489 = vadd.f32 %v2488, 1.0
  %v2490 = vmul.f32 %v2489, %v2391
  %v2491 = vand.u32 2147483647, %v2391
  %vm2492 = vcmp.lt.f32.partialorder %v2491, 0.0004427343
  %v2493 = vsel %vm2492, %v2490, %v2487
  %v2494 = vadd.f32 %v2393, 1.0
  %v2495 = vlog2.pop %v2494
  %v2496 = vmul.f32 %v2495, 0.6931472
  %v2497 = vmul.f32 -0.5, %v2393
  %v2498 = vadd.f32 %v2497, 1.0
  %v2499 = vmul.f32 %v2498, %v2393
  %v2500 = vand.u32 2147483647, %v2393
  %vm2501 = vcmp.lt.f32.partialorder %v2500, 0.0004427343
  %v2502 = vsel %vm2501, %v2499, %v2496
  %v2503 = vadd.f32 %v2395, 1.0
  %v2504 = vlog2.pop %v2503
  %v2505 = vmul.f32 %v2504, 0.6931472
  %v2506 = vmul.f32 -0.5, %v2395
  %v2507 = vadd.f32 %v2506, 1.0
  %v2508 = vmul.f32 %v2507, %v2395
  %v2509 = vand.u32 2147483647, %v2395
  %vm2510 = vcmp.lt.f32.partialorder %v2509, 0.0004427343
  %v2511 = vsel %vm2510, %v2508, %v2505
  %v2512 = vadd.f32 %v2397, 1.0
  %v2513 = vlog2.pop %v2512
  %v2514 = vmul.f32 %v2513, 0.6931472
  %v2515 = vmul.f32 -0.5, %v2397
  %v2516 = vadd.f32 %v2515, 1.0
  %v2517 = vmul.f32 %v2516, %v2397
  %v2518 = vand.u32 2147483647, %v2397
  %vm2519 = vcmp.lt.f32.partialorder %v2518, 0.0004427343
  %v2520 = vsel %vm2519, %v2517, %v2514
  %v2521 = vadd.f32 %v2399, 1.0
  %v2522 = vlog2.pop %v2521
  %v2523 = vmul.f32 %v2522, 0.6931472
  %v2524 = vmul.f32 -0.5, %v2399
  %v2525 = vadd.f32 %v2524, 1.0
  %v2526 = vmul.f32 %v2525, %v2399
  %v2527 = vand.u32 2147483647, %v2399
  %vm2528 = vcmp.lt.f32.partialorder %v2527, 0.0004427343
  %v2529 = vsel %vm2528, %v2526, %v2523
  %v2530 = vadd.f32 %v2401, 1.0
  %v2531 = vlog2.pop %v2530
  %v2532 = vmul.f32 %v2531, 0.6931472
  %v2533 = vmul.f32 -0.5, %v2401
  %v2534 = vadd.f32 %v2533, 1.0
  %v2535 = vmul.f32 %v2534, %v2401
  %v2536 = vand.u32 2147483647, %v2401
  %vm2537 = vcmp.lt.f32.partialorder %v2536, 0.0004427343
  %v2538 = vsel %vm2537, %v2535, %v2532
  %v2539 = vadd.f32 %v2403, 1.0
  %v2540 = vlog2.pop %v2539
  %v2541 = vmul.f32 %v2540, 0.6931472
  %v2542 = vmul.f32 -0.5, %v2403
  %v2543 = vadd.f32 %v2542, 1.0
  %v2544 = vmul.f32 %v2543, %v2403
  %v2545 = vand.u32 2147483647, %v2403
  %vm2546 = vcmp.lt.f32.partialorder %v2545, 0.0004427343
  %v2547 = vsel %vm2546, %v2544, %v2541
  %v2548 = vsel %vm2340, %v2244, %v2412
  %v2549 = vsel %vm2341, %v2245, %v2421
  %v2550 = vsel %vm2342, %v2246, %v2430
  %v2551 = vsel %vm2343, %v2247, %v2439
  %v2552 = vsel %vm2344, %v2248, %v2448
  %v2553 = vsel %vm2345, %v2249, %v2457
  %v2554 = vsel %vm2346, %v2250, %v2466
  %v2555 = vsel %vm2347, %v2251, %v2475
  %v2556 = vsel %vm2348, %v2252, %v2484
  %v2557 = vsel %vm2349, %v2253, %v2493
  %v2558 = vsel %vm2350, %v2254, %v2502
  %v2559 = vsel %vm2351, %v2255, %v2511
  %v2560 = vsel %vm2352, %v2256, %v2520
  %v2561 = vsel %vm2353, %v2257, %v2529
  %v2562 = vsel %vm2354, %v2258, %v2538
  %v2563 = vsel %vm2355, %v2259, %v2547
  %2580 = vrot.lane.b32.xlu0 %v2548, 64
  %v2581 = vpop.permute.xlu0 %2580
  %2582 = vrot.lane.b32.xlu0 %v2549, 64
  %v2583 = vpop.permute.xlu0 %2582
  %2584 = vrot.lane.b32.xlu0 %v2550, 64
  %v2585 = vpop.permute.xlu0 %2584
  %2586 = vrot.lane.b32.xlu0 %v2551, 64
  %v2587 = vpop.permute.xlu0 %2586
  %2588 = vrot.lane.b32.xlu0 %v2552, 64
  %v2589 = vpop.permute.xlu0 %2588
  %2590 = vrot.lane.b32.xlu0 %v2553, 64
  %v2591 = vpop.permute.xlu0 %2590
  %2592 = vrot.lane.b32.xlu0 %v2554, 64
  %v2593 = vpop.permute.xlu0 %2592
  %2594 = vrot.lane.b32.xlu0 %v2555, 64
  %v2595 = vpop.permute.xlu0 %2594
  %2596 = vrot.lane.b32.xlu0 %v2556, 64
  %v2597 = vpop.permute.xlu0 %2596
  %2598 = vrot.lane.b32.xlu0 %v2557, 64
  %v2599 = vpop.permute.xlu0 %2598
  %2600 = vrot.lane.b32.xlu0 %v2558, 64
  %v2601 = vpop.permute.xlu0 %2600
  %2602 = vrot.lane.b32.xlu0 %v2559, 64
  %v2603 = vpop.permute.xlu0 %2602
  %2604 = vrot.lane.b32.xlu0 %v2560, 64
  %v2605 = vpop.permute.xlu0 %2604
  %2606 = vrot.lane.b32.xlu0 %v2561, 64
  %v2607 = vpop.permute.xlu0 %2606
  %2608 = vrot.lane.b32.xlu0 %v2562, 64
  %v2609 = vpop.permute.xlu0 %2608
  %2610 = vrot.lane.b32.xlu0 %v2563, 64
  %v2611 = vpop.permute.xlu0 %2610
  %v2628 = vmul.f32 %v2324, %v2581
  %v2629 = vmul.f32 %v2325, %v2583
  %v2630 = vmul.f32 %v2326, %v2585
  %v2631 = vmul.f32 %v2327, %v2587
  %v2632 = vmul.f32 %v2328, %v2589
  %v2633 = vmul.f32 %v2329, %v2591
  %v2634 = vmul.f32 %v2330, %v2593
  %v2635 = vmul.f32 %v2331, %v2595
  %v2636 = vmul.f32 %v2332, %v2597
  %v2637 = vmul.f32 %v2333, %v2599
  %v2638 = vmul.f32 %v2334, %v2601
  %v2639 = vmul.f32 %v2335, %v2603
  %v2640 = vmul.f32 %v2336, %v2605
  %v2641 = vmul.f32 %v2337, %v2607
  %v2642 = vmul.f32 %v2338, %v2609
  %v2643 = vmul.f32 %v2339, %v2611
  %v2644 = vsel %vm294, %v2628, 0.0
  %v2645 = vsel %vm294, %v2630, 0.0
  %v2646 = vadd.f32 %v2644, %v2645
  %v2647 = vsel %vm294, %v2632, 0.0
  %v2648 = vadd.f32 %v2646, %v2647
  %v2649 = vsel %vm294, %v2634, 0.0
  %v2650 = vadd.f32 %v2648, %v2649
  %v2651 = vsel %vm294, %v2636, 0.0
  %v2652 = vadd.f32 %v2650, %v2651
  %v2653 = vsel %vm294, %v2638, 0.0
  %v2654 = vadd.f32 %v2652, %v2653
  %v2655 = vsel %vm294, %v2640, 0.0
  %v2656 = vadd.f32 %v2654, %v2655
  %v2657 = vsel %vm294, %v2642, 0.0
  %v2658 = vadd.f32 %v2656, %v2657
  %v2659 = vsel %vm294, %v2629, 0.0
  %v2660 = vsel %vm294, %v2631, 0.0
  %v2661 = vadd.f32 %v2659, %v2660
  %v2662 = vsel %vm294, %v2633, 0.0
  %v2663 = vadd.f32 %v2661, %v2662
  %v2664 = vsel %vm294, %v2635, 0.0
  %v2665 = vadd.f32 %v2663, %v2664
  %v2666 = vsel %vm294, %v2637, 0.0
  %v2667 = vadd.f32 %v2665, %v2666
  %v2668 = vsel %vm294, %v2639, 0.0
  %v2669 = vadd.f32 %v2667, %v2668
  %v2670 = vsel %vm294, %v2641, 0.0
  %v2671 = vadd.f32 %v2669, %v2670
  %v2672 = vsel %vm294, %v2643, 0.0
  %v2673 = vadd.f32 %v2671, %v2672
  %s2674 = scalar_lea.vmem %s10, 2
  %v2675 = vld [vmem:[%s2674] sm:$0x1]
  %v2677 = vlaneseq
  %v2678 = vshrl.u32 %v2677, 7
  %v2679 = vsub.s32 0, %v2678
  %v2680 = vrot.slane %v2675, %v2679
  %v2682 = vmul.f32 %v2658, %v2680
  %v2683 = vmul.f32 %v2673, %v2680
  %v2684 = vadd.f32 %v1924, %v2682
  %v2685 = vadd.f32 %v1925, %v2683
  %s2686 = scalar_lea.vmem %s11, 2
  %v2687 = vld [vmem:[%s2686] sm:$0x1]
  %v2689 = vlaneseq
  %v2690 = vshrl.u32 %v2689, 7
  %v2691 = vsub.s32 0, %v2690
  %v2692 = vrot.slane %v2687, %v2691
  %v2694 = vadd.f32 %v2684, %v2692
  %v2695 = vadd.f32 %v2685, %v2692
  %vm2696 = vcmp.gt.f32.partialorder %v2694, 20.0
  %vm2697 = vcmp.gt.f32.partialorder %v2695, 20.0
  %v2698 = vmin.f32 %v2694, 20.0
  %v2699 = vmin.f32 %v2695, 20.0
  %v2700 = vmul.f32 %v2698, 1.442695
  %v2701 = vpow.pop %v2700
  %v2702 = vmul.f32 %v2699, 1.442695
  %v2703 = vpow.pop %v2702
  %v2704 = vadd.f32 %v2701, 1.0
  %v2705 = vlog2.pop %v2704
  %v2706 = vmul.f32 %v2705, 0.6931472
  %v2707 = vmul.f32 -0.5, %v2701
  %v2708 = vadd.f32 %v2707, 1.0
  %v2709 = vmul.f32 %v2708, %v2701
  %v2710 = vand.u32 2147483647, %v2701
  %vm2711 = vcmp.lt.f32.partialorder %v2710, 0.0004427343
  %v2712 = vsel %vm2711, %v2709, %v2706
  %v2713 = vadd.f32 %v2703, 1.0
  %v2714 = vlog2.pop %v2713
  %v2715 = vmul.f32 %v2714, 0.6931472
  %v2716 = vmul.f32 -0.5, %v2703
  %v2717 = vadd.f32 %v2716, 1.0
  %v2718 = vmul.f32 %v2717, %v2703
  %v2719 = vand.u32 2147483647, %v2703
  %vm2720 = vcmp.lt.f32.partialorder %v2719, 0.0004427343
  %v2721 = vsel %vm2720, %v2718, %v2715
  %v2722 = vsel %vm2696, %v2694, %v2712
  %v2723 = vsel %vm2697, %v2695, %v2721
  %v2724 = vlaneseq
  %v2725 = vshrl.u32 %v2724, 7
  %v2726 = vld [vmem:[%s3] sm:$0x1]
  %v2727 = vlaneseq
  %v2728 = vshrl.u32 %v2727, 7
  %v2729 = vsub.s32 0, %v2728
  %v2730 = vrot.slane %v2726, %v2729
  %vm2731 = vcmp.eq.s32.totalorder %v2725, %v2730
  %v2732 = vsel %vm2731, 1.0, 0.0
  %v2734 = vsel %vm78, %v2732, 0
  %2736 = vmatprep.subr.mxu0 0.0
  %2737 = vmatpush1.msra.mxu0 %v2722
  %2738 = vmatprep.subr.mxu0 0.0
  %2739 = vmatpush1.msra.mxu0 %v2723
  %2740 = vmatprep.subr.mxu0 0.0
  %2741 = vmatpush1.msra.mxu0 0.0
  %2742 = vmatprep.subr.mxu0 0.0
  %2743 = vmatpush1.msra.mxu0 0.0
  %2744 = vmatprep.subr.mxu0 0.0
  %2745 = vmatpush1.msra.mxu0 0.0
  %2746 = vmatprep.subr.mxu0 0.0
  %2747 = vmatpush1.msra.mxu0 0.0
  %2748 = vmatprep.subr.mxu0 0.0
  %2749 = vmatpush1.msra.mxu0 0.0
  %2750 = vmatprep.subr.mxu0 0.0
  %2751 = vmatpush1.msra.mxu0 0.0
  %2752 = vmatprep.subr.mxu0 0.0
  %2753 = vmatpush1.msra.mxu0 0.0
  %2754 = vmatprep.subr.mxu0 0.0
  %2755 = vmatpush1.msra.mxu0 0.0
  %2756 = vmatprep.subr.mxu0 0.0
  %2757 = vmatpush1.msra.mxu0 0.0
  %2758 = vmatprep.subr.mxu0 0.0
  %2759 = vmatpush1.msra.mxu0 0.0
  %2760 = vmatprep.subr.mxu0 0.0
  %2761 = vmatpush1.msra.mxu0 0.0
  %2762 = vmatprep.subr.mxu0 0.0
  %2763 = vmatpush1.msra.mxu0 0.0
  %2764 = vmatprep.subr.mxu0 0.0
  %2765 = vmatpush1.msra.mxu0 0.0
  %2766 = vmatprep.subr.mxu0 0.0
  %2767 = vmatpush1.msra.mxu0 0.0
  %2768 = vmatprep.subr.mxu0 0.0
  %2769 = vmatpush1.msra.mxu0 0.0
  %2770 = vmatprep.subr.mxu0 0.0
  %2771 = vmatpush1.msra.mxu0 0.0
  %2772 = vmatprep.subr.mxu0 0.0
  %2773 = vmatpush1.msra.mxu0 0.0
  %2774 = vmatprep.subr.mxu0 0.0
  %2775 = vmatpush1.msra.mxu0 0.0
  %2776 = vmatprep.subr.mxu0 0.0
  %2777 = vmatpush1.msra.mxu0 0.0
  %2778 = vmatprep.subr.mxu0 0.0
  %2779 = vmatpush1.msra.mxu0 0.0
  %2780 = vmatprep.subr.mxu0 0.0
  %2781 = vmatpush1.msra.mxu0 0.0
  %2782 = vmatprep.subr.mxu0 0.0
  %2783 = vmatpush1.msra.mxu0 0.0
  %2784 = vmatprep.subr.mxu0 0.0
  %2785 = vmatpush1.msra.mxu0 0.0
  %2786 = vmatprep.subr.mxu0 0.0
  %2787 = vmatpush1.msra.mxu0 0.0
  %2788 = vmatprep.subr.mxu0 0.0
  %2789 = vmatpush1.msra.mxu0 0.0
  %2790 = vmatprep.subr.mxu0 0.0
  %2791 = vmatpush1.msra.mxu0 0.0
  %2792 = vmatprep.subr.mxu0 0.0
  %2793 = vmatpush1.msra.mxu0 0.0
  %2794 = vmatprep.subr.mxu0 0.0
  %2795 = vmatpush1.msra.mxu0 0.0
  %2796 = vmatprep.subr.mxu0 0.0
  %2797 = vmatpush1.msra.mxu0 0.0
  %2798 = vmatprep.subr.mxu0 0.0
  %2799 = vmatpush1.msra.mxu0 0.0
  %2800 = vmatprep.mubr.f32.mxu0 0.0
  %2801 = vmatmul.mubr.f32.gmra.mrb[0].mxu0 %v2734
  %v2802 = vpop.f32.mrb[0].mxu0
  %v2803 = vadd.f32 0.0, %v2802
  %v2804 = vpop.f32.mrb[0].mxu0
  %2805 = vdwg.mxu0
  %v2806 = vld [vmem:[%s4] sm:$0x3]
  %2808 = vset.pattern.permute.xlu0 0
  %2809 = vperm.xlu0 %2808, %v2806
  %v2810 = vpop.permute.xlu0 %2809
  %v2812 = vmul.f32 %v2803, %v2810
  %vm2813 = vcmp.gt.f32.partialorder %v2812, 20.0
  %v2814 = vmin.f32 %v2812, 20.0
  %v2815 = vmul.f32 %v2814, 1.442695
  %v2816 = vpow.pop %v2815
  %v2817 = vadd.f32 %v2816, 1.0
  %v2818 = vlog2.pop %v2817
  %v2819 = vmul.f32 %v2818, 0.6931472
  %v2820 = vmul.f32 -0.5, %v2816
  %v2821 = vadd.f32 %v2820, 1.0
  %v2822 = vmul.f32 %v2821, %v2816
  %v2823 = vand.u32 2147483647, %v2816
  %vm2824 = vcmp.lt.f32.partialorder %v2823, 0.0004427343
  %v2825 = vsel %vm2824, %v2822, %v2819
  %v2826 = vsel %vm2813, %v2812, %v2825
  %v2827 = vpack.c.bf16 %v2826, %v2826
  %v2828 = vld [vmem:[%s12] sm:$0xf]
  %v2829 = vld [vmem:[%s12 + $0x4] sm:$0xf]
  %v2830 = vld [vmem:[%s12 + $0x8] sm:$0xf]
  %v2831 = vld [vmem:[%s12 + $0xc] sm:$0xf]
  %v2832 = vld [vmem:[%s12 + $0x10] sm:$0xf]
  %v2833 = vld [vmem:[%s12 + $0x14] sm:$0xf]
  %v2834 = vld [vmem:[%s12 + $0x18] sm:$0xf]
  %v2835 = vld [vmem:[%s12 + $0x1c] sm:$0xf]
  %v2836 = vld [vmem:[%s13] sm:$0x1]
  %v2838 = vlaneseq
  %v2839 = vshrl.u32 %v2838, 7
  %v2840 = vsub.s32 0, %v2839
  %v2841 = vrot.slane %v2836, %v2840
  %v2851 = vunpack.c.l.b16 %v2828
  %v2852 = vunpack.c.l.b16 %v2829
  %v2853 = vunpack.c.l.b16 %v2830
  %v2854 = vunpack.c.l.b16 %v2831
  %v2855 = vunpack.c.l.b16 %v2832
  %v2856 = vunpack.c.l.b16 %v2833
  %v2857 = vunpack.c.l.b16 %v2834
  %v2858 = vunpack.c.l.b16 %v2835
  %v2859 = vpack.c.b16 %v2852, %v2851
  %v2860 = vpack.c.b16 %v2854, %v2853
  %v2861 = vpack.c.b16 %v2856, %v2855
  %v2862 = vpack.c.b16 %v2858, %v2857
  %v2868 = vsel %vm294, %v2827, 0
  %2870 = vmatprep.subr.bf16.mxu0 0
  %2871 = vmatpush1.bf16.msra.mxu0 %v2859
  %2872 = vmatprep.subr.bf16.mxu0 0
  %2873 = vmatpush1.bf16.msra.mxu0 %v2860
  %2874 = vmatprep.subr.bf16.mxu0 0
  %2875 = vmatpush1.bf16.msra.mxu0 %v2861
  %2876 = vmatprep.subr.bf16.mxu0 0
  %2877 = vmatpush1.bf16.msra.mxu0 %v2862
  %2878 = vmatprep.subr.bf16.mxu0 0
  %2879 = vmatpush1.bf16.msra.mxu0 0
  %2880 = vmatprep.subr.bf16.mxu0 0
  %2881 = vmatpush1.bf16.msra.mxu0 0
  %2882 = vmatprep.subr.bf16.mxu0 0
  %2883 = vmatpush1.bf16.msra.mxu0 0
  %2884 = vmatprep.subr.bf16.mxu0 0
  %2885 = vmatpush1.bf16.msra.mxu0 0
  %2886 = vmatprep.subr.bf16.mxu0 0
  %2887 = vmatpush1.bf16.msra.mxu0 0
  %2888 = vmatprep.subr.bf16.mxu0 0
  %2889 = vmatpush1.bf16.msra.mxu0 0
  %2890 = vmatprep.subr.bf16.mxu0 0
  %2891 = vmatpush1.bf16.msra.mxu0 0
  %2892 = vmatprep.subr.bf16.mxu0 0
  %2893 = vmatpush1.bf16.msra.mxu0 0
  %2894 = vmatprep.subr.bf16.mxu0 0
  %2895 = vmatpush1.bf16.msra.mxu0 0
  %2896 = vmatprep.subr.bf16.mxu0 0
  %2897 = vmatpush1.bf16.msra.mxu0 0
  %2898 = vmatprep.subr.bf16.mxu0 0
  %2899 = vmatpush1.bf16.msra.mxu0 0
  %2900 = vmatprep.subr.bf16.mxu0 0
  %2901 = vmatpush1.bf16.msra.mxu0 0
  %2902 = vmatprep.mubr.bf16.mxu0 0
  %2903 = vmatmul.mubr.bf16.gmra.mrb[0].mxu0 %v2868
  %v2904 = vpop.f32.mrb[0].mxu0
  %v2905 = vadd.f32 %v2841, %v2904
  %v2906 = vpop.f32.mrb[0].mxu0
  %v2907 = vpop.f32.mrb[0].mxu0
  %v2908 = vpop.f32.mrb[0].mxu0
  %2909 = vdwg.mxu0
  %vm2910 = vcmp.gt.f32.partialorder %v2905, 20.0
  %v2911 = vmin.f32 %v2905, 20.0
  %v2912 = vmul.f32 %v2911, 1.442695
  %v2913 = vpow.pop %v2912
  %v2914 = vadd.f32 %v2913, 1.0
  %v2915 = vlog2.pop %v2914
  %v2916 = vmul.f32 %v2915, 0.6931472
  %v2917 = vmul.f32 -0.5, %v2913
  %v2918 = vadd.f32 %v2917, 1.0
  %v2919 = vmul.f32 %v2918, %v2913
  %v2920 = vand.u32 2147483647, %v2913
  %vm2921 = vcmp.lt.f32.partialorder %v2920, 0.0004427343
  %v2922 = vsel %vm2921, %v2919, %v2916
  %v2923 = vsel %vm2910, %v2905, %v2922
  %v2924 = vpack.c.bf16 %v2923, %v2923
  %v2925 = vld [vmem:[%s14] sm:$0xf]
  %v2926 = vld [vmem:[%s14 + $0x4] sm:$0xf]
  %v2927 = vld [vmem:[%s14 + $0x8] sm:$0xf]
  %v2928 = vld [vmem:[%s14 + $0xc] sm:$0xf]
  %v2929 = vld [vmem:[%s14 + $0x10] sm:$0xf]
  %v2930 = vld [vmem:[%s14 + $0x14] sm:$0xf]
  %v2931 = vld [vmem:[%s14 + $0x18] sm:$0xf]
  %v2932 = vld [vmem:[%s14 + $0x1c] sm:$0xf]
  %v2933 = vld [vmem:[%s14 + $0x20] sm:$0xf]
  %v2934 = vld [vmem:[%s14 + $0x24] sm:$0xf]
  %v2935 = vld [vmem:[%s14 + $0x28] sm:$0xf]
  %v2936 = vld [vmem:[%s14 + $0x2c] sm:$0xf]
  %v2937 = vld [vmem:[%s14 + $0x30] sm:$0xf]
  %v2938 = vld [vmem:[%s14 + $0x34] sm:$0xf]
  %v2939 = vld [vmem:[%s14 + $0x38] sm:$0xf]
  %v2940 = vld [vmem:[%s14 + $0x3c] sm:$0xf]
  %v2941 = vld [vmem:[#allocation2] sm:$0x1]
  %v2943 = vlaneseq
  %v2944 = vshrl.u32 %v2943, 7
  %v2945 = vsub.s32 0, %v2944
  %v2946 = vrot.slane %v2941, %v2945
  %v2964 = vunpack.c.l.b16 %v2925
  %v2965 = vunpack.c.l.b16 %v2926
  %v2966 = vunpack.c.l.b16 %v2927
  %v2967 = vunpack.c.l.b16 %v2928
  %v2968 = vunpack.c.l.b16 %v2929
  %v2969 = vunpack.c.l.b16 %v2930
  %v2970 = vunpack.c.l.b16 %v2931
  %v2971 = vunpack.c.l.b16 %v2932
  %v2972 = vunpack.c.l.b16 %v2933
  %v2973 = vunpack.c.l.b16 %v2934
  %v2974 = vunpack.c.l.b16 %v2935
  %v2975 = vunpack.c.l.b16 %v2936
  %v2976 = vunpack.c.l.b16 %v2937
  %v2977 = vunpack.c.l.b16 %v2938
  %v2978 = vunpack.c.l.b16 %v2939
  %v2979 = vunpack.c.l.b16 %v2940
  %v2980 = vpack.c.b16 %v2965, %v2964
  %v2981 = vpack.c.b16 %v2967, %v2966
  %v2982 = vpack.c.b16 %v2969, %v2968
  %v2983 = vpack.c.b16 %v2971, %v2970
  %v2984 = vpack.c.b16 %v2973, %v2972
  %v2985 = vpack.c.b16 %v2975, %v2974
  %v2986 = vpack.c.b16 %v2977, %v2976
  %v2987 = vpack.c.b16 %v2979, %v2978
  %2996 = vmatprep.subr.bf16.mxu0 0
  %2997 = vmatpush1.bf16.msra.mxu0 %v2980
  %2998 = vmatprep.subr.bf16.mxu0 0
  %2999 = vmatpush1.bf16.msra.mxu0 %v2981
  %3000 = vmatprep.subr.bf16.mxu0 0
  %3001 = vmatpush1.bf16.msra.mxu0 %v2982
  %3002 = vmatprep.subr.bf16.mxu0 0
  %3003 = vmatpush1.bf16.msra.mxu0 %v2983
  %3004 = vmatprep.subr.bf16.mxu0 0
  %3005 = vmatpush1.bf16.msra.mxu0 %v2984
  %3006 = vmatprep.subr.bf16.mxu0 0
  %3007 = vmatpush1.bf16.msra.mxu0 %v2985
  %3008 = vmatprep.subr.bf16.mxu0 0
  %3009 = vmatpush1.bf16.msra.mxu0 %v2986
  %3010 = vmatprep.subr.bf16.mxu0 0
  %3011 = vmatpush1.bf16.msra.mxu0 %v2987
  %3012 = vmatprep.subr.bf16.mxu0 0
  %3013 = vmatpush1.bf16.msra.mxu0 0
  %3014 = vmatprep.subr.bf16.mxu0 0
  %3015 = vmatpush1.bf16.msra.mxu0 0
  %3016 = vmatprep.subr.bf16.mxu0 0
  %3017 = vmatpush1.bf16.msra.mxu0 0
  %3018 = vmatprep.subr.bf16.mxu0 0
  %3019 = vmatpush1.bf16.msra.mxu0 0
  %3020 = vmatprep.subr.bf16.mxu0 0
  %3021 = vmatpush1.bf16.msra.mxu0 0
  %3022 = vmatprep.subr.bf16.mxu0 0
  %3023 = vmatpush1.bf16.msra.mxu0 0
  %3024 = vmatprep.subr.bf16.mxu0 0
  %3025 = vmatpush1.bf16.msra.mxu0 0
  %3026 = vmatprep.subr.bf16.mxu0 0
  %3027 = vmatpush1.bf16.msra.mxu0 0
  %3028 = vmatprep.mubr.bf16.mxu0 0
  %3029 = vmatmul.mubr.bf16.gmra.mrb[0].mxu0 %v2924
  %v3030 = vpop.f32.mrb[0].mxu0
  %v3031 = vadd.f32 %v2946, %v3030
  %v3032 = vpop.f32.mrb[0].mxu0
  %v3033 = vpop.f32.mrb[0].mxu0
  %v3034 = vpop.f32.mrb[0].mxu0
  %3035 = vdwg.mxu0
  %vm3036 = vcmask 1024
  %3037 = vst.msk [vmem:[%s16] sm:$0x3] %vm3036, %v3031
  // Predicated region
  $region66: #{tpu_custom_call.1} parent=0 // pred_check
    _
  $region67: #{tpu_custom_call.1} parent=0 // pred_check_branch
    %3039 = sbr.rel (0) target = $region69
  $region68: #{tpu_custom_call.1} parent=0 // pred_region
    _
  $region69: #{tpu_custom_call.1} parent=0 // pred_fallthru
    _
  // Predicated region
  $region70: #{tpu_custom_call.1} parent=0 // pred_check
    _
  $region71: #{tpu_custom_call.1} parent=0 // pred_check_branch
    %3041 = sbr.rel (0) target = $region73
  $region72: #{tpu_custom_call.1} parent=0 // pred_region
    _
  $region73: #{tpu_custom_call.1} parent=0 // pred_fallthru
    _

</llo_original>
